<compile_context>
chip_gen: v7x
topology: tpu7x:2x2x1
jax: 0.10.0
libtpu: 0.0.40
codegen_flags: <defaults>
</compile_context>

<pallas_src>
import functools

import jax
import jax.numpy as jnp
from jax import lax
from jax.experimental import pallas as pl
from jax.experimental.pallas import tpu as pltpu


def _round_up(x, m):
    return ((x + m - 1) // m) * m


def _default_groups():
    """Batch-group packing factor: fill the MXU K/N dimensions.

    256x256 MXU (v6e / v7x) -> G = 8  (8 * 32 = 256)
    128x128 MXU (v5e, older) -> G = 4 (4 * 32 = 128)
    """
    try:
        kind = jax.devices()[0].device_kind.lower()
    except Exception:
        return 8
    if ("v6" in kind) or ("v7" in kind):
        return 8
    return 4


def _mlp_kernel(n_layers, mm_dtype, *refs):
    """Fused MLP forward in packed feature-major layout.

    refs = (x_ref, w0, b0, w1, b1, ..., w_{L-1}, b_{L-1}, out_ref)
      x_ref : (G*in_dim,  block_m) f32, batch on lanes, G groups on sublanes
      w_i   : (G*out_i,   G*in_i)  block-diagonal kron(I_G, W_i), mm_dtype
      b_i   : (G*out_i,   1)       f32 (broadcast over lanes)
      out   : (G*out_dim, block_m) f32
    Hidden layers use tanh, last layer is linear.
    """
    x_ref = refs[0]
    out_ref = refs[-1]
    wb = refs[1:-1]

    a = x_ref[...]                                   # f32
    for i in range(n_layers):
        w = wb[2 * i][...]
        b = wb[2 * i + 1][...]
        if mm_dtype == jnp.float32:
            z = jnp.dot(w, a, precision=lax.Precision.HIGHEST,
                        preferred_element_type=jnp.float32)
        else:
            # bf16 inputs, f32 MXU accumulation (v6e/v7x experiment).
            z = jnp.dot(w, a.astype(mm_dtype),
                        preferred_element_type=jnp.float32)
        z = z + b
        a = jnp.tanh(z) if i < n_layers - 1 else z
    out_ref[...] = a


def mlp_forward(x, params, *, groups=None, tile_batch=8192, target_steps=4,
                use_bf16_matmul=False, feature_major_out=False):
    """Run the fused, group-packed MLP Pallas kernel.

    x:       (N, layers[0]) array (cast to f32, like torch `x.float()`)
    params:  list of (W, b) with W: (out, in) [PyTorch layout], b: (out, 1)
    returns: (N, layers[-1]) f32, or (layers[-1], N) if feature_major_out.
    """
    n, in_dim = x.shape
    n_layers = len(params)
    assert params[0][0].shape[1] == in_dim, "x feature dim mismatch"
    out_dim = params[-1][0].shape[0]

    G = int(groups) if groups is not None else _default_groups()

    # --- batch tiling.  Each lane column carries G batch rows, so one grid
    # step of block_m lane columns processes G*block_m batch rows.
    m_raw = pl.cdiv(n, G)
    desired = max(128, _round_up(max(tile_batch // G, 1), 128))
    # Keep >= target_steps grid steps when there is enough work so the
    # ("parallel",) axis feeds both v7x TensorCores (the extra ~0.35us/step is
    # noise on single-TC v5e/v6e).
    cap = max(128, _round_up(pl.cdiv(m_raw, target_steps), 128))
    block_m = min(desired, cap)
    m_pad = _round_up(m_raw, block_m)
    n_pack = G * m_pad
    grid = (m_pad // block_m,)

    # --- layout plumbing (XLA side): pad batch, pack G groups, feature-major.
    x32 = x.astype(jnp.float32)
    if n_pack != n:
        x32 = jnp.pad(x32, ((0, n_pack - n), (0, 0)))
    xt = x32.reshape(G, m_pad, in_dim).transpose(0, 2, 1).reshape(G * in_dim, m_pad)

    # --- block-diagonal packed parameters (built once, < ~600 KiB f32 total).
    mm_dtype = jnp.bfloat16 if use_bf16_matmul else jnp.float32
    eye_g = jnp.eye(G, dtype=jnp.float32)
    flat_wb = []
    in_specs = [pl.BlockSpec((G * in_dim, block_m), lambda i: (0, i))]
    for w, b in params:
        w_bd = jnp.kron(eye_g, w.astype(jnp.float32)).astype(mm_dtype)
        b_bd = jnp.tile(b.reshape(-1, 1).astype(jnp.float32), (G, 1))
        # Tiny resident blocks with constant index maps: DMA'd once, no revisit.
        in_specs.append(pl.BlockSpec(w_bd.shape, lambda i: (0, 0)))
        in_specs.append(pl.BlockSpec(b_bd.shape, lambda i: (0, 0)))
        flat_wb.extend([w_bd, b_bd])

    out_spec = pl.BlockSpec((G * out_dim, block_m), lambda i: (0, i))

    # Advisory cost estimate so XLA schedules this call sensibly inside a
    # larger PINN grad/jacobian pipeline.
    flops = 2 * m_pad * sum(
        int(w.shape[0] * w.shape[1]) * G * G for w, _ in params)
    transcendentals = m_pad * G * sum(int(w.shape[0]) for w, _ in params[:-1])
    bytes_accessed = 4 * m_pad * G * (in_dim + out_dim) + sum(
        int(wb.size) * wb.dtype.itemsize for wb in flat_wb)

    kernel = functools.partial(_mlp_kernel, n_layers, mm_dtype)

    out_t = pl.pallas_call(
        kernel,
        out_shape=jax.ShapeDtypeStruct((G * out_dim, m_pad), jnp.float32),
        grid_spec=pl.GridSpec(
            grid=grid,
            in_specs=in_specs,
            out_specs=out_spec,
        ),
        compiler_params=pltpu.CompilerParams(
            dimension_semantics=("parallel",),
            vmem_limit_bytes=32 * 1024 * 1024,
        ),
        cost_estimate=pl.CostEstimate(
            flops=flops,
            transcendentals=transcendentals,
            bytes_accessed=bytes_accessed,
        ),
    )(xt, *flat_wb)

    # Unpack groups.  Batch row r lives at (group r // m_pad, column r % m_pad).
    if feature_major_out:
        out_fm = out_t.reshape(G, out_dim, m_pad).transpose(1, 0, 2)
        return out_fm.reshape(out_dim, n_pack)[:, :n]
    out = out_t.reshape(G, out_dim, m_pad).transpose(0, 2, 1)
    return out.reshape(n_pack, out_dim)[:n]


def init_params(layers, key):
    """Xavier-normal weights, zero biases (matches the PyTorch __init__).

    W_i: (out, in)   (PyTorch nn.Linear layout)
    b_i: (out, 1)
    """
    params = []
    for i in range(len(layers) - 1):
        key, sub = jax.random.split(key)
        fan_in, fan_out = layers[i], layers[i + 1]
        std = (2.0 / (fan_in + fan_out)) ** 0.5
        w = std * jax.random.normal(sub, (fan_out, fan_in), dtype=jnp.float32)
        b = jnp.zeros((fan_out, 1), dtype=jnp.float32)
        params.append((w, b))
    return params


def reference_forward(x, params):
    """Pure-JAX reference of NN.forward (natural (N, features) layout)."""
    a = x.astype(jnp.float32)
    for i, (w, b) in enumerate(params):
        z = jnp.dot(a, w.T, precision=lax.Precision.HIGHEST) + b.reshape(1, -1)
        a = jnp.tanh(z) if i < len(params) - 1 else z
    return a


if __name__ == "__main__":
    # NN(nu, layers, gamma): layers[0]=3 (t,x,y), layers[-1]=4 (rho,p,u,v)
    layers = [3, 32, 32, 32, 4]

    key = jax.random.PRNGKey(0)
    k_x, k_p, k_x2 = jax.random.split(key, 3)
    params = init_params(layers, k_p)

    # Small batch: single grid step, exercises group packing + padding.
    x_small = jax.random.normal(k_x, (256, layers[0]), dtype=jnp.float32)
    out_small = jax.block_until_ready(mlp_forward(x_small, params))
    ref_small = reference_forward(x_small, params)
    assert out_small.shape == (256, layers[-1])
    assert jnp.allclose(out_small, ref_small, atol=1e-4, rtol=1e-4), \
        "small-batch mismatch vs reference"

    # Larger batch with a small tile_batch so the demo exercises multi-step
    # tiling (>= 2 parallel grid steps, i.e. both v7x TensorCores).  Production
    # PINN collocation batches should use the default tile_batch=8192+.
    x_big = jax.random.normal(k_x2, (2048, layers[0]), dtype=jnp.float32)
    out_big = jax.block_until_ready(mlp_forward(x_big, params, tile_batch=512))
    ref_big = reference_forward(x_big, params)
    assert out_big.shape == (2048, layers[-1])
    assert jnp.allclose(out_big, ref_big, atol=1e-4, rtol=1e-4), \
        "multi-step mismatch vs reference"

    # Feature-major output path (skips the trailing transpose for callers that
    # stay feature-major, e.g. jvp/vjp pipelines over the PINN losses).
    out_fm = jax.block_until_ready(
        mlp_forward(x_small, params, feature_major_out=True))
    assert out_fm.shape == (layers[-1], 256)
    assert jnp.allclose(out_fm.T, ref_small, atol=1e-4, rtol=1e-4), \
        "feature-major output mismatch"

    # TODO(synk): loss_pde / bd_* / loss_* require autodiff w.r.t. inputs
    # (torch.autograd.grad); they are training losses, not part of forward(),
    # so only forward() is kernelized (jax.grad/jvp compose with this kernel).
    print("KERNEL_OK")
</pallas_src>

<mosaic_0001>
module attributes {stable_mosaic.version = 11 : i64} {
  func.func @_mlp_kernel(%arg0: i32, %arg1: memref<12x128xf32, #tpu.memory_space<vmem>>, %arg2: memref<128x12xf32, #tpu.memory_space<vmem>>, %arg3: memref<128x1xf32, #tpu.memory_space<vmem>>, %arg4: memref<128x128xf32, #tpu.memory_space<vmem>>, %arg5: memref<128x1xf32, #tpu.memory_space<vmem>>, %arg6: memref<128x128xf32, #tpu.memory_space<vmem>>, %arg7: memref<128x1xf32, #tpu.memory_space<vmem>>, %arg8: memref<16x128xf32, #tpu.memory_space<vmem>>, %arg9: memref<16x1xf32, #tpu.memory_space<vmem>>, %arg10: memref<16x128xf32, #tpu.memory_space<vmem>>) attributes {dimension_semantics = [#tpu.dimension_semantics<parallel>], iteration_bounds = array<i64: 1>, scalar_prefetch = 0 : i64, scratch_operands = 0 : i64, tpu.core_type = #tpu.core_type<tc>, window_params = [{transform_indices = @transform_0, window_bounds = array<i64: 12, 128>}, {pipeline_mode = #tpu.pipeline_mode<synchronous>, transform_indices = @transform_1, window_bounds = array<i64: 128, 12>}, {pipeline_mode = #tpu.pipeline_mode<synchronous>, transform_indices = @transform_2, window_bounds = array<i64: 128, 1>}, {pipeline_mode = #tpu.pipeline_mode<synchronous>, transform_indices = @transform_3, window_bounds = array<i64: 128, 128>}, {pipeline_mode = #tpu.pipeline_mode<synchronous>, transform_indices = @transform_4, window_bounds = array<i64: 128, 1>}, {pipeline_mode = #tpu.pipeline_mode<synchronous>, transform_indices = @transform_5, window_bounds = array<i64: 128, 128>}, {pipeline_mode = #tpu.pipeline_mode<synchronous>, transform_indices = @transform_6, window_bounds = array<i64: 128, 1>}, {pipeline_mode = #tpu.pipeline_mode<synchronous>, transform_indices = @transform_7, window_bounds = array<i64: 16, 128>}, {pipeline_mode = #tpu.pipeline_mode<synchronous>, transform_indices = @transform_8, window_bounds = array<i64: 16, 1>}, {transform_indices = @transform_9, window_bounds = array<i64: 16, 128>}]} {
    %c0 = arith.constant 0 : index
    %c0_0 = arith.constant 0 : index
    %0 = vector.load %arg1[%c0, %c0_0] : memref<12x128xf32, #tpu.memory_space<vmem>>, vector<12x128xf32>
    %c0_1 = arith.constant 0 : index
    %c0_2 = arith.constant 0 : index
    %1 = vector.load %arg2[%c0_1, %c0_2] : memref<128x12xf32, #tpu.memory_space<vmem>>, vector<128x12xf32>
    %c0_3 = arith.constant 0 : index
    %c0_4 = arith.constant 0 : index
    %2 = vector.load %arg3[%c0_3, %c0_4] : memref<128x1xf32, #tpu.memory_space<vmem>>, vector<128x1xf32>
    %cst = arith.constant dense<0.000000e+00> : vector<128x128xf32>
    %3 = tpu.matmul %1, %0, %cst {dimension_numbers = #tpu.dot_dimension_numbers<[1], [0], [0], [1], [0, 0, 1, 1], [], []>, precision = #tpu.contract_precision<fp32>} : vector<128x12xf32>, vector<12x128xf32>, vector<128x128xf32> -> vector<128x128xf32>
    %4 = vector.broadcast %2 : vector<128x1xf32> to vector<128x128xf32>
    %5 = arith.addf %3, %4 : vector<128x128xf32>
    %6 = math.tanh %5 : vector<128x128xf32>
    %c0_5 = arith.constant 0 : index
    %c0_6 = arith.constant 0 : index
    %7 = vector.load %arg4[%c0_5, %c0_6] : memref<128x128xf32, #tpu.memory_space<vmem>>, vector<128x128xf32>
    %c0_7 = arith.constant 0 : index
    %c0_8 = arith.constant 0 : index
    %8 = vector.load %arg5[%c0_7, %c0_8] : memref<128x1xf32, #tpu.memory_space<vmem>>, vector<128x1xf32>
    %cst_9 = arith.constant dense<0.000000e+00> : vector<128x128xf32>
    %9 = tpu.matmul %7, %6, %cst_9 {dimension_numbers = #tpu.dot_dimension_numbers<[1], [0], [0], [1], [0, 0, 1, 1], [], []>, precision = #tpu.contract_precision<fp32>} : vector<128x128xf32>, vector<128x128xf32>, vector<128x128xf32> -> vector<128x128xf32>
    %10 = vector.broadcast %8 : vector<128x1xf32> to vector<128x128xf32>
    %11 = arith.addf %9, %10 : vector<128x128xf32>
    %12 = math.tanh %11 : vector<128x128xf32>
    %c0_10 = arith.constant 0 : index
    %c0_11 = arith.constant 0 : index
    %13 = vector.load %arg6[%c0_10, %c0_11] : memref<128x128xf32, #tpu.memory_space<vmem>>, vector<128x128xf32>
    %c0_12 = arith.constant 0 : index
    %c0_13 = arith.constant 0 : index
    %14 = vector.load %arg7[%c0_12, %c0_13] : memref<128x1xf32, #tpu.memory_space<vmem>>, vector<128x1xf32>
    %cst_14 = arith.constant dense<0.000000e+00> : vector<128x128xf32>
    %15 = tpu.matmul %13, %12, %cst_14 {dimension_numbers = #tpu.dot_dimension_numbers<[1], [0], [0], [1], [0, 0, 1, 1], [], []>, precision = #tpu.contract_precision<fp32>} : vector<128x128xf32>, vector<128x128xf32>, vector<128x128xf32> -> vector<128x128xf32>
    %16 = vector.broadcast %14 : vector<128x1xf32> to vector<128x128xf32>
    %17 = arith.addf %15, %16 : vector<128x128xf32>
    %18 = math.tanh %17 : vector<128x128xf32>
    %c0_15 = arith.constant 0 : index
    %c0_16 = arith.constant 0 : index
    %19 = vector.load %arg8[%c0_15, %c0_16] : memref<16x128xf32, #tpu.memory_space<vmem>>, vector<16x128xf32>
    %c0_17 = arith.constant 0 : index
    %c0_18 = arith.constant 0 : index
    %20 = vector.load %arg9[%c0_17, %c0_18] : memref<16x1xf32, #tpu.memory_space<vmem>>, vector<16x1xf32>
    %cst_19 = arith.constant dense<0.000000e+00> : vector<16x128xf32>
    %21 = tpu.matmul %19, %18, %cst_19 {dimension_numbers = #tpu.dot_dimension_numbers<[1], [0], [0], [1], [0, 0, 1, 1], [], []>, precision = #tpu.contract_precision<fp32>} : vector<16x128xf32>, vector<128x128xf32>, vector<16x128xf32> -> vector<16x128xf32>
    %22 = vector.broadcast %20 : vector<16x1xf32> to vector<16x128xf32>
    %23 = arith.addf %21, %22 : vector<16x128xf32>
    %c0_20 = arith.constant 0 : index
    %c0_21 = arith.constant 0 : index
    %24 = vector.load %arg10[%c0_20, %c0_21] : memref<16x128xf32, #tpu.memory_space<vmem>>, vector<16x128xf32>
    tpu.vector_store %arg10[%c0_20, %c0_21], %23 {strides = array<i32>} : memref<16x128xf32, #tpu.memory_space<vmem>>, vector<16x128xf32>,
    return
  }
  func.func @transform_0(%arg0: i32) -> (i32, i32) {
    %c0_i32 = arith.constant 0 : i32
    %c0_i32_0 = arith.constant 0 : i32
    return %c0_i32, %arg0 : i32, i32
  }
  func.func @transform_1(%arg0: i32) -> (i32, i32) {
    %c0_i32 = arith.constant 0 : i32
    %c0_i32_0 = arith.constant 0 : i32
    %c0_i32_1 = arith.constant 0 : i32
    return %c0_i32, %c0_i32_0 : i32, i32
  }
  func.func @transform_2(%arg0: i32) -> (i32, i32) {
    %c0_i32 = arith.constant 0 : i32
    %c0_i32_0 = arith.constant 0 : i32
    %c0_i32_1 = arith.constant 0 : i32
    return %c0_i32, %c0_i32_0 : i32, i32
  }
  func.func @transform_3(%arg0: i32) -> (i32, i32) {
    %c0_i32 = arith.constant 0 : i32
    %c0_i32_0 = arith.constant 0 : i32
    %c0_i32_1 = arith.constant 0 : i32
    return %c0_i32, %c0_i32_0 : i32, i32
  }
  func.func @transform_4(%arg0: i32) -> (i32, i32) {
    %c0_i32 = arith.constant 0 : i32
    %c0_i32_0 = arith.constant 0 : i32
    %c0_i32_1 = arith.constant 0 : i32
    return %c0_i32, %c0_i32_0 : i32, i32
  }
  func.func @transform_5(%arg0: i32) -> (i32, i32) {
    %c0_i32 = arith.constant 0 : i32
    %c0_i32_0 = arith.constant 0 : i32
    %c0_i32_1 = arith.constant 0 : i32
    return %c0_i32, %c0_i32_0 : i32, i32
  }
  func.func @transform_6(%arg0: i32) -> (i32, i32) {
    %c0_i32 = arith.constant 0 : i32
    %c0_i32_0 = arith.constant 0 : i32
    %c0_i32_1 = arith.constant 0 : i32
    return %c0_i32, %c0_i32_0 : i32, i32
  }
  func.func @transform_7(%arg0: i32) -> (i32, i32) {
    %c0_i32 = arith.constant 0 : i32
    %c0_i32_0 = arith.constant 0 : i32
    %c0_i32_1 = arith.constant 0 : i32
    return %c0_i32, %c0_i32_0 : i32, i32
  }
  func.func @transform_8(%arg0: i32) -> (i32, i32) {
    %c0_i32 = arith.constant 0 : i32
    %c0_i32_0 = arith.constant 0 : i32
    %c0_i32_1 = arith.constant 0 : i32
    return %c0_i32, %c0_i32_0 : i32, i32
  }
  func.func @transform_9(%arg0: i32) -> (i32, i32) {
    %c0_i32 = arith.constant 0 : i32
    %c0_i32_0 = arith.constant 0 : i32
    return %c0_i32, %arg0 : i32, i32
  }
}

</mosaic_0001>

<llo_original>
// kernel: tpu_custom_call.1
$region0: #{tpu_custom_call.1}
  #allocation0 [shape = 'u32[]', space=smem, size = 0x4, offset = 0x4, fixed_abs, tag = 'smem constant byte address 0x4 - core index']
  #allocation1 [shape = 'u32[144,128]{1,0:T(1,128)}', space=vmem, size = 0x12000, scoped, tag = 'internal scratch']
  %s0 = inlined_call_operand.vmem [shape: f32[12,128], index: 0, kind: input, shape index: {}]
  %s1 = inlined_call_operand.vmem [shape: f32[128,12], index: 1, kind: input, shape index: {}]
  %s2 = inlined_call_operand.vmem [shape: f32[128,1], index: 2, kind: input, shape index: {}]
  %s3 = inlined_call_operand.vmem [shape: f32[128,128], index: 3, kind: input, shape index: {}]
  %s4 = inlined_call_operand.vmem [shape: f32[128,1], index: 4, kind: input, shape index: {}]
  %s5 = inlined_call_operand.vmem [shape: f32[128,128], index: 5, kind: input, shape index: {}]
  %s6 = inlined_call_operand.vmem [shape: f32[128,1], index: 6, kind: input, shape index: {}]
  %s7 = inlined_call_operand.vmem [shape: f32[16,128], index: 7, kind: input, shape index: {}]
  %s8 = inlined_call_operand.vmem [shape: f32[16,1], index: 8, kind: input, shape index: {}]
  %s9 = inlined_call_operand.hbm [shape: f32[16,128], index: 9, kind: output, shape index: {}]
  %s10 = sld [smem:[#allocation0]]
  $region46: #{tpu_custom_call.1} parent=0
    _
  %s12 = ssub.s32 1, %s10
  %s13 = scalar_select 0, %s12, %s10
  $region1: #{tpu_custom_call.1} parent=0
    #allocation2 [shape = 'u8[8192]{0}', space=vmem, size = 0x2000, scoped, tag = 'output window, operand 0, single buffered']
    #allocation3 [shape = 's32[1]{0}', space=sflag, size = 0x4, scoped, tag = 'scoped memory for tpu_custom_call.1']
    %14 = vsyncpa [#allocation3], 0
    // Predicated region
    $region2: #{tpu_custom_call.1} parent=1 // pred_check
      _
    $region3: #{tpu_custom_call.1} parent=1 // pred_check_branch
      %16 = sbr.rel (0) target = $region5
    $region4: #{tpu_custom_call.1} parent=1 // pred_region
      _
    $region5: #{tpu_custom_call.1} parent=1 // pred_fallthru
      _
    // Predicated region
    $region6: #{tpu_custom_call.1} parent=1 // pred_check
      _
    $region7: #{tpu_custom_call.1} parent=1 // pred_check_branch
      %18 = sbr.rel (0) target = $region9
    $region8: #{tpu_custom_call.1} parent=1 // pred_region
      _
    $region9: #{tpu_custom_call.1} parent=1 // pred_fallthru
      _
    // Predicated region
    $region10: #{tpu_custom_call.1} parent=1 // pred_check
      _
    $region11: #{tpu_custom_call.1} parent=1 // pred_check_branch
      %20 = sbr.rel (0) target = $region13
    $region12: #{tpu_custom_call.1} parent=1 // pred_region
      _
    $region13: #{tpu_custom_call.1} parent=1 // pred_fallthru
      _
    // Predicated region
    $region14: #{tpu_custom_call.1} parent=1 // pred_check
      _
    $region15: #{tpu_custom_call.1} parent=1 // pred_check_branch
      %22 = sbr.rel (0) target = $region17
    $region16: #{tpu_custom_call.1} parent=1 // pred_region
      _
    $region17: #{tpu_custom_call.1} parent=1 // pred_fallthru
      _
    // Predicated region
    $region18: #{tpu_custom_call.1} parent=1 // pred_check
      _
    $region19: #{tpu_custom_call.1} parent=1 // pred_check_branch
      %24 = sbr.rel (0) target = $region21
    $region20: #{tpu_custom_call.1} parent=1 // pred_region
      _
    $region21: #{tpu_custom_call.1} parent=1 // pred_fallthru
      _
    // Predicated region
    $region22: #{tpu_custom_call.1} parent=1 // pred_check
      _
    $region23: #{tpu_custom_call.1} parent=1 // pred_check_branch
      %26 = sbr.rel (0) target = $region25
    $region24: #{tpu_custom_call.1} parent=1 // pred_region
      _
    $region25: #{tpu_custom_call.1} parent=1 // pred_fallthru
      _
    // Predicated region
    $region26: #{tpu_custom_call.1} parent=1 // pred_check
      _
    $region27: #{tpu_custom_call.1} parent=1 // pred_check_branch
      %28 = sbr.rel (0) target = $region29
    $region28: #{tpu_custom_call.1} parent=1 // pred_region
      _
    $region29: #{tpu_custom_call.1} parent=1 // pred_fallthru
      _
    // Predicated region
    $region30: #{tpu_custom_call.1} parent=1 // pred_check
      _
    $region31: #{tpu_custom_call.1} parent=1 // pred_check_branch
      %30 = sbr.rel (0) target = $region33
    $region32: #{tpu_custom_call.1} parent=1 // pred_region
      _
    $region33: #{tpu_custom_call.1} parent=1 // pred_fallthru
      _
    // Predicated region
    $region34: #{tpu_custom_call.1} parent=1 // pred_check
      _
    $region35: #{tpu_custom_call.1} parent=1 // pred_check_branch
      %32 = sbr.rel (0) target = $region37
    $region36: #{tpu_custom_call.1} parent=1 // pred_region
      _
    $region37: #{tpu_custom_call.1} parent=1 // pred_fallthru
      _
    %v33 = vld [vmem:[%s0] sm:$0xff]
    %v34 = vld [vmem:[%s0 + $0x8] sm:$0xf]
    %v35 = vld [vmem:[%s1] sm:$0xff]
    %v36 = vld [vmem:[%s1 + $0x8] sm:$0xff]
    %v37 = vld [vmem:[%s1 + $0x10] sm:$0xff]
    %v38 = vld [vmem:[%s1 + $0x18] sm:$0xff]
    %v39 = vld [vmem:[%s1 + $0x20] sm:$0xff]
    %v40 = vld [vmem:[%s1 + $0x28] sm:$0xff]
    %v41 = vld [vmem:[%s1 + $0x30] sm:$0xff]
    %v42 = vld [vmem:[%s1 + $0x38] sm:$0xff]
    %v43 = vld [vmem:[%s1 + $0x40] sm:$0xff]
    %v44 = vld [vmem:[%s1 + $0x48] sm:$0xff]
    %v45 = vld [vmem:[%s1 + $0x50] sm:$0xff]
    %v46 = vld [vmem:[%s1 + $0x58] sm:$0xff]
    %v47 = vld [vmem:[%s1 + $0x60] sm:$0xff]
    %v48 = vld [vmem:[%s1 + $0x68] sm:$0xff]
    %v49 = vld [vmem:[%s1 + $0x70] sm:$0xff]
    %v50 = vld [vmem:[%s1 + $0x78] sm:$0xff]
    %v51 = vld [vmem:[%s2] sm:$0xff]
    %v52 = vld [vmem:[%s2 + $0x8] sm:$0xff]
    %v53 = vld [vmem:[%s2 + $0x10] sm:$0xff]
    %v54 = vld [vmem:[%s2 + $0x18] sm:$0xff]
    %v55 = vld [vmem:[%s2 + $0x20] sm:$0xff]
    %v56 = vld [vmem:[%s2 + $0x28] sm:$0xff]
    %v57 = vld [vmem:[%s2 + $0x30] sm:$0xff]
    %v58 = vld [vmem:[%s2 + $0x38] sm:$0xff]
    %v59 = vld [vmem:[%s2 + $0x40] sm:$0xff]
    %v60 = vld [vmem:[%s2 + $0x48] sm:$0xff]
    %v61 = vld [vmem:[%s2 + $0x50] sm:$0xff]
    %v62 = vld [vmem:[%s2 + $0x58] sm:$0xff]
    %v63 = vld [vmem:[%s2 + $0x60] sm:$0xff]
    %v64 = vld [vmem:[%s2 + $0x68] sm:$0xff]
    %v65 = vld [vmem:[%s2 + $0x70] sm:$0xff]
    %v66 = vld [vmem:[%s2 + $0x78] sm:$0xff]
    %68 = vset.pattern.permute.xlu0 0
    %69 = vperm.xlu0 %68, %v51
    %v70 = vpop.permute.xlu0 %69
    %73 = vset.pattern.permute.xlu0 0
    %74 = vperm.xlu0 %73, %v52
    %v75 = vpop.permute.xlu0 %74
    %78 = vset.pattern.permute.xlu0 0
    %79 = vperm.xlu0 %78, %v53
    %v80 = vpop.permute.xlu0 %79
    %83 = vset.pattern.permute.xlu0 0
    %84 = vperm.xlu0 %83, %v54
    %v85 = vpop.permute.xlu0 %84
    %88 = vset.pattern.permute.xlu0 0
    %89 = vperm.xlu0 %88, %v55
    %v90 = vpop.permute.xlu0 %89
    %93 = vset.pattern.permute.xlu0 0
    %94 = vperm.xlu0 %93, %v56
    %v95 = vpop.permute.xlu0 %94
    %98 = vset.pattern.permute.xlu0 0
    %99 = vperm.xlu0 %98, %v57
    %v100 = vpop.permute.xlu0 %99
    %103 = vset.pattern.permute.xlu0 0
    %104 = vperm.xlu0 %103, %v58
    %v105 = vpop.permute.xlu0 %104
    %108 = vset.pattern.permute.xlu0 0
    %109 = vperm.xlu0 %108, %v59
    %v110 = vpop.permute.xlu0 %109
    %113 = vset.pattern.permute.xlu0 0
    %114 = vperm.xlu0 %113, %v60
    %v115 = vpop.permute.xlu0 %114
    %118 = vset.pattern.permute.xlu0 0
    %119 = vperm.xlu0 %118, %v61
    %v120 = vpop.permute.xlu0 %119
    %123 = vset.pattern.permute.xlu0 0
    %124 = vperm.xlu0 %123, %v62
    %v125 = vpop.permute.xlu0 %124
    %128 = vset.pattern.permute.xlu0 0
    %129 = vperm.xlu0 %128, %v63
    %v130 = vpop.permute.xlu0 %129
    %133 = vset.pattern.permute.xlu0 0
    %134 = vperm.xlu0 %133, %v64
    %v135 = vpop.permute.xlu0 %134
    %138 = vset.pattern.permute.xlu0 0
    %139 = vperm.xlu0 %138, %v65
    %v140 = vpop.permute.xlu0 %139
    %143 = vset.pattern.permute.xlu0 0
    %144 = vperm.xlu0 %143, %v66
    %v145 = vpop.permute.xlu0 %144
    %vm147 = vcmask 97280
    %v149 = vsel %vm147, %v35, 0
    %v152 = vsel %vm147, %v36, 0
    %v155 = vsel %vm147, %v37, 0
    %v158 = vsel %vm147, %v38, 0
    %v161 = vsel %vm147, %v39, 0
    %v164 = vsel %vm147, %v40, 0
    %v167 = vsel %vm147, %v41, 0
    %v170 = vsel %vm147, %v42, 0
    %v173 = vsel %vm147, %v43, 0
    %v176 = vsel %vm147, %v44, 0
    %v179 = vsel %vm147, %v45, 0
    %v182 = vsel %vm147, %v46, 0
    %v185 = vsel %vm147, %v47, 0
    %v188 = vsel %vm147, %v48, 0
    %v191 = vsel %vm147, %v49, 0
    %v194 = vsel %vm147, %v50, 0
    %vm196 = vcmask 1043456
    %v198 = vsel %vm196, %v34, 0
    %200 = vmatprep.subr.mxu0 0.0
    %v201 = vand.u32 %v33, 4294901760
    %202 = vmatpush1.msra.mxu0 %v201
    %203 = vmatprep.subr.mxu0 0.0
    %v204 = vand.u32 %v198, 4294901760
    %205 = vmatpush1.msra.mxu0 %v204
    %206 = vmatprep.subr.mxu0 0.0
    %207 = vmatpush1.msra.mxu0 0.0
    %208 = vmatprep.subr.mxu0 0.0
    %209 = vmatpush1.msra.mxu0 0.0
    %210 = vmatprep.subr.mxu0 0.0
    %211 = vmatpush1.msra.mxu0 0.0
    %212 = vmatprep.subr.mxu0 0.0
    %213 = vmatpush1.msra.mxu0 0.0
    %214 = vmatprep.subr.mxu0 0.0
    %215 = vmatpush1.msra.mxu0 0.0
    %216 = vmatprep.subr.mxu0 0.0
    %217 = vmatpush1.msra.mxu0 0.0
    %218 = vmatprep.subr.mxu0 0.0
    %219 = vmatpush1.msra.mxu0 0.0
    %220 = vmatprep.subr.mxu0 0.0
    %221 = vmatpush1.msra.mxu0 0.0
    %222 = vmatprep.subr.mxu0 0.0
    %223 = vmatpush1.msra.mxu0 0.0
    %224 = vmatprep.subr.mxu0 0.0
    %225 = vmatpush1.msra.mxu0 0.0
    %226 = vmatprep.subr.mxu0 0.0
    %227 = vmatpush1.msra.mxu0 0.0
    %228 = vmatprep.subr.mxu0 0.0
    %229 = vmatpush1.msra.mxu0 0.0
    %230 = vmatprep.subr.mxu0 0.0
    %231 = vmatpush1.msra.mxu0 0.0
    %232 = vmatprep.subr.mxu0 0.0
    %233 = vmatpush1.msra.mxu0 0.0
    %234 = vmatprep.subr.mxu0 0.0
    %235 = vmatpush1.msra.mxu0 0.0
    %236 = vmatprep.subr.mxu0 0.0
    %237 = vmatpush1.msra.mxu0 0.0
    %238 = vmatprep.subr.mxu0 0.0
    %239 = vmatpush1.msra.mxu0 0.0
    %240 = vmatprep.subr.mxu0 0.0
    %241 = vmatpush1.msra.mxu0 0.0
    %242 = vmatprep.subr.mxu0 0.0
    %243 = vmatpush1.msra.mxu0 0.0
    %244 = vmatprep.subr.mxu0 0.0
    %245 = vmatpush1.msra.mxu0 0.0
    %246 = vmatprep.subr.mxu0 0.0
    %247 = vmatpush1.msra.mxu0 0.0
    %248 = vmatprep.subr.mxu0 0.0
    %249 = vmatpush1.msra.mxu0 0.0
    %250 = vmatprep.subr.mxu0 0.0
    %251 = vmatpush1.msra.mxu0 0.0
    %252 = vmatprep.subr.mxu0 0.0
    %253 = vmatpush1.msra.mxu0 0.0
    %254 = vmatprep.subr.mxu0 0.0
    %255 = vmatpush1.msra.mxu0 0.0
    %256 = vmatprep.subr.mxu0 0.0
    %257 = vmatpush1.msra.mxu0 0.0
    %258 = vmatprep.subr.mxu0 0.0
    %259 = vmatpush1.msra.mxu0 0.0
    %260 = vmatprep.subr.mxu0 0.0
    %261 = vmatpush1.msra.mxu0 0.0
    %262 = vmatprep.subr.mxu0 0.0
    %263 = vmatpush1.msra.mxu0 0.0
    %264 = vmatprep.subr.mxu0 0.0
    %265 = vmatpush1.msra.mxu0 0.0
    %266 = vmatprep.mubr.f32.mxu0 0.0
    %v267 = vand.u32 %v149, 4294901760
    %v268 = vsub.f32 %v149, %v267
    %v269 = vand.u32 %v268, 4294901760
    %v270 = vsub.f32 %v268, %v269
    %v271 = vand.u32 %v270, 4294901760
    %272 = vmatmul.mubr.f32.gmra.mrb[0].mxu0 %v271
    %v273 = vpop.f32.mrb[0].mxu0
    %v274 = vadd.f32 %v70, %v273
    %v275 = vpop.f32.mrb[0].mxu0
    %276 = vmatprep.mubr.f32.mxu0 0.0
    %v277 = vand.u32 %v152, 4294901760
    %v278 = vsub.f32 %v152, %v277
    %v279 = vand.u32 %v278, 4294901760
    %v280 = vsub.f32 %v278, %v279
    %v281 = vand.u32 %v280, 4294901760
    %282 = vmatmul.mubr.f32.gmra.mrb[0].mxu0 %v281
    %v283 = vpop.f32.mrb[0].mxu0
    %v284 = vadd.f32 %v75, %v283
    %v285 = vpop.f32.mrb[0].mxu0
    %286 = vmatprep.mubr.f32.mxu0 0.0
    %v287 = vand.u32 %v155, 4294901760
    %v288 = vsub.f32 %v155, %v287
    %v289 = vand.u32 %v288, 4294901760
    %v290 = vsub.f32 %v288, %v289
    %v291 = vand.u32 %v290, 4294901760
    %292 = vmatmul.mubr.f32.gmra.mrb[0].mxu0 %v291
    %v293 = vpop.f32.mrb[0].mxu0
    %v294 = vadd.f32 %v80, %v293
    %v295 = vpop.f32.mrb[0].mxu0
    %296 = vmatprep.mubr.f32.mxu0 0.0
    %v297 = vand.u32 %v158, 4294901760
    %v298 = vsub.f32 %v158, %v297
    %v299 = vand.u32 %v298, 4294901760
    %v300 = vsub.f32 %v298, %v299
    %v301 = vand.u32 %v300, 4294901760
    %302 = vmatmul.mubr.f32.gmra.mrb[0].mxu0 %v301
    %v303 = vpop.f32.mrb[0].mxu0
    %v304 = vadd.f32 %v85, %v303
    %v305 = vpop.f32.mrb[0].mxu0
    %306 = vmatprep.mubr.f32.mxu0 0.0
    %v307 = vand.u32 %v161, 4294901760
    %v308 = vsub.f32 %v161, %v307
    %v309 = vand.u32 %v308, 4294901760
    %v310 = vsub.f32 %v308, %v309
    %v311 = vand.u32 %v310, 4294901760
    %312 = vmatmul.mubr.f32.gmra.mrb[0].mxu0 %v311
    %v313 = vpop.f32.mrb[0].mxu0
    %v314 = vadd.f32 %v90, %v313
    %v315 = vpop.f32.mrb[0].mxu0
    %316 = vmatprep.mubr.f32.mxu0 0.0
    %v317 = vand.u32 %v164, 4294901760
    %v318 = vsub.f32 %v164, %v317
    %v319 = vand.u32 %v318, 4294901760
    %v320 = vsub.f32 %v318, %v319
    %v321 = vand.u32 %v320, 4294901760
    %322 = vmatmul.mubr.f32.gmra.mrb[0].mxu0 %v321
    %v323 = vpop.f32.mrb[0].mxu0
    %v324 = vadd.f32 %v95, %v323
    %v325 = vpop.f32.mrb[0].mxu0
    %326 = vmatprep.mubr.f32.mxu0 0.0
    %v327 = vand.u32 %v167, 4294901760
    %v328 = vsub.f32 %v167, %v327
    %v329 = vand.u32 %v328, 4294901760
    %v330 = vsub.f32 %v328, %v329
    %v331 = vand.u32 %v330, 4294901760
    %332 = vmatmul.mubr.f32.gmra.mrb[0].mxu0 %v331
    %v333 = vpop.f32.mrb[0].mxu0
    %v334 = vadd.f32 %v100, %v333
    %v335 = vpop.f32.mrb[0].mxu0
    %336 = vmatprep.mubr.f32.mxu0 0.0
    %v337 = vand.u32 %v170, 4294901760
    %v338 = vsub.f32 %v170, %v337
    %v339 = vand.u32 %v338, 4294901760
    %v340 = vsub.f32 %v338, %v339
    %v341 = vand.u32 %v340, 4294901760
    %342 = vmatmul.mubr.f32.gmra.mrb[0].mxu0 %v341
    %v343 = vpop.f32.mrb[0].mxu0
    %v344 = vadd.f32 %v105, %v343
    %v345 = vpop.f32.mrb[0].mxu0
    %346 = vmatprep.mubr.f32.mxu0 0.0
    %v347 = vand.u32 %v173, 4294901760
    %v348 = vsub.f32 %v173, %v347
    %v349 = vand.u32 %v348, 4294901760
    %v350 = vsub.f32 %v348, %v349
    %v351 = vand.u32 %v350, 4294901760
    %352 = vmatmul.mubr.f32.gmra.mrb[0].mxu0 %v351
    %v353 = vpop.f32.mrb[0].mxu0
    %v354 = vadd.f32 %v110, %v353
    %v355 = vpop.f32.mrb[0].mxu0
    %356 = vmatprep.mubr.f32.mxu0 0.0
    %v357 = vand.u32 %v176, 4294901760
    %v358 = vsub.f32 %v176, %v357
    %v359 = vand.u32 %v358, 4294901760
    %v360 = vsub.f32 %v358, %v359
    %v361 = vand.u32 %v360, 4294901760
    %362 = vmatmul.mubr.f32.gmra.mrb[0].mxu0 %v361
    %v363 = vpop.f32.mrb[0].mxu0
    %v364 = vadd.f32 %v115, %v363
    %v365 = vpop.f32.mrb[0].mxu0
    %366 = vmatprep.mubr.f32.mxu0 0.0
    %v367 = vand.u32 %v179, 4294901760
    %v368 = vsub.f32 %v179, %v367
    %v369 = vand.u32 %v368, 4294901760
    %v370 = vsub.f32 %v368, %v369
    %v371 = vand.u32 %v370, 4294901760
    %372 = vmatmul.mubr.f32.gmra.mrb[0].mxu0 %v371
    %v373 = vpop.f32.mrb[0].mxu0
    %v374 = vadd.f32 %v120, %v373
    %v375 = vpop.f32.mrb[0].mxu0
    %376 = vmatprep.mubr.f32.mxu0 0.0
    %v377 = vand.u32 %v182, 4294901760
    %v378 = vsub.f32 %v182, %v377
    %v379 = vand.u32 %v378, 4294901760
    %v380 = vsub.f32 %v378, %v379
    %v381 = vand.u32 %v380, 4294901760
    %382 = vmatmul.mubr.f32.gmra.mrb[0].mxu0 %v381
    %v383 = vpop.f32.mrb[0].mxu0
    %v384 = vadd.f32 %v125, %v383
    %v385 = vpop.f32.mrb[0].mxu0
    %386 = vmatprep.mubr.f32.mxu0 0.0
    %v387 = vand.u32 %v185, 4294901760
    %v388 = vsub.f32 %v185, %v387
    %v389 = vand.u32 %v388, 4294901760
    %v390 = vsub.f32 %v388, %v389
    %v391 = vand.u32 %v390, 4294901760
    %392 = vmatmul.mubr.f32.gmra.mrb[0].mxu0 %v391
    %v393 = vpop.f32.mrb[0].mxu0
    %v394 = vadd.f32 %v130, %v393
    %v395 = vpop.f32.mrb[0].mxu0
    %396 = vmatprep.mubr.f32.mxu0 0.0
    %v397 = vand.u32 %v188, 4294901760
    %v398 = vsub.f32 %v188, %v397
    %v399 = vand.u32 %v398, 4294901760
    %v400 = vsub.f32 %v398, %v399
    %v401 = vand.u32 %v400, 4294901760
    %402 = vmatmul.mubr.f32.gmra.mrb[0].mxu0 %v401
    %v403 = vpop.f32.mrb[0].mxu0
    %v404 = vadd.f32 %v135, %v403
    %v405 = vpop.f32.mrb[0].mxu0
    %406 = vmatprep.mubr.f32.mxu0 0.0
    %v407 = vand.u32 %v191, 4294901760
    %v408 = vsub.f32 %v191, %v407
    %v409 = vand.u32 %v408, 4294901760
    %v410 = vsub.f32 %v408, %v409
    %v411 = vand.u32 %v410, 4294901760
    %412 = vmatmul.mubr.f32.gmra.mrb[0].mxu0 %v411
    %v413 = vpop.f32.mrb[0].mxu0
    %v414 = vadd.f32 %v140, %v413
    %v415 = vpop.f32.mrb[0].mxu0
    %416 = vmatprep.mubr.f32.mxu0 0.0
    %v417 = vand.u32 %v194, 4294901760
    %v418 = vsub.f32 %v194, %v417
    %v419 = vand.u32 %v418, 4294901760
    %v420 = vsub.f32 %v418, %v419
    %v421 = vand.u32 %v420, 4294901760
    %422 = vmatmul.mubr.f32.gmra.mrb[0].mxu0 %v421
    %v423 = vpop.f32.mrb[0].mxu0
    %v424 = vadd.f32 %v145, %v423
    %v425 = vpop.f32.mrb[0].mxu0
    %426 = vdwg.mxu0
    %427 = vmatprep.subr.mxu0 0.0
    %v428 = vand.u32 %v33, 4294901760
    %v429 = vsub.f32 %v33, %v428
    %v430 = vand.u32 %v429, 4294901760
    %v431 = vsub.f32 %v429, %v430
    %v432 = vand.u32 %v431, 4294901760
    %433 = vmatpush1.msra.mxu0 %v432
    %434 = vmatprep.subr.mxu0 0.0
    %v435 = vand.u32 %v198, 4294901760
    %v436 = vsub.f32 %v198, %v435
    %v437 = vand.u32 %v436, 4294901760
    %v438 = vsub.f32 %v436, %v437
    %v439 = vand.u32 %v438, 4294901760
    %440 = vmatpush1.msra.mxu0 %v439
    %441 = vmatprep.subr.mxu0 0.0
    %442 = vmatpush1.msra.mxu0 0.0
    %443 = vmatprep.subr.mxu0 0.0
    %444 = vmatpush1.msra.mxu0 0.0
    %445 = vmatprep.subr.mxu0 0.0
    %446 = vmatpush1.msra.mxu0 0.0
    %447 = vmatprep.subr.mxu0 0.0
    %448 = vmatpush1.msra.mxu0 0.0
    %449 = vmatprep.subr.mxu0 0.0
    %450 = vmatpush1.msra.mxu0 0.0
    %451 = vmatprep.subr.mxu0 0.0
    %452 = vmatpush1.msra.mxu0 0.0
    %453 = vmatprep.subr.mxu0 0.0
    %454 = vmatpush1.msra.mxu0 0.0
    %455 = vmatprep.subr.mxu0 0.0
    %456 = vmatpush1.msra.mxu0 0.0
    %457 = vmatprep.subr.mxu0 0.0
    %458 = vmatpush1.msra.mxu0 0.0
    %459 = vmatprep.subr.mxu0 0.0
    %460 = vmatpush1.msra.mxu0 0.0
    %461 = vmatprep.subr.mxu0 0.0
    %462 = vmatpush1.msra.mxu0 0.0
    %463 = vmatprep.subr.mxu0 0.0
    %464 = vmatpush1.msra.mxu0 0.0
    %465 = vmatprep.subr.mxu0 0.0
    %466 = vmatpush1.msra.mxu0 0.0
    %467 = vmatprep.subr.mxu0 0.0
    %468 = vmatpush1.msra.mxu0 0.0
    %469 = vmatprep.subr.mxu0 0.0
    %470 = vmatpush1.msra.mxu0 0.0
    %471 = vmatprep.subr.mxu0 0.0
    %472 = vmatpush1.msra.mxu0 0.0
    %473 = vmatprep.subr.mxu0 0.0
    %474 = vmatpush1.msra.mxu0 0.0
    %475 = vmatprep.subr.mxu0 0.0
    %476 = vmatpush1.msra.mxu0 0.0
    %477 = vmatprep.subr.mxu0 0.0
    %478 = vmatpush1.msra.mxu0 0.0
    %479 = vmatprep.subr.mxu0 0.0
    %480 = vmatpush1.msra.mxu0 0.0
    %481 = vmatprep.subr.mxu0 0.0
    %482 = vmatpush1.msra.mxu0 0.0
    %483 = vmatprep.subr.mxu0 0.0
    %484 = vmatpush1.msra.mxu0 0.0
    %485 = vmatprep.subr.mxu0 0.0
    %486 = vmatpush1.msra.mxu0 0.0
    %487 = vmatprep.subr.mxu0 0.0
    %488 = vmatpush1.msra.mxu0 0.0
    %489 = vmatprep.subr.mxu0 0.0
    %490 = vmatpush1.msra.mxu0 0.0
    %491 = vmatprep.subr.mxu0 0.0
    %492 = vmatpush1.msra.mxu0 0.0
    %493 = vmatprep.subr.mxu0 0.0
    %494 = vmatpush1.msra.mxu0 0.0
    %495 = vmatprep.subr.mxu0 0.0
    %496 = vmatpush1.msra.mxu0 0.0
    %497 = vmatprep.subr.mxu0 0.0
    %498 = vmatpush1.msra.mxu0 0.0
    %499 = vmatprep.subr.mxu0 0.0
    %500 = vmatpush1.msra.mxu0 0.0
    %501 = vmatprep.mubr.f32.mxu0 0.0
    %v502 = vand.u32 %v149, 4294901760
    %503 = vmatmul.mubr.f32.gmra.mrb[0].mxu0 %v502
    %v504 = vpop.f32.mrb[0].mxu0
    %v505 = vadd.f32 %v274, %v504
    %v506 = vpop.f32.mrb[0].mxu0
    %507 = vmatprep.mubr.f32.mxu0 0.0
    %v508 = vand.u32 %v152, 4294901760
    %509 = vmatmul.mubr.f32.gmra.mrb[0].mxu0 %v508
    %v510 = vpop.f32.mrb[0].mxu0
    %v511 = vadd.f32 %v284, %v510
    %v512 = vpop.f32.mrb[0].mxu0
    %513 = vmatprep.mubr.f32.mxu0 0.0
    %v514 = vand.u32 %v155, 4294901760
    %515 = vmatmul.mubr.f32.gmra.mrb[0].mxu0 %v514
    %v516 = vpop.f32.mrb[0].mxu0
    %v517 = vadd.f32 %v294, %v516
    %v518 = vpop.f32.mrb[0].mxu0
    %519 = vmatprep.mubr.f32.mxu0 0.0
    %v520 = vand.u32 %v158, 4294901760
    %521 = vmatmul.mubr.f32.gmra.mrb[0].mxu0 %v520
    %v522 = vpop.f32.mrb[0].mxu0
    %v523 = vadd.f32 %v304, %v522
    %v524 = vpop.f32.mrb[0].mxu0
    %525 = vmatprep.mubr.f32.mxu0 0.0
    %v526 = vand.u32 %v161, 4294901760
    %527 = vmatmul.mubr.f32.gmra.mrb[0].mxu0 %v526
    %v528 = vpop.f32.mrb[0].mxu0
    %v529 = vadd.f32 %v314, %v528
    %v530 = vpop.f32.mrb[0].mxu0
    %531 = vmatprep.mubr.f32.mxu0 0.0
    %v532 = vand.u32 %v164, 4294901760
    %533 = vmatmul.mubr.f32.gmra.mrb[0].mxu0 %v532
    %v534 = vpop.f32.mrb[0].mxu0
    %v535 = vadd.f32 %v324, %v534
    %v536 = vpop.f32.mrb[0].mxu0
    %537 = vmatprep.mubr.f32.mxu0 0.0
    %v538 = vand.u32 %v167, 4294901760
    %539 = vmatmul.mubr.f32.gmra.mrb[0].mxu0 %v538
    %v540 = vpop.f32.mrb[0].mxu0
    %v541 = vadd.f32 %v334, %v540
    %v542 = vpop.f32.mrb[0].mxu0
    %543 = vmatprep.mubr.f32.mxu0 0.0
    %v544 = vand.u32 %v170, 4294901760
    %545 = vmatmul.mubr.f32.gmra.mrb[0].mxu0 %v544
    %v546 = vpop.f32.mrb[0].mxu0
    %v547 = vadd.f32 %v344, %v546
    %v548 = vpop.f32.mrb[0].mxu0
    %549 = vmatprep.mubr.f32.mxu0 0.0
    %v550 = vand.u32 %v173, 4294901760
    %551 = vmatmul.mubr.f32.gmra.mrb[0].mxu0 %v550
    %v552 = vpop.f32.mrb[0].mxu0
    %v553 = vadd.f32 %v354, %v552
    %v554 = vpop.f32.mrb[0].mxu0
    %555 = vmatprep.mubr.f32.mxu0 0.0
    %v556 = vand.u32 %v176, 4294901760
    %557 = vmatmul.mubr.f32.gmra.mrb[0].mxu0 %v556
    %v558 = vpop.f32.mrb[0].mxu0
    %v559 = vadd.f32 %v364, %v558
    %v560 = vpop.f32.mrb[0].mxu0
    %561 = vmatprep.mubr.f32.mxu0 0.0
    %v562 = vand.u32 %v179, 4294901760
    %563 = vmatmul.mubr.f32.gmra.mrb[0].mxu0 %v562
    %v564 = vpop.f32.mrb[0].mxu0
    %v565 = vadd.f32 %v374, %v564
    %v566 = vpop.f32.mrb[0].mxu0
    %567 = vmatprep.mubr.f32.mxu0 0.0
    %v568 = vand.u32 %v182, 4294901760
    %569 = vmatmul.mubr.f32.gmra.mrb[0].mxu0 %v568
    %v570 = vpop.f32.mrb[0].mxu0
    %v571 = vadd.f32 %v384, %v570
    %v572 = vpop.f32.mrb[0].mxu0
    %573 = vmatprep.mubr.f32.mxu0 0.0
    %v574 = vand.u32 %v185, 4294901760
    %575 = vmatmul.mubr.f32.gmra.mrb[0].mxu0 %v574
    %v576 = vpop.f32.mrb[0].mxu0
    %v577 = vadd.f32 %v394, %v576
    %v578 = vpop.f32.mrb[0].mxu0
    %579 = vmatprep.mubr.f32.mxu0 0.0
    %v580 = vand.u32 %v188, 4294901760
    %581 = vmatmul.mubr.f32.gmra.mrb[0].mxu0 %v580
    %v582 = vpop.f32.mrb[0].mxu0
    %v583 = vadd.f32 %v404, %v582
    %v584 = vpop.f32.mrb[0].mxu0
    %585 = vmatprep.mubr.f32.mxu0 0.0
    %v586 = vand.u32 %v191, 4294901760
    %587 = vmatmul.mubr.f32.gmra.mrb[0].mxu0 %v586
    %v588 = vpop.f32.mrb[0].mxu0
    %v589 = vadd.f32 %v414, %v588
    %v590 = vpop.f32.mrb[0].mxu0
    %591 = vmatprep.mubr.f32.mxu0 0.0
    %v592 = vand.u32 %v194, 4294901760
    %593 = vmatmul.mubr.f32.gmra.mrb[0].mxu0 %v592
    %v594 = vpop.f32.mrb[0].mxu0
    %v595 = vadd.f32 %v424, %v594
    %v596 = vpop.f32.mrb[0].mxu0
    %597 = vdwg.mxu0
    %598 = vmatprep.subr.mxu0 0.0
    %v599 = vand.u32 %v33, 4294901760
    %v600 = vsub.f32 %v33, %v599
    %601 = vmatpush1.msra.mxu0 %v600
    %602 = vmatprep.subr.mxu0 0.0
    %v603 = vand.u32 %v198, 4294901760
    %v604 = vsub.f32 %v198, %v603
    %605 = vmatpush1.msra.mxu0 %v604
    %606 = vmatprep.subr.mxu0 0.0
    %607 = vmatpush1.msra.mxu0 0.0
    %608 = vmatprep.subr.mxu0 0.0
    %609 = vmatpush1.msra.mxu0 0.0
    %610 = vmatprep.subr.mxu0 0.0
    %611 = vmatpush1.msra.mxu0 0.0
    %612 = vmatprep.subr.mxu0 0.0
    %613 = vmatpush1.msra.mxu0 0.0
    %614 = vmatprep.subr.mxu0 0.0
    %615 = vmatpush1.msra.mxu0 0.0
    %616 = vmatprep.subr.mxu0 0.0
    %617 = vmatpush1.msra.mxu0 0.0
    %618 = vmatprep.subr.mxu0 0.0
    %619 = vmatpush1.msra.mxu0 0.0
    %620 = vmatprep.subr.mxu0 0.0
    %621 = vmatpush1.msra.mxu0 0.0
    %622 = vmatprep.subr.mxu0 0.0
    %623 = vmatpush1.msra.mxu0 0.0
    %624 = vmatprep.subr.mxu0 0.0
    %625 = vmatpush1.msra.mxu0 0.0
    %626 = vmatprep.subr.mxu0 0.0
    %627 = vmatpush1.msra.mxu0 0.0
    %628 = vmatprep.subr.mxu0 0.0
    %629 = vmatpush1.msra.mxu0 0.0
    %630 = vmatprep.subr.mxu0 0.0
    %631 = vmatpush1.msra.mxu0 0.0
    %632 = vmatprep.subr.mxu0 0.0
    %633 = vmatpush1.msra.mxu0 0.0
    %634 = vmatprep.subr.mxu0 0.0
    %635 = vmatpush1.msra.mxu0 0.0
    %636 = vmatprep.subr.mxu0 0.0
    %637 = vmatpush1.msra.mxu0 0.0
    %638 = vmatprep.subr.mxu0 0.0
    %639 = vmatpush1.msra.mxu0 0.0
    %640 = vmatprep.subr.mxu0 0.0
    %641 = vmatpush1.msra.mxu0 0.0
    %642 = vmatprep.subr.mxu0 0.0
    %643 = vmatpush1.msra.mxu0 0.0
    %644 = vmatprep.subr.mxu0 0.0
    %645 = vmatpush1.msra.mxu0 0.0
    %646 = vmatprep.subr.mxu0 0.0
    %647 = vmatpush1.msra.mxu0 0.0
    %648 = vmatprep.subr.mxu0 0.0
    %649 = vmatpush1.msra.mxu0 0.0
    %650 = vmatprep.subr.mxu0 0.0
    %651 = vmatpush1.msra.mxu0 0.0
    %652 = vmatprep.subr.mxu0 0.0
    %653 = vmatpush1.msra.mxu0 0.0
    %654 = vmatprep.subr.mxu0 0.0
    %655 = vmatpush1.msra.mxu0 0.0
    %656 = vmatprep.subr.mxu0 0.0
    %657 = vmatpush1.msra.mxu0 0.0
    %658 = vmatprep.subr.mxu0 0.0
    %659 = vmatpush1.msra.mxu0 0.0
    %660 = vmatprep.subr.mxu0 0.0
    %661 = vmatpush1.msra.mxu0 0.0
    %662 = vmatprep.subr.mxu0 0.0
    %663 = vmatpush1.msra.mxu0 0.0
    %664 = vmatprep.subr.mxu0 0.0
    %665 = vmatpush1.msra.mxu0 0.0
    %666 = vmatprep.mubr.f32.mxu0 0.0
    %v667 = vand.u32 %v149, 4294901760
    %v668 = vsub.f32 %v149, %v667
    %669 = vmatmul.mubr.f32.gmra.mrb[0].mxu0 %v668
    %v670 = vpop.f32.mrb[0].mxu0
    %v671 = vadd.f32 %v505, %v670
    %v672 = vpop.f32.mrb[0].mxu0
    %673 = vmatprep.mubr.f32.mxu0 0.0
    %v674 = vand.u32 %v152, 4294901760
    %v675 = vsub.f32 %v152, %v674
    %676 = vmatmul.mubr.f32.gmra.mrb[0].mxu0 %v675
    %v677 = vpop.f32.mrb[0].mxu0
    %v678 = vadd.f32 %v511, %v677
    %v679 = vpop.f32.mrb[0].mxu0
    %680 = vmatprep.mubr.f32.mxu0 0.0
    %v681 = vand.u32 %v155, 4294901760
    %v682 = vsub.f32 %v155, %v681
    %683 = vmatmul.mubr.f32.gmra.mrb[0].mxu0 %v682
    %v684 = vpop.f32.mrb[0].mxu0
    %v685 = vadd.f32 %v517, %v684
    %v686 = vpop.f32.mrb[0].mxu0
    %687 = vmatprep.mubr.f32.mxu0 0.0
    %v688 = vand.u32 %v158, 4294901760
    %v689 = vsub.f32 %v158, %v688
    %690 = vmatmul.mubr.f32.gmra.mrb[0].mxu0 %v689
    %v691 = vpop.f32.mrb[0].mxu0
    %v692 = vadd.f32 %v523, %v691
    %v693 = vpop.f32.mrb[0].mxu0
    %694 = vmatprep.mubr.f32.mxu0 0.0
    %v695 = vand.u32 %v161, 4294901760
    %v696 = vsub.f32 %v161, %v695
    %697 = vmatmul.mubr.f32.gmra.mrb[0].mxu0 %v696
    %v698 = vpop.f32.mrb[0].mxu0
    %v699 = vadd.f32 %v529, %v698
    %v700 = vpop.f32.mrb[0].mxu0
    %701 = vmatprep.mubr.f32.mxu0 0.0
    %v702 = vand.u32 %v164, 4294901760
    %v703 = vsub.f32 %v164, %v702
    %704 = vmatmul.mubr.f32.gmra.mrb[0].mxu0 %v703
    %v705 = vpop.f32.mrb[0].mxu0
    %v706 = vadd.f32 %v535, %v705
    %v707 = vpop.f32.mrb[0].mxu0
    %708 = vmatprep.mubr.f32.mxu0 0.0
    %v709 = vand.u32 %v167, 4294901760
    %v710 = vsub.f32 %v167, %v709
    %711 = vmatmul.mubr.f32.gmra.mrb[0].mxu0 %v710
    %v712 = vpop.f32.mrb[0].mxu0
    %v713 = vadd.f32 %v541, %v712
    %v714 = vpop.f32.mrb[0].mxu0
    %715 = vmatprep.mubr.f32.mxu0 0.0
    %v716 = vand.u32 %v170, 4294901760
    %v717 = vsub.f32 %v170, %v716
    %718 = vmatmul.mubr.f32.gmra.mrb[0].mxu0 %v717
    %v719 = vpop.f32.mrb[0].mxu0
    %v720 = vadd.f32 %v547, %v719
    %v721 = vpop.f32.mrb[0].mxu0
    %722 = vmatprep.mubr.f32.mxu0 0.0
    %v723 = vand.u32 %v173, 4294901760
    %v724 = vsub.f32 %v173, %v723
    %725 = vmatmul.mubr.f32.gmra.mrb[0].mxu0 %v724
    %v726 = vpop.f32.mrb[0].mxu0
    %v727 = vadd.f32 %v553, %v726
    %v728 = vpop.f32.mrb[0].mxu0
    %729 = vmatprep.mubr.f32.mxu0 0.0
    %v730 = vand.u32 %v176, 4294901760
    %v731 = vsub.f32 %v176, %v730
    %732 = vmatmul.mubr.f32.gmra.mrb[0].mxu0 %v731
    %v733 = vpop.f32.mrb[0].mxu0
    %v734 = vadd.f32 %v559, %v733
    %v735 = vpop.f32.mrb[0].mxu0
    %736 = vmatprep.mubr.f32.mxu0 0.0
    %v737 = vand.u32 %v179, 4294901760
    %v738 = vsub.f32 %v179, %v737
    %739 = vmatmul.mubr.f32.gmra.mrb[0].mxu0 %v738
    %v740 = vpop.f32.mrb[0].mxu0
    %v741 = vadd.f32 %v565, %v740
    %v742 = vpop.f32.mrb[0].mxu0
    %743 = vmatprep.mubr.f32.mxu0 0.0
    %v744 = vand.u32 %v182, 4294901760
    %v745 = vsub.f32 %v182, %v744
    %746 = vmatmul.mubr.f32.gmra.mrb[0].mxu0 %v745
    %v747 = vpop.f32.mrb[0].mxu0
    %v748 = vadd.f32 %v571, %v747
    %v749 = vpop.f32.mrb[0].mxu0
    %750 = vmatprep.mubr.f32.mxu0 0.0
    %v751 = vand.u32 %v185, 4294901760
    %v752 = vsub.f32 %v185, %v751
    %753 = vmatmul.mubr.f32.gmra.mrb[0].mxu0 %v752
    %v754 = vpop.f32.mrb[0].mxu0
    %v755 = vadd.f32 %v577, %v754
    %v756 = vpop.f32.mrb[0].mxu0
    %757 = vmatprep.mubr.f32.mxu0 0.0
    %v758 = vand.u32 %v188, 4294901760
    %v759 = vsub.f32 %v188, %v758
    %760 = vmatmul.mubr.f32.gmra.mrb[0].mxu0 %v759
    %v761 = vpop.f32.mrb[0].mxu0
    %v762 = vadd.f32 %v583, %v761
    %v763 = vpop.f32.mrb[0].mxu0
    %764 = vmatprep.mubr.f32.mxu0 0.0
    %v765 = vand.u32 %v191, 4294901760
    %v766 = vsub.f32 %v191, %v765
    %767 = vmatmul.mubr.f32.gmra.mrb[0].mxu0 %v766
    %v768 = vpop.f32.mrb[0].mxu0
    %v769 = vadd.f32 %v589, %v768
    %v770 = vpop.f32.mrb[0].mxu0
    %771 = vmatprep.mubr.f32.mxu0 0.0
    %v772 = vand.u32 %v194, 4294901760
    %v773 = vsub.f32 %v194, %v772
    %774 = vmatmul.mubr.f32.gmra.mrb[0].mxu0 %v773
    %v775 = vpop.f32.mrb[0].mxu0
    %v776 = vadd.f32 %v595, %v775
    %v777 = vpop.f32.mrb[0].mxu0
    %778 = vdwg.mxu0
    %779 = vmatprep.subr.mxu0 0.0
    %v780 = vand.u32 %v33, 4294901760
    %781 = vmatpush1.msra.mxu0 %v780
    %782 = vmatprep.subr.mxu0 0.0
    %v783 = vand.u32 %v198, 4294901760
    %784 = vmatpush1.msra.mxu0 %v783
    %785 = vmatprep.subr.mxu0 0.0
    %786 = vmatpush1.msra.mxu0 0.0
    %787 = vmatprep.subr.mxu0 0.0
    %788 = vmatpush1.msra.mxu0 0.0
    %789 = vmatprep.subr.mxu0 0.0
    %790 = vmatpush1.msra.mxu0 0.0
    %791 = vmatprep.subr.mxu0 0.0
    %792 = vmatpush1.msra.mxu0 0.0
    %793 = vmatprep.subr.mxu0 0.0
    %794 = vmatpush1.msra.mxu0 0.0
    %795 = vmatprep.subr.mxu0 0.0
    %796 = vmatpush1.msra.mxu0 0.0
    %797 = vmatprep.subr.mxu0 0.0
    %798 = vmatpush1.msra.mxu0 0.0
    %799 = vmatprep.subr.mxu0 0.0
    %800 = vmatpush1.msra.mxu0 0.0
    %801 = vmatprep.subr.mxu0 0.0
    %802 = vmatpush1.msra.mxu0 0.0
    %803 = vmatprep.subr.mxu0 0.0
    %804 = vmatpush1.msra.mxu0 0.0
    %805 = vmatprep.subr.mxu0 0.0
    %806 = vmatpush1.msra.mxu0 0.0
    %807 = vmatprep.subr.mxu0 0.0
    %808 = vmatpush1.msra.mxu0 0.0
    %809 = vmatprep.subr.mxu0 0.0
    %810 = vmatpush1.msra.mxu0 0.0
    %811 = vmatprep.subr.mxu0 0.0
    %812 = vmatpush1.msra.mxu0 0.0
    %813 = vmatprep.subr.mxu0 0.0
    %814 = vmatpush1.msra.mxu0 0.0
    %815 = vmatprep.subr.mxu0 0.0
    %816 = vmatpush1.msra.mxu0 0.0
    %817 = vmatprep.subr.mxu0 0.0
    %818 = vmatpush1.msra.mxu0 0.0
    %819 = vmatprep.subr.mxu0 0.0
    %820 = vmatpush1.msra.mxu0 0.0
    %821 = vmatprep.subr.mxu0 0.0
    %822 = vmatpush1.msra.mxu0 0.0
    %823 = vmatprep.subr.mxu0 0.0
    %824 = vmatpush1.msra.mxu0 0.0
    %825 = vmatprep.subr.mxu0 0.0
    %826 = vmatpush1.msra.mxu0 0.0
    %827 = vmatprep.subr.mxu0 0.0
    %828 = vmatpush1.msra.mxu0 0.0
    %829 = vmatprep.subr.mxu0 0.0
    %830 = vmatpush1.msra.mxu0 0.0
    %831 = vmatprep.subr.mxu0 0.0
    %832 = vmatpush1.msra.mxu0 0.0
    %833 = vmatprep.subr.mxu0 0.0
    %834 = vmatpush1.msra.mxu0 0.0
    %835 = vmatprep.subr.mxu0 0.0
    %836 = vmatpush1.msra.mxu0 0.0
    %837 = vmatprep.subr.mxu0 0.0
    %838 = vmatpush1.msra.mxu0 0.0
    %839 = vmatprep.subr.mxu0 0.0
    %840 = vmatpush1.msra.mxu0 0.0
    %841 = vmatprep.subr.mxu0 0.0
    %842 = vmatpush1.msra.mxu0 0.0
    %843 = vmatprep.subr.mxu0 0.0
    %844 = vmatpush1.msra.mxu0 0.0
    %845 = vmatprep.mubr.f32.mxu0 0.0
    %v846 = vand.u32 %v149, 4294901760
    %v847 = vsub.f32 %v149, %v846
    %v848 = vand.u32 %v847, 4294901760
    %849 = vmatmul.mubr.f32.gmra.mrb[0].mxu0 %v848
    %v850 = vpop.f32.mrb[0].mxu0
    %v851 = vadd.f32 %v671, %v850
    %v852 = vpop.f32.mrb[0].mxu0
    %853 = vmatprep.mubr.f32.mxu0 0.0
    %v854 = vand.u32 %v152, 4294901760
    %v855 = vsub.f32 %v152, %v854
    %v856 = vand.u32 %v855, 4294901760
    %857 = vmatmul.mubr.f32.gmra.mrb[0].mxu0 %v856
    %v858 = vpop.f32.mrb[0].mxu0
    %v859 = vadd.f32 %v678, %v858
    %v860 = vpop.f32.mrb[0].mxu0
    %861 = vmatprep.mubr.f32.mxu0 0.0
    %v862 = vand.u32 %v155, 4294901760
    %v863 = vsub.f32 %v155, %v862
    %v864 = vand.u32 %v863, 4294901760
    %865 = vmatmul.mubr.f32.gmra.mrb[0].mxu0 %v864
    %v866 = vpop.f32.mrb[0].mxu0
    %v867 = vadd.f32 %v685, %v866
    %v868 = vpop.f32.mrb[0].mxu0
    %869 = vmatprep.mubr.f32.mxu0 0.0
    %v870 = vand.u32 %v158, 4294901760
    %v871 = vsub.f32 %v158, %v870
    %v872 = vand.u32 %v871, 4294901760
    %873 = vmatmul.mubr.f32.gmra.mrb[0].mxu0 %v872
    %v874 = vpop.f32.mrb[0].mxu0
    %v875 = vadd.f32 %v692, %v874
    %v876 = vpop.f32.mrb[0].mxu0
    %877 = vmatprep.mubr.f32.mxu0 0.0
    %v878 = vand.u32 %v161, 4294901760
    %v879 = vsub.f32 %v161, %v878
    %v880 = vand.u32 %v879, 4294901760
    %881 = vmatmul.mubr.f32.gmra.mrb[0].mxu0 %v880
    %v882 = vpop.f32.mrb[0].mxu0
    %v883 = vadd.f32 %v699, %v882
    %v884 = vpop.f32.mrb[0].mxu0
    %885 = vmatprep.mubr.f32.mxu0 0.0
    %v886 = vand.u32 %v164, 4294901760
    %v887 = vsub.f32 %v164, %v886
    %v888 = vand.u32 %v887, 4294901760
    %889 = vmatmul.mubr.f32.gmra.mrb[0].mxu0 %v888
    %v890 = vpop.f32.mrb[0].mxu0
    %v891 = vadd.f32 %v706, %v890
    %v892 = vpop.f32.mrb[0].mxu0
    %893 = vmatprep.mubr.f32.mxu0 0.0
    %v894 = vand.u32 %v167, 4294901760
    %v895 = vsub.f32 %v167, %v894
    %v896 = vand.u32 %v895, 4294901760
    %897 = vmatmul.mubr.f32.gmra.mrb[0].mxu0 %v896
    %v898 = vpop.f32.mrb[0].mxu0
    %v899 = vadd.f32 %v713, %v898
    %v900 = vpop.f32.mrb[0].mxu0
    %901 = vmatprep.mubr.f32.mxu0 0.0
    %v902 = vand.u32 %v170, 4294901760
    %v903 = vsub.f32 %v170, %v902
    %v904 = vand.u32 %v903, 4294901760
    %905 = vmatmul.mubr.f32.gmra.mrb[0].mxu0 %v904
    %v906 = vpop.f32.mrb[0].mxu0
    %v907 = vadd.f32 %v720, %v906
    %v908 = vpop.f32.mrb[0].mxu0
    %909 = vmatprep.mubr.f32.mxu0 0.0
    %v910 = vand.u32 %v173, 4294901760
    %v911 = vsub.f32 %v173, %v910
    %v912 = vand.u32 %v911, 4294901760
    %913 = vmatmul.mubr.f32.gmra.mrb[0].mxu0 %v912
    %v914 = vpop.f32.mrb[0].mxu0
    %v915 = vadd.f32 %v727, %v914
    %v916 = vpop.f32.mrb[0].mxu0
    %917 = vmatprep.mubr.f32.mxu0 0.0
    %v918 = vand.u32 %v176, 4294901760
    %v919 = vsub.f32 %v176, %v918
    %v920 = vand.u32 %v919, 4294901760
    %921 = vmatmul.mubr.f32.gmra.mrb[0].mxu0 %v920
    %v922 = vpop.f32.mrb[0].mxu0
    %v923 = vadd.f32 %v734, %v922
    %v924 = vpop.f32.mrb[0].mxu0
    %925 = vmatprep.mubr.f32.mxu0 0.0
    %v926 = vand.u32 %v179, 4294901760
    %v927 = vsub.f32 %v179, %v926
    %v928 = vand.u32 %v927, 4294901760
    %929 = vmatmul.mubr.f32.gmra.mrb[0].mxu0 %v928
    %v930 = vpop.f32.mrb[0].mxu0
    %v931 = vadd.f32 %v741, %v930
    %v932 = vpop.f32.mrb[0].mxu0
    %933 = vmatprep.mubr.f32.mxu0 0.0
    %v934 = vand.u32 %v182, 4294901760
    %v935 = vsub.f32 %v182, %v934
    %v936 = vand.u32 %v935, 4294901760
    %937 = vmatmul.mubr.f32.gmra.mrb[0].mxu0 %v936
    %v938 = vpop.f32.mrb[0].mxu0
    %v939 = vadd.f32 %v748, %v938
    %v940 = vpop.f32.mrb[0].mxu0
    %941 = vmatprep.mubr.f32.mxu0 0.0
    %v942 = vand.u32 %v185, 4294901760
    %v943 = vsub.f32 %v185, %v942
    %v944 = vand.u32 %v943, 4294901760
    %945 = vmatmul.mubr.f32.gmra.mrb[0].mxu0 %v944
    %v946 = vpop.f32.mrb[0].mxu0
    %v947 = vadd.f32 %v755, %v946
    %v948 = vpop.f32.mrb[0].mxu0
    %949 = vmatprep.mubr.f32.mxu0 0.0
    %v950 = vand.u32 %v188, 4294901760
    %v951 = vsub.f32 %v188, %v950
    %v952 = vand.u32 %v951, 4294901760
    %953 = vmatmul.mubr.f32.gmra.mrb[0].mxu0 %v952
    %v954 = vpop.f32.mrb[0].mxu0
    %v955 = vadd.f32 %v762, %v954
    %v956 = vpop.f32.mrb[0].mxu0
    %957 = vmatprep.mubr.f32.mxu0 0.0
    %v958 = vand.u32 %v191, 4294901760
    %v959 = vsub.f32 %v191, %v958
    %v960 = vand.u32 %v959, 4294901760
    %961 = vmatmul.mubr.f32.gmra.mrb[0].mxu0 %v960
    %v962 = vpop.f32.mrb[0].mxu0
    %v963 = vadd.f32 %v769, %v962
    %v964 = vpop.f32.mrb[0].mxu0
    %965 = vmatprep.mubr.f32.mxu0 0.0
    %v966 = vand.u32 %v194, 4294901760
    %v967 = vsub.f32 %v194, %v966
    %v968 = vand.u32 %v967, 4294901760
    %969 = vmatmul.mubr.f32.gmra.mrb[0].mxu0 %v968
    %v970 = vpop.f32.mrb[0].mxu0
    %v971 = vadd.f32 %v776, %v970
    %v972 = vpop.f32.mrb[0].mxu0
    %973 = vdwg.mxu0
    %974 = vmatprep.subr.mxu0 0.0
    %v975 = vand.u32 %v33, 4294901760
    %v976 = vsub.f32 %v33, %v975
    %v977 = vand.u32 %v976, 4294901760
    %978 = vmatpush1.msra.mxu0 %v977
    %979 = vmatprep.subr.mxu0 0.0
    %v980 = vand.u32 %v198, 4294901760
    %v981 = vsub.f32 %v198, %v980
    %v982 = vand.u32 %v981, 4294901760
    %983 = vmatpush1.msra.mxu0 %v982
    %984 = vmatprep.subr.mxu0 0.0
    %985 = vmatpush1.msra.mxu0 0.0
    %986 = vmatprep.subr.mxu0 0.0
    %987 = vmatpush1.msra.mxu0 0.0
    %988 = vmatprep.subr.mxu0 0.0
    %989 = vmatpush1.msra.mxu0 0.0
    %990 = vmatprep.subr.mxu0 0.0
    %991 = vmatpush1.msra.mxu0 0.0
    %992 = vmatprep.subr.mxu0 0.0
    %993 = vmatpush1.msra.mxu0 0.0
    %994 = vmatprep.subr.mxu0 0.0
    %995 = vmatpush1.msra.mxu0 0.0
    %996 = vmatprep.subr.mxu0 0.0
    %997 = vmatpush1.msra.mxu0 0.0
    %998 = vmatprep.subr.mxu0 0.0
    %999 = vmatpush1.msra.mxu0 0.0
    %1000 = vmatprep.subr.mxu0 0.0
    %1001 = vmatpush1.msra.mxu0 0.0
    %1002 = vmatprep.subr.mxu0 0.0
    %1003 = vmatpush1.msra.mxu0 0.0
    %1004 = vmatprep.subr.mxu0 0.0
    %1005 = vmatpush1.msra.mxu0 0.0
    %1006 = vmatprep.subr.mxu0 0.0
    %1007 = vmatpush1.msra.mxu0 0.0
    %1008 = vmatprep.subr.mxu0 0.0
    %1009 = vmatpush1.msra.mxu0 0.0
    %1010 = vmatprep.subr.mxu0 0.0
    %1011 = vmatpush1.msra.mxu0 0.0
    %1012 = vmatprep.subr.mxu0 0.0
    %1013 = vmatpush1.msra.mxu0 0.0
    %1014 = vmatprep.subr.mxu0 0.0
    %1015 = vmatpush1.msra.mxu0 0.0
    %1016 = vmatprep.subr.mxu0 0.0
    %1017 = vmatpush1.msra.mxu0 0.0
    %1018 = vmatprep.subr.mxu0 0.0
    %1019 = vmatpush1.msra.mxu0 0.0
    %1020 = vmatprep.subr.mxu0 0.0
    %1021 = vmatpush1.msra.mxu0 0.0
    %1022 = vmatprep.subr.mxu0 0.0
    %1023 = vmatpush1.msra.mxu0 0.0
    %1024 = vmatprep.subr.mxu0 0.0
    %1025 = vmatpush1.msra.mxu0 0.0
    %1026 = vmatprep.subr.mxu0 0.0
    %1027 = vmatpush1.msra.mxu0 0.0
    %1028 = vmatprep.subr.mxu0 0.0
    %1029 = vmatpush1.msra.mxu0 0.0
    %1030 = vmatprep.subr.mxu0 0.0
    %1031 = vmatpush1.msra.mxu0 0.0
    %1032 = vmatprep.subr.mxu0 0.0
    %1033 = vmatpush1.msra.mxu0 0.0
    %1034 = vmatprep.subr.mxu0 0.0
    %1035 = vmatpush1.msra.mxu0 0.0
    %1036 = vmatprep.subr.mxu0 0.0
    %1037 = vmatpush1.msra.mxu0 0.0
    %1038 = vmatprep.subr.mxu0 0.0
    %1039 = vmatpush1.msra.mxu0 0.0
    %1040 = vmatprep.subr.mxu0 0.0
    %1041 = vmatpush1.msra.mxu0 0.0
    %1042 = vmatprep.subr.mxu0 0.0
    %1043 = vmatpush1.msra.mxu0 0.0
    %1044 = vmatprep.mubr.f32.mxu0 0.0
    %v1045 = vand.u32 %v149, 4294901760
    %1046 = vmatmul.mubr.f32.gmra.mrb[0].mxu0 %v1045
    %v1047 = vpop.f32.mrb[0].mxu0
    %v1048 = vadd.f32 %v851, %v1047
    %v1049 = vpop.f32.mrb[0].mxu0
    %1050 = vmatprep.mubr.f32.mxu0 0.0
    %v1051 = vand.u32 %v152, 4294901760
    %1052 = vmatmul.mubr.f32.gmra.mrb[0].mxu0 %v1051
    %v1053 = vpop.f32.mrb[0].mxu0
    %v1054 = vadd.f32 %v859, %v1053
    %v1055 = vpop.f32.mrb[0].mxu0
    %1056 = vmatprep.mubr.f32.mxu0 0.0
    %v1057 = vand.u32 %v155, 4294901760
    %1058 = vmatmul.mubr.f32.gmra.mrb[0].mxu0 %v1057
    %v1059 = vpop.f32.mrb[0].mxu0
    %v1060 = vadd.f32 %v867, %v1059
    %v1061 = vpop.f32.mrb[0].mxu0
    %1062 = vmatprep.mubr.f32.mxu0 0.0
    %v1063 = vand.u32 %v158, 4294901760
    %1064 = vmatmul.mubr.f32.gmra.mrb[0].mxu0 %v1063
    %v1065 = vpop.f32.mrb[0].mxu0
    %v1066 = vadd.f32 %v875, %v1065
    %v1067 = vpop.f32.mrb[0].mxu0
    %1068 = vmatprep.mubr.f32.mxu0 0.0
    %v1069 = vand.u32 %v161, 4294901760
    %1070 = vmatmul.mubr.f32.gmra.mrb[0].mxu0 %v1069
    %v1071 = vpop.f32.mrb[0].mxu0
    %v1072 = vadd.f32 %v883, %v1071
    %v1073 = vpop.f32.mrb[0].mxu0
    %1074 = vmatprep.mubr.f32.mxu0 0.0
    %v1075 = vand.u32 %v164, 4294901760
    %1076 = vmatmul.mubr.f32.gmra.mrb[0].mxu0 %v1075
    %v1077 = vpop.f32.mrb[0].mxu0
    %v1078 = vadd.f32 %v891, %v1077
    %v1079 = vpop.f32.mrb[0].mxu0
    %1080 = vmatprep.mubr.f32.mxu0 0.0
    %v1081 = vand.u32 %v167, 4294901760
    %1082 = vmatmul.mubr.f32.gmra.mrb[0].mxu0 %v1081
    %v1083 = vpop.f32.mrb[0].mxu0
    %v1084 = vadd.f32 %v899, %v1083
    %v1085 = vpop.f32.mrb[0].mxu0
    %1086 = vmatprep.mubr.f32.mxu0 0.0
    %v1087 = vand.u32 %v170, 4294901760
    %1088 = vmatmul.mubr.f32.gmra.mrb[0].mxu0 %v1087
    %v1089 = vpop.f32.mrb[0].mxu0
    %v1090 = vadd.f32 %v907, %v1089
    %v1091 = vpop.f32.mrb[0].mxu0
    %1092 = vmatprep.mubr.f32.mxu0 0.0
    %v1093 = vand.u32 %v173, 4294901760
    %1094 = vmatmul.mubr.f32.gmra.mrb[0].mxu0 %v1093
    %v1095 = vpop.f32.mrb[0].mxu0
    %v1096 = vadd.f32 %v915, %v1095
    %v1097 = vpop.f32.mrb[0].mxu0
    %1098 = vmatprep.mubr.f32.mxu0 0.0
    %v1099 = vand.u32 %v176, 4294901760
    %1100 = vmatmul.mubr.f32.gmra.mrb[0].mxu0 %v1099
    %v1101 = vpop.f32.mrb[0].mxu0
    %v1102 = vadd.f32 %v923, %v1101
    %v1103 = vpop.f32.mrb[0].mxu0
    %1104 = vmatprep.mubr.f32.mxu0 0.0
    %v1105 = vand.u32 %v179, 4294901760
    %1106 = vmatmul.mubr.f32.gmra.mrb[0].mxu0 %v1105
    %v1107 = vpop.f32.mrb[0].mxu0
    %v1108 = vadd.f32 %v931, %v1107
    %v1109 = vpop.f32.mrb[0].mxu0
    %1110 = vmatprep.mubr.f32.mxu0 0.0
    %v1111 = vand.u32 %v182, 4294901760
    %1112 = vmatmul.mubr.f32.gmra.mrb[0].mxu0 %v1111
    %v1113 = vpop.f32.mrb[0].mxu0
    %v1114 = vadd.f32 %v939, %v1113
    %v1115 = vpop.f32.mrb[0].mxu0
    %1116 = vmatprep.mubr.f32.mxu0 0.0
    %v1117 = vand.u32 %v185, 4294901760
    %1118 = vmatmul.mubr.f32.gmra.mrb[0].mxu0 %v1117
    %v1119 = vpop.f32.mrb[0].mxu0
    %v1120 = vadd.f32 %v947, %v1119
    %v1121 = vpop.f32.mrb[0].mxu0
    %1122 = vmatprep.mubr.f32.mxu0 0.0
    %v1123 = vand.u32 %v188, 4294901760
    %1124 = vmatmul.mubr.f32.gmra.mrb[0].mxu0 %v1123
    %v1125 = vpop.f32.mrb[0].mxu0
    %v1126 = vadd.f32 %v955, %v1125
    %v1127 = vpop.f32.mrb[0].mxu0
    %1128 = vmatprep.mubr.f32.mxu0 0.0
    %v1129 = vand.u32 %v191, 4294901760
    %1130 = vmatmul.mubr.f32.gmra.mrb[0].mxu0 %v1129
    %v1131 = vpop.f32.mrb[0].mxu0
    %v1132 = vadd.f32 %v963, %v1131
    %v1133 = vpop.f32.mrb[0].mxu0
    %1134 = vmatprep.mubr.f32.mxu0 0.0
    %v1135 = vand.u32 %v194, 4294901760
    %1136 = vmatmul.mubr.f32.gmra.mrb[0].mxu0 %v1135
    %v1137 = vpop.f32.mrb[0].mxu0
    %v1138 = vadd.f32 %v971, %v1137
    %v1139 = vpop.f32.mrb[0].mxu0
    %1140 = vdwg.mxu0
    %1141 = vmatprep.subr.mxu0 0.0
    %v1142 = vand.u32 %v33, 4294901760
    %1143 = vmatpush1.msra.mxu0 %v1142
    %1144 = vmatprep.subr.mxu0 0.0
    %v1145 = vand.u32 %v198, 4294901760
    %1146 = vmatpush1.msra.mxu0 %v1145
    %1147 = vmatprep.subr.mxu0 0.0
    %1148 = vmatpush1.msra.mxu0 0.0
    %1149 = vmatprep.subr.mxu0 0.0
    %1150 = vmatpush1.msra.mxu0 0.0
    %1151 = vmatprep.subr.mxu0 0.0
    %1152 = vmatpush1.msra.mxu0 0.0
    %1153 = vmatprep.subr.mxu0 0.0
    %1154 = vmatpush1.msra.mxu0 0.0
    %1155 = vmatprep.subr.mxu0 0.0
    %1156 = vmatpush1.msra.mxu0 0.0
    %1157 = vmatprep.subr.mxu0 0.0
    %1158 = vmatpush1.msra.mxu0 0.0
    %1159 = vmatprep.subr.mxu0 0.0
    %1160 = vmatpush1.msra.mxu0 0.0
    %1161 = vmatprep.subr.mxu0 0.0
    %1162 = vmatpush1.msra.mxu0 0.0
    %1163 = vmatprep.subr.mxu0 0.0
    %1164 = vmatpush1.msra.mxu0 0.0
    %1165 = vmatprep.subr.mxu0 0.0
    %1166 = vmatpush1.msra.mxu0 0.0
    %1167 = vmatprep.subr.mxu0 0.0
    %1168 = vmatpush1.msra.mxu0 0.0
    %1169 = vmatprep.subr.mxu0 0.0
    %1170 = vmatpush1.msra.mxu0 0.0
    %1171 = vmatprep.subr.mxu0 0.0
    %1172 = vmatpush1.msra.mxu0 0.0
    %1173 = vmatprep.subr.mxu0 0.0
    %1174 = vmatpush1.msra.mxu0 0.0
    %1175 = vmatprep.subr.mxu0 0.0
    %1176 = vmatpush1.msra.mxu0 0.0
    %1177 = vmatprep.subr.mxu0 0.0
    %1178 = vmatpush1.msra.mxu0 0.0
    %1179 = vmatprep.subr.mxu0 0.0
    %1180 = vmatpush1.msra.mxu0 0.0
    %1181 = vmatprep.subr.mxu0 0.0
    %1182 = vmatpush1.msra.mxu0 0.0
    %1183 = vmatprep.subr.mxu0 0.0
    %1184 = vmatpush1.msra.mxu0 0.0
    %1185 = vmatprep.subr.mxu0 0.0
    %1186 = vmatpush1.msra.mxu0 0.0
    %1187 = vmatprep.subr.mxu0 0.0
    %1188 = vmatpush1.msra.mxu0 0.0
    %1189 = vmatprep.subr.mxu0 0.0
    %1190 = vmatpush1.msra.mxu0 0.0
    %1191 = vmatprep.subr.mxu0 0.0
    %1192 = vmatpush1.msra.mxu0 0.0
    %1193 = vmatprep.subr.mxu0 0.0
    %1194 = vmatpush1.msra.mxu0 0.0
    %1195 = vmatprep.subr.mxu0 0.0
    %1196 = vmatpush1.msra.mxu0 0.0
    %1197 = vmatprep.subr.mxu0 0.0
    %1198 = vmatpush1.msra.mxu0 0.0
    %1199 = vmatprep.subr.mxu0 0.0
    %1200 = vmatpush1.msra.mxu0 0.0
    %1201 = vmatprep.subr.mxu0 0.0
    %1202 = vmatpush1.msra.mxu0 0.0
    %1203 = vmatprep.subr.mxu0 0.0
    %1204 = vmatpush1.msra.mxu0 0.0
    %1205 = vmatprep.subr.mxu0 0.0
    %1206 = vmatpush1.msra.mxu0 0.0
    %1207 = vmatprep.mubr.f32.mxu0 0.0
    %v1208 = vand.u32 %v149, 4294901760
    %1209 = vmatmul.mubr.f32.gmra.mrb[0].mxu0 %v1208
    %v1210 = vpop.f32.mrb[0].mxu0
    %v1211 = vadd.f32 %v1048, %v1210
    %v1212 = vpop.f32.mrb[0].mxu0
    %1213 = vmatprep.mubr.f32.mxu0 0.0
    %v1214 = vand.u32 %v152, 4294901760
    %1215 = vmatmul.mubr.f32.gmra.mrb[0].mxu0 %v1214
    %v1216 = vpop.f32.mrb[0].mxu0
    %v1217 = vadd.f32 %v1054, %v1216
    %v1218 = vpop.f32.mrb[0].mxu0
    %1219 = vmatprep.mubr.f32.mxu0 0.0
    %v1220 = vand.u32 %v155, 4294901760
    %1221 = vmatmul.mubr.f32.gmra.mrb[0].mxu0 %v1220
    %v1222 = vpop.f32.mrb[0].mxu0
    %v1223 = vadd.f32 %v1060, %v1222
    %v1224 = vpop.f32.mrb[0].mxu0
    %1225 = vmatprep.mubr.f32.mxu0 0.0
    %v1226 = vand.u32 %v158, 4294901760
    %1227 = vmatmul.mubr.f32.gmra.mrb[0].mxu0 %v1226
    %v1228 = vpop.f32.mrb[0].mxu0
    %v1229 = vadd.f32 %v1066, %v1228
    %v1230 = vpop.f32.mrb[0].mxu0
    %1231 = vmatprep.mubr.f32.mxu0 0.0
    %v1232 = vand.u32 %v161, 4294901760
    %1233 = vmatmul.mubr.f32.gmra.mrb[0].mxu0 %v1232
    %v1234 = vpop.f32.mrb[0].mxu0
    %v1235 = vadd.f32 %v1072, %v1234
    %v1236 = vpop.f32.mrb[0].mxu0
    %1237 = vmatprep.mubr.f32.mxu0 0.0
    %v1238 = vand.u32 %v164, 4294901760
    %1239 = vmatmul.mubr.f32.gmra.mrb[0].mxu0 %v1238
    %v1240 = vpop.f32.mrb[0].mxu0
    %v1241 = vadd.f32 %v1078, %v1240
    %v1242 = vpop.f32.mrb[0].mxu0
    %1243 = vmatprep.mubr.f32.mxu0 0.0
    %v1244 = vand.u32 %v167, 4294901760
    %1245 = vmatmul.mubr.f32.gmra.mrb[0].mxu0 %v1244
    %v1246 = vpop.f32.mrb[0].mxu0
    %v1247 = vadd.f32 %v1084, %v1246
    %v1248 = vpop.f32.mrb[0].mxu0
    %1249 = vmatprep.mubr.f32.mxu0 0.0
    %v1250 = vand.u32 %v170, 4294901760
    %1251 = vmatmul.mubr.f32.gmra.mrb[0].mxu0 %v1250
    %v1252 = vpop.f32.mrb[0].mxu0
    %v1253 = vadd.f32 %v1090, %v1252
    %v1254 = vpop.f32.mrb[0].mxu0
    %1255 = vmatprep.mubr.f32.mxu0 0.0
    %v1256 = vand.u32 %v173, 4294901760
    %1257 = vmatmul.mubr.f32.gmra.mrb[0].mxu0 %v1256
    %v1258 = vpop.f32.mrb[0].mxu0
    %v1259 = vadd.f32 %v1096, %v1258
    %v1260 = vpop.f32.mrb[0].mxu0
    %1261 = vmatprep.mubr.f32.mxu0 0.0
    %v1262 = vand.u32 %v176, 4294901760
    %1263 = vmatmul.mubr.f32.gmra.mrb[0].mxu0 %v1262
    %v1264 = vpop.f32.mrb[0].mxu0
    %v1265 = vadd.f32 %v1102, %v1264
    %v1266 = vpop.f32.mrb[0].mxu0
    %1267 = vmatprep.mubr.f32.mxu0 0.0
    %v1268 = vand.u32 %v179, 4294901760
    %1269 = vmatmul.mubr.f32.gmra.mrb[0].mxu0 %v1268
    %v1270 = vpop.f32.mrb[0].mxu0
    %v1271 = vadd.f32 %v1108, %v1270
    %v1272 = vpop.f32.mrb[0].mxu0
    %1273 = vmatprep.mubr.f32.mxu0 0.0
    %v1274 = vand.u32 %v182, 4294901760
    %1275 = vmatmul.mubr.f32.gmra.mrb[0].mxu0 %v1274
    %v1276 = vpop.f32.mrb[0].mxu0
    %v1277 = vadd.f32 %v1114, %v1276
    %v1278 = vpop.f32.mrb[0].mxu0
    %1279 = vmatprep.mubr.f32.mxu0 0.0
    %v1280 = vand.u32 %v185, 4294901760
    %1281 = vmatmul.mubr.f32.gmra.mrb[0].mxu0 %v1280
    %v1282 = vpop.f32.mrb[0].mxu0
    %v1283 = vadd.f32 %v1120, %v1282
    %v1284 = vpop.f32.mrb[0].mxu0
    %1285 = vmatprep.mubr.f32.mxu0 0.0
    %v1286 = vand.u32 %v188, 4294901760
    %1287 = vmatmul.mubr.f32.gmra.mrb[0].mxu0 %v1286
    %v1288 = vpop.f32.mrb[0].mxu0
    %v1289 = vadd.f32 %v1126, %v1288
    %v1290 = vpop.f32.mrb[0].mxu0
    %1291 = vmatprep.mubr.f32.mxu0 0.0
    %v1292 = vand.u32 %v191, 4294901760
    %1293 = vmatmul.mubr.f32.gmra.mrb[0].mxu0 %v1292
    %v1294 = vpop.f32.mrb[0].mxu0
    %v1295 = vadd.f32 %v1132, %v1294
    %v1296 = vpop.f32.mrb[0].mxu0
    %1297 = vmatprep.mubr.f32.mxu0 0.0
    %v1298 = vand.u32 %v194, 4294901760
    %1299 = vmatmul.mubr.f32.gmra.mrb[0].mxu0 %v1298
    %v1300 = vpop.f32.mrb[0].mxu0
    %v1301 = vadd.f32 %v1138, %v1300
    %v1302 = vpop.f32.mrb[0].mxu0
    %1303 = vdwg.mxu0
    %v1304 = vtanh.pop %v1211
    %v1305 = vtanh.pop %v1217
    %v1306 = vtanh.pop %v1223
    %v1307 = vtanh.pop %v1229
    %v1308 = vtanh.pop %v1235
    %v1309 = vtanh.pop %v1241
    %v1310 = vtanh.pop %v1247
    %v1311 = vtanh.pop %v1253
    %v1312 = vtanh.pop %v1259
    %v1313 = vtanh.pop %v1265
    %v1314 = vtanh.pop %v1271
    %v1315 = vtanh.pop %v1277
    %v1316 = vtanh.pop %v1283
    %v1317 = vtanh.pop %v1289
    %v1318 = vtanh.pop %v1295
    %v1319 = vtanh.pop %v1301
    %v1320 = vld [vmem:[%s3] sm:$0xff]
    %v1321 = vld [vmem:[%s3 + $0x8] sm:$0xff]
    %v1322 = vld [vmem:[%s3 + $0x10] sm:$0xff]
    %v1323 = vld [vmem:[%s3 + $0x18] sm:$0xff]
    %v1324 = vld [vmem:[%s3 + $0x20] sm:$0xff]
    %v1325 = vld [vmem:[%s3 + $0x28] sm:$0xff]
    %v1326 = vld [vmem:[%s3 + $0x30] sm:$0xff]
    %v1327 = vld [vmem:[%s3 + $0x38] sm:$0xff]
    %v1328 = vld [vmem:[%s3 + $0x40] sm:$0xff]
    %v1329 = vld [vmem:[%s3 + $0x48] sm:$0xff]
    %v1330 = vld [vmem:[%s3 + $0x50] sm:$0xff]
    %v1331 = vld [vmem:[%s3 + $0x58] sm:$0xff]
    %v1332 = vld [vmem:[%s3 + $0x60] sm:$0xff]
    %v1333 = vld [vmem:[%s3 + $0x68] sm:$0xff]
    %v1334 = vld [vmem:[%s3 + $0x70] sm:$0xff]
    %v1335 = vld [vmem:[%s3 + $0x78] sm:$0xff]
    %v1336 = vld [vmem:[%s4] sm:$0xff]
    %v1337 = vld [vmem:[%s4 + $0x8] sm:$0xff]
    %v1338 = vld [vmem:[%s4 + $0x10] sm:$0xff]
    %v1339 = vld [vmem:[%s4 + $0x18] sm:$0xff]
    %v1340 = vld [vmem:[%s4 + $0x20] sm:$0xff]
    %v1341 = vld [vmem:[%s4 + $0x28] sm:$0xff]
    %v1342 = vld [vmem:[%s4 + $0x30] sm:$0xff]
    %v1343 = vld [vmem:[%s4 + $0x38] sm:$0xff]
    %v1344 = vld [vmem:[%s4 + $0x40] sm:$0xff]
    %v1345 = vld [vmem:[%s4 + $0x48] sm:$0xff]
    %v1346 = vld [vmem:[%s4 + $0x50] sm:$0xff]
    %v1347 = vld [vmem:[%s4 + $0x58] sm:$0xff]
    %v1348 = vld [vmem:[%s4 + $0x60] sm:$0xff]
    %v1349 = vld [vmem:[%s4 + $0x68] sm:$0xff]
    %v1350 = vld [vmem:[%s4 + $0x70] sm:$0xff]
    %v1351 = vld [vmem:[%s4 + $0x78] sm:$0xff]
    %1353 = vset.pattern.permute.xlu0 0
    %1354 = vperm.xlu0 %1353, %v1336
    %v1355 = vpop.permute.xlu0 %1354
    %1358 = vset.pattern.permute.xlu0 0
    %1359 = vperm.xlu0 %1358, %v1337
    %v1360 = vpop.permute.xlu0 %1359
    %1363 = vset.pattern.permute.xlu0 0
    %1364 = vperm.xlu0 %1363, %v1338
    %v1365 = vpop.permute.xlu0 %1364
    %1368 = vset.pattern.permute.xlu0 0
    %1369 = vperm.xlu0 %1368, %v1339
    %v1370 = vpop.permute.xlu0 %1369
    %1373 = vset.pattern.permute.xlu0 0
    %1374 = vperm.xlu0 %1373, %v1340
    %v1375 = vpop.permute.xlu0 %1374
    %1378 = vset.pattern.permute.xlu0 0
    %1379 = vperm.xlu0 %1378, %v1341
    %v1380 = vpop.permute.xlu0 %1379
    %1383 = vset.pattern.permute.xlu0 0
    %1384 = vperm.xlu0 %1383, %v1342
    %v1385 = vpop.permute.xlu0 %1384
    %1388 = vset.pattern.permute.xlu0 0
    %1389 = vperm.xlu0 %1388, %v1343
    %v1390 = vpop.permute.xlu0 %1389
    %1393 = vset.pattern.permute.xlu0 0
    %1394 = vperm.xlu0 %1393, %v1344
    %v1395 = vpop.permute.xlu0 %1394
    %1398 = vset.pattern.permute.xlu0 0
    %1399 = vperm.xlu0 %1398, %v1345
    %v1400 = vpop.permute.xlu0 %1399
    %1403 = vset.pattern.permute.xlu0 0
    %1404 = vperm.xlu0 %1403, %v1346
    %v1405 = vpop.permute.xlu0 %1404
    %1408 = vset.pattern.permute.xlu0 0
    %1409 = vperm.xlu0 %1408, %v1347
    %v1410 = vpop.permute.xlu0 %1409
    %1413 = vset.pattern.permute.xlu0 0
    %1414 = vperm.xlu0 %1413, %v1348
    %v1415 = vpop.permute.xlu0 %1414
    %1418 = vset.pattern.permute.xlu0 0
    %1419 = vperm.xlu0 %1418, %v1349
    %v1420 = vpop.permute.xlu0 %1419
    %1423 = vset.pattern.permute.xlu0 0
    %1424 = vperm.xlu0 %1423, %v1350
    %v1425 = vpop.permute.xlu0 %1424
    %1428 = vset.pattern.permute.xlu0 0
    %1429 = vperm.xlu0 %1428, %v1351
    %v1430 = vpop.permute.xlu0 %1429
    %1432 = vmatprep.subr.mxu0 0.0
    %v1433 = vand.u32 %v1304, 4294901760
    %1434 = vmatpush1.msra.mxu0 %v1433
    %1435 = vmatprep.subr.mxu0 0.0
    %v1436 = vand.u32 %v1305, 4294901760
    %1437 = vmatpush1.msra.mxu0 %v1436
    %1438 = vmatprep.subr.mxu0 0.0
    %v1439 = vand.u32 %v1306, 4294901760
    %1440 = vmatpush1.msra.mxu0 %v1439
    %1441 = vmatprep.subr.mxu0 0.0
    %v1442 = vand.u32 %v1307, 4294901760
    %1443 = vmatpush1.msra.mxu0 %v1442
    %1444 = vmatprep.subr.mxu0 0.0
    %v1445 = vand.u32 %v1308, 4294901760
    %1446 = vmatpush1.msra.mxu0 %v1445
    %1447 = vmatprep.subr.mxu0 0.0
    %v1448 = vand.u32 %v1309, 4294901760
    %1449 = vmatpush1.msra.mxu0 %v1448
    %1450 = vmatprep.subr.mxu0 0.0
    %v1451 = vand.u32 %v1310, 4294901760
    %1452 = vmatpush1.msra.mxu0 %v1451
    %1453 = vmatprep.subr.mxu0 0.0
    %v1454 = vand.u32 %v1311, 4294901760
    %1455 = vmatpush1.msra.mxu0 %v1454
    %1456 = vmatprep.subr.mxu0 0.0
    %v1457 = vand.u32 %v1312, 4294901760
    %1458 = vmatpush1.msra.mxu0 %v1457
    %1459 = vmatprep.subr.mxu0 0.0
    %v1460 = vand.u32 %v1313, 4294901760
    %1461 = vmatpush1.msra.mxu0 %v1460
    %1462 = vmatprep.subr.mxu0 0.0
    %v1463 = vand.u32 %v1314, 4294901760
    %1464 = vmatpush1.msra.mxu0 %v1463
    %1465 = vmatprep.subr.mxu0 0.0
    %v1466 = vand.u32 %v1315, 4294901760
    %1467 = vmatpush1.msra.mxu0 %v1466
    %1468 = vmatprep.subr.mxu0 0.0
    %v1469 = vand.u32 %v1316, 4294901760
    %1470 = vmatpush1.msra.mxu0 %v1469
    %1471 = vmatprep.subr.mxu0 0.0
    %v1472 = vand.u32 %v1317, 4294901760
    %1473 = vmatpush1.msra.mxu0 %v1472
    %1474 = vmatprep.subr.mxu0 0.0
    %v1475 = vand.u32 %v1318, 4294901760
    %1476 = vmatpush1.msra.mxu0 %v1475
    %1477 = vmatprep.subr.mxu0 0.0
    %v1478 = vand.u32 %v1319, 4294901760
    %1479 = vmatpush1.msra.mxu0 %v1478
    %1480 = vmatprep.subr.mxu0 0.0
    %1481 = vmatpush1.msra.mxu0 0.0
    %1482 = vmatprep.subr.mxu0 0.0
    %1483 = vmatpush1.msra.mxu0 0.0
    %1484 = vmatprep.subr.mxu0 0.0
    %1485 = vmatpush1.msra.mxu0 0.0
    %1486 = vmatprep.subr.mxu0 0.0
    %1487 = vmatpush1.msra.mxu0 0.0
    %1488 = vmatprep.subr.mxu0 0.0
    %1489 = vmatpush1.msra.mxu0 0.0
    %1490 = vmatprep.subr.mxu0 0.0
    %1491 = vmatpush1.msra.mxu0 0.0
    %1492 = vmatprep.subr.mxu0 0.0
    %1493 = vmatpush1.msra.mxu0 0.0
    %1494 = vmatprep.subr.mxu0 0.0
    %1495 = vmatpush1.msra.mxu0 0.0
    %1496 = vmatprep.subr.mxu0 0.0
    %1497 = vmatpush1.msra.mxu0 0.0
    %1498 = vmatprep.subr.mxu0 0.0
    %1499 = vmatpush1.msra.mxu0 0.0
    %1500 = vmatprep.subr.mxu0 0.0
    %1501 = vmatpush1.msra.mxu0 0.0
    %1502 = vmatprep.subr.mxu0 0.0
    %1503 = vmatpush1.msra.mxu0 0.0
    %1504 = vmatprep.subr.mxu0 0.0
    %1505 = vmatpush1.msra.mxu0 0.0
    %1506 = vmatprep.subr.mxu0 0.0
    %1507 = vmatpush1.msra.mxu0 0.0
    %1508 = vmatprep.subr.mxu0 0.0
    %1509 = vmatpush1.msra.mxu0 0.0
    %1510 = vmatprep.subr.mxu0 0.0
    %1511 = vmatpush1.msra.mxu0 0.0
    %1512 = vmatprep.mubr.f32.mxu0 0.0
    %v1513 = vand.u32 %v1320, 4294901760
    %v1514 = vsub.f32 %v1320, %v1513
    %v1515 = vand.u32 %v1514, 4294901760
    %v1516 = vsub.f32 %v1514, %v1515
    %v1517 = vand.u32 %v1516, 4294901760
    %1518 = vmatmul.mubr.f32.gmra.mrb[0].mxu0 %v1517
    %v1519 = vpop.f32.mrb[0].mxu0
    %v1520 = vadd.f32 %v1355, %v1519
    %v1521 = vpop.f32.mrb[0].mxu0
    %1522 = vmatprep.mubr.f32.mxu0 0.0
    %v1523 = vand.u32 %v1321, 4294901760
    %v1524 = vsub.f32 %v1321, %v1523
    %v1525 = vand.u32 %v1524, 4294901760
    %v1526 = vsub.f32 %v1524, %v1525
    %v1527 = vand.u32 %v1526, 4294901760
    %1528 = vmatmul.mubr.f32.gmra.mrb[0].mxu0 %v1527
    %v1529 = vpop.f32.mrb[0].mxu0
    %v1530 = vadd.f32 %v1360, %v1529
    %v1531 = vpop.f32.mrb[0].mxu0
    %1532 = vmatprep.mubr.f32.mxu0 0.0
    %v1533 = vand.u32 %v1322, 4294901760
    %v1534 = vsub.f32 %v1322, %v1533
    %v1535 = vand.u32 %v1534, 4294901760
    %v1536 = vsub.f32 %v1534, %v1535
    %v1537 = vand.u32 %v1536, 4294901760
    %1538 = vmatmul.mubr.f32.gmra.mrb[0].mxu0 %v1537
    %v1539 = vpop.f32.mrb[0].mxu0
    %v1540 = vadd.f32 %v1365, %v1539
    %v1541 = vpop.f32.mrb[0].mxu0
    %1542 = vmatprep.mubr.f32.mxu0 0.0
    %v1543 = vand.u32 %v1323, 4294901760
    %v1544 = vsub.f32 %v1323, %v1543
    %v1545 = vand.u32 %v1544, 4294901760
    %v1546 = vsub.f32 %v1544, %v1545
    %v1547 = vand.u32 %v1546, 4294901760
    %1548 = vmatmul.mubr.f32.gmra.mrb[0].mxu0 %v1547
    %v1549 = vpop.f32.mrb[0].mxu0
    %v1550 = vadd.f32 %v1370, %v1549
    %v1551 = vpop.f32.mrb[0].mxu0
    %1552 = vmatprep.mubr.f32.mxu0 0.0
    %v1553 = vand.u32 %v1324, 4294901760
    %v1554 = vsub.f32 %v1324, %v1553
    %v1555 = vand.u32 %v1554, 4294901760
    %v1556 = vsub.f32 %v1554, %v1555
    %v1557 = vand.u32 %v1556, 4294901760
    %1558 = vmatmul.mubr.f32.gmra.mrb[0].mxu0 %v1557
    %v1559 = vpop.f32.mrb[0].mxu0
    %v1560 = vadd.f32 %v1375, %v1559
    %v1561 = vpop.f32.mrb[0].mxu0
    %1562 = vmatprep.mubr.f32.mxu0 0.0
    %v1563 = vand.u32 %v1325, 4294901760
    %v1564 = vsub.f32 %v1325, %v1563
    %v1565 = vand.u32 %v1564, 4294901760
    %v1566 = vsub.f32 %v1564, %v1565
    %v1567 = vand.u32 %v1566, 4294901760
    %1568 = vmatmul.mubr.f32.gmra.mrb[0].mxu0 %v1567
    %v1569 = vpop.f32.mrb[0].mxu0
    %v1570 = vadd.f32 %v1380, %v1569
    %v1571 = vpop.f32.mrb[0].mxu0
    %1572 = vmatprep.mubr.f32.mxu0 0.0
    %v1573 = vand.u32 %v1326, 4294901760
    %v1574 = vsub.f32 %v1326, %v1573
    %v1575 = vand.u32 %v1574, 4294901760
    %v1576 = vsub.f32 %v1574, %v1575
    %v1577 = vand.u32 %v1576, 4294901760
    %1578 = vmatmul.mubr.f32.gmra.mrb[0].mxu0 %v1577
    %v1579 = vpop.f32.mrb[0].mxu0
    %v1580 = vadd.f32 %v1385, %v1579
    %v1581 = vpop.f32.mrb[0].mxu0
    %1582 = vmatprep.mubr.f32.mxu0 0.0
    %v1583 = vand.u32 %v1327, 4294901760
    %v1584 = vsub.f32 %v1327, %v1583
    %v1585 = vand.u32 %v1584, 4294901760
    %v1586 = vsub.f32 %v1584, %v1585
    %v1587 = vand.u32 %v1586, 4294901760
    %1588 = vmatmul.mubr.f32.gmra.mrb[0].mxu0 %v1587
    %v1589 = vpop.f32.mrb[0].mxu0
    %v1590 = vadd.f32 %v1390, %v1589
    %v1591 = vpop.f32.mrb[0].mxu0
    %1592 = vmatprep.mubr.f32.mxu0 0.0
    %v1593 = vand.u32 %v1328, 4294901760
    %v1594 = vsub.f32 %v1328, %v1593
    %v1595 = vand.u32 %v1594, 4294901760
    %v1596 = vsub.f32 %v1594, %v1595
    %v1597 = vand.u32 %v1596, 4294901760
    %1598 = vmatmul.mubr.f32.gmra.mrb[0].mxu0 %v1597
    %v1599 = vpop.f32.mrb[0].mxu0
    %v1600 = vadd.f32 %v1395, %v1599
    %v1601 = vpop.f32.mrb[0].mxu0
    %1602 = vmatprep.mubr.f32.mxu0 0.0
    %v1603 = vand.u32 %v1329, 4294901760
    %v1604 = vsub.f32 %v1329, %v1603
    %v1605 = vand.u32 %v1604, 4294901760
    %v1606 = vsub.f32 %v1604, %v1605
    %v1607 = vand.u32 %v1606, 4294901760
    %1608 = vmatmul.mubr.f32.gmra.mrb[0].mxu0 %v1607
    %v1609 = vpop.f32.mrb[0].mxu0
    %v1610 = vadd.f32 %v1400, %v1609
    %v1611 = vpop.f32.mrb[0].mxu0
    %1612 = vmatprep.mubr.f32.mxu0 0.0
    %v1613 = vand.u32 %v1330, 4294901760
    %v1614 = vsub.f32 %v1330, %v1613
    %v1615 = vand.u32 %v1614, 4294901760
    %v1616 = vsub.f32 %v1614, %v1615
    %v1617 = vand.u32 %v1616, 4294901760
    %1618 = vmatmul.mubr.f32.gmra.mrb[0].mxu0 %v1617
    %v1619 = vpop.f32.mrb[0].mxu0
    %v1620 = vadd.f32 %v1405, %v1619
    %v1621 = vpop.f32.mrb[0].mxu0
    %1622 = vmatprep.mubr.f32.mxu0 0.0
    %v1623 = vand.u32 %v1331, 4294901760
    %v1624 = vsub.f32 %v1331, %v1623
    %v1625 = vand.u32 %v1624, 4294901760
    %v1626 = vsub.f32 %v1624, %v1625
    %v1627 = vand.u32 %v1626, 4294901760
    %1628 = vmatmul.mubr.f32.gmra.mrb[0].mxu0 %v1627
    %v1629 = vpop.f32.mrb[0].mxu0
    %v1630 = vadd.f32 %v1410, %v1629
    %v1631 = vpop.f32.mrb[0].mxu0
    %1632 = vmatprep.mubr.f32.mxu0 0.0
    %v1633 = vand.u32 %v1332, 4294901760
    %v1634 = vsub.f32 %v1332, %v1633
    %v1635 = vand.u32 %v1634, 4294901760
    %v1636 = vsub.f32 %v1634, %v1635
    %v1637 = vand.u32 %v1636, 4294901760
    %1638 = vmatmul.mubr.f32.gmra.mrb[0].mxu0 %v1637
    %v1639 = vpop.f32.mrb[0].mxu0
    %v1640 = vadd.f32 %v1415, %v1639
    %v1641 = vpop.f32.mrb[0].mxu0
    %1642 = vmatprep.mubr.f32.mxu0 0.0
    %v1643 = vand.u32 %v1333, 4294901760
    %v1644 = vsub.f32 %v1333, %v1643
    %v1645 = vand.u32 %v1644, 4294901760
    %v1646 = vsub.f32 %v1644, %v1645
    %v1647 = vand.u32 %v1646, 4294901760
    %1648 = vmatmul.mubr.f32.gmra.mrb[0].mxu0 %v1647
    %v1649 = vpop.f32.mrb[0].mxu0
    %v1650 = vadd.f32 %v1420, %v1649
    %v1651 = vpop.f32.mrb[0].mxu0
    %1652 = vmatprep.mubr.f32.mxu0 0.0
    %v1653 = vand.u32 %v1334, 4294901760
    %v1654 = vsub.f32 %v1334, %v1653
    %v1655 = vand.u32 %v1654, 4294901760
    %v1656 = vsub.f32 %v1654, %v1655
    %v1657 = vand.u32 %v1656, 4294901760
    %1658 = vmatmul.mubr.f32.gmra.mrb[0].mxu0 %v1657
    %v1659 = vpop.f32.mrb[0].mxu0
    %v1660 = vadd.f32 %v1425, %v1659
    %v1661 = vpop.f32.mrb[0].mxu0
    %1662 = vmatprep.mubr.f32.mxu0 0.0
    %v1663 = vand.u32 %v1335, 4294901760
    %v1664 = vsub.f32 %v1335, %v1663
    %v1665 = vand.u32 %v1664, 4294901760
    %v1666 = vsub.f32 %v1664, %v1665
    %v1667 = vand.u32 %v1666, 4294901760
    %1668 = vmatmul.mubr.f32.gmra.mrb[0].mxu0 %v1667
    %v1669 = vpop.f32.mrb[0].mxu0
    %v1670 = vadd.f32 %v1430, %v1669
    %v1671 = vpop.f32.mrb[0].mxu0
    %1672 = vdwg.mxu0
    %1673 = vmatprep.subr.mxu0 0.0
    %v1674 = vand.u32 %v1304, 4294901760
    %v1675 = vsub.f32 %v1304, %v1674
    %v1676 = vand.u32 %v1675, 4294901760
    %v1677 = vsub.f32 %v1675, %v1676
    %v1678 = vand.u32 %v1677, 4294901760
    %1679 = vmatpush1.msra.mxu0 %v1678
    %1680 = vmatprep.subr.mxu0 0.0
    %v1681 = vand.u32 %v1305, 4294901760
    %v1682 = vsub.f32 %v1305, %v1681
    %v1683 = vand.u32 %v1682, 4294901760
    %v1684 = vsub.f32 %v1682, %v1683
    %v1685 = vand.u32 %v1684, 4294901760
    %1686 = vmatpush1.msra.mxu0 %v1685
    %1687 = vmatprep.subr.mxu0 0.0
    %v1688 = vand.u32 %v1306, 4294901760
    %v1689 = vsub.f32 %v1306, %v1688
    %v1690 = vand.u32 %v1689, 4294901760
    %v1691 = vsub.f32 %v1689, %v1690
    %v1692 = vand.u32 %v1691, 4294901760
    %1693 = vmatpush1.msra.mxu0 %v1692
    %1694 = vmatprep.subr.mxu0 0.0
    %v1695 = vand.u32 %v1307, 4294901760
    %v1696 = vsub.f32 %v1307, %v1695
    %v1697 = vand.u32 %v1696, 4294901760
    %v1698 = vsub.f32 %v1696, %v1697
    %v1699 = vand.u32 %v1698, 4294901760
    %1700 = vmatpush1.msra.mxu0 %v1699
    %1701 = vmatprep.subr.mxu0 0.0
    %v1702 = vand.u32 %v1308, 4294901760
    %v1703 = vsub.f32 %v1308, %v1702
    %v1704 = vand.u32 %v1703, 4294901760
    %v1705 = vsub.f32 %v1703, %v1704
    %v1706 = vand.u32 %v1705, 4294901760
    %1707 = vmatpush1.msra.mxu0 %v1706
    %1708 = vmatprep.subr.mxu0 0.0
    %v1709 = vand.u32 %v1309, 4294901760
    %v1710 = vsub.f32 %v1309, %v1709
    %v1711 = vand.u32 %v1710, 4294901760
    %v1712 = vsub.f32 %v1710, %v1711
    %v1713 = vand.u32 %v1712, 4294901760
    %1714 = vmatpush1.msra.mxu0 %v1713
    %1715 = vmatprep.subr.mxu0 0.0
    %v1716 = vand.u32 %v1310, 4294901760
    %v1717 = vsub.f32 %v1310, %v1716
    %v1718 = vand.u32 %v1717, 4294901760
    %v1719 = vsub.f32 %v1717, %v1718
    %v1720 = vand.u32 %v1719, 4294901760
    %1721 = vmatpush1.msra.mxu0 %v1720
    %1722 = vmatprep.subr.mxu0 0.0
    %v1723 = vand.u32 %v1311, 4294901760
    %v1724 = vsub.f32 %v1311, %v1723
    %v1725 = vand.u32 %v1724, 4294901760
    %v1726 = vsub.f32 %v1724, %v1725
    %v1727 = vand.u32 %v1726, 4294901760
    %1728 = vmatpush1.msra.mxu0 %v1727
    %1729 = vmatprep.subr.mxu0 0.0
    %v1730 = vand.u32 %v1312, 4294901760
    %v1731 = vsub.f32 %v1312, %v1730
    %v1732 = vand.u32 %v1731, 4294901760
    %v1733 = vsub.f32 %v1731, %v1732
    %v1734 = vand.u32 %v1733, 4294901760
    %1735 = vmatpush1.msra.mxu0 %v1734
    %1736 = vmatprep.subr.mxu0 0.0
    %v1737 = vand.u32 %v1313, 4294901760
    %v1738 = vsub.f32 %v1313, %v1737
    %v1739 = vand.u32 %v1738, 4294901760
    %v1740 = vsub.f32 %v1738, %v1739
    %v1741 = vand.u32 %v1740, 4294901760
    %1742 = vmatpush1.msra.mxu0 %v1741
    %1743 = vmatprep.subr.mxu0 0.0
    %v1744 = vand.u32 %v1314, 4294901760
    %v1745 = vsub.f32 %v1314, %v1744
    %v1746 = vand.u32 %v1745, 4294901760
    %v1747 = vsub.f32 %v1745, %v1746
    %v1748 = vand.u32 %v1747, 4294901760
    %1749 = vmatpush1.msra.mxu0 %v1748
    %1750 = vmatprep.subr.mxu0 0.0
    %v1751 = vand.u32 %v1315, 4294901760
    %v1752 = vsub.f32 %v1315, %v1751
    %v1753 = vand.u32 %v1752, 4294901760
    %v1754 = vsub.f32 %v1752, %v1753
    %v1755 = vand.u32 %v1754, 4294901760
    %1756 = vmatpush1.msra.mxu0 %v1755
    %1757 = vmatprep.subr.mxu0 0.0
    %v1758 = vand.u32 %v1316, 4294901760
    %v1759 = vsub.f32 %v1316, %v1758
    %v1760 = vand.u32 %v1759, 4294901760
    %v1761 = vsub.f32 %v1759, %v1760
    %v1762 = vand.u32 %v1761, 4294901760
    %1763 = vmatpush1.msra.mxu0 %v1762
    %1764 = vmatprep.subr.mxu0 0.0
    %v1765 = vand.u32 %v1317, 4294901760
    %v1766 = vsub.f32 %v1317, %v1765
    %v1767 = vand.u32 %v1766, 4294901760
    %v1768 = vsub.f32 %v1766, %v1767
    %v1769 = vand.u32 %v1768, 4294901760
    %1770 = vmatpush1.msra.mxu0 %v1769
    %1771 = vmatprep.subr.mxu0 0.0
    %v1772 = vand.u32 %v1318, 4294901760
    %v1773 = vsub.f32 %v1318, %v1772
    %v1774 = vand.u32 %v1773, 4294901760
    %v1775 = vsub.f32 %v1773, %v1774
    %v1776 = vand.u32 %v1775, 4294901760
    %1777 = vmatpush1.msra.mxu0 %v1776
    %1778 = vmatprep.subr.mxu0 0.0
    %v1779 = vand.u32 %v1319, 4294901760
    %v1780 = vsub.f32 %v1319, %v1779
    %v1781 = vand.u32 %v1780, 4294901760
    %v1782 = vsub.f32 %v1780, %v1781
    %v1783 = vand.u32 %v1782, 4294901760
    %1784 = vmatpush1.msra.mxu0 %v1783
    %1785 = vmatprep.subr.mxu0 0.0
    %1786 = vmatpush1.msra.mxu0 0.0
    %1787 = vmatprep.subr.mxu0 0.0
    %1788 = vmatpush1.msra.mxu0 0.0
    %1789 = vmatprep.subr.mxu0 0.0
    %1790 = vmatpush1.msra.mxu0 0.0
    %1791 = vmatprep.subr.mxu0 0.0
    %1792 = vmatpush1.msra.mxu0 0.0
    %1793 = vmatprep.subr.mxu0 0.0
    %1794 = vmatpush1.msra.mxu0 0.0
    %1795 = vmatprep.subr.mxu0 0.0
    %1796 = vmatpush1.msra.mxu0 0.0
    %1797 = vmatprep.subr.mxu0 0.0
    %1798 = vmatpush1.msra.mxu0 0.0
    %1799 = vmatprep.subr.mxu0 0.0
    %1800 = vmatpush1.msra.mxu0 0.0
    %1801 = vmatprep.subr.mxu0 0.0
    %1802 = vmatpush1.msra.mxu0 0.0
    %1803 = vmatprep.subr.mxu0 0.0
    %1804 = vmatpush1.msra.mxu0 0.0
    %1805 = vmatprep.subr.mxu0 0.0
    %1806 = vmatpush1.msra.mxu0 0.0
    %1807 = vmatprep.subr.mxu0 0.0
    %1808 = vmatpush1.msra.mxu0 0.0
    %1809 = vmatprep.subr.mxu0 0.0
    %1810 = vmatpush1.msra.mxu0 0.0
    %1811 = vmatprep.subr.mxu0 0.0
    %1812 = vmatpush1.msra.mxu0 0.0
    %1813 = vmatprep.subr.mxu0 0.0
    %1814 = vmatpush1.msra.mxu0 0.0
    %1815 = vmatprep.subr.mxu0 0.0
    %1816 = vmatpush1.msra.mxu0 0.0
    %1817 = vmatprep.mubr.f32.mxu0 0.0
    %v1818 = vand.u32 %v1320, 4294901760
    %1819 = vmatmul.mubr.f32.gmra.mrb[0].mxu0 %v1818
    %v1820 = vpop.f32.mrb[0].mxu0
    %v1821 = vadd.f32 %v1520, %v1820
    %v1822 = vpop.f32.mrb[0].mxu0
    %1823 = vmatprep.mubr.f32.mxu0 0.0
    %v1824 = vand.u32 %v1321, 4294901760
    %1825 = vmatmul.mubr.f32.gmra.mrb[0].mxu0 %v1824
    %v1826 = vpop.f32.mrb[0].mxu0
    %v1827 = vadd.f32 %v1530, %v1826
    %v1828 = vpop.f32.mrb[0].mxu0
    %1829 = vmatprep.mubr.f32.mxu0 0.0
    %v1830 = vand.u32 %v1322, 4294901760
    %1831 = vmatmul.mubr.f32.gmra.mrb[0].mxu0 %v1830
    %v1832 = vpop.f32.mrb[0].mxu0
    %v1833 = vadd.f32 %v1540, %v1832
    %v1834 = vpop.f32.mrb[0].mxu0
    %1835 = vmatprep.mubr.f32.mxu0 0.0
    %v1836 = vand.u32 %v1323, 4294901760
    %1837 = vmatmul.mubr.f32.gmra.mrb[0].mxu0 %v1836
    %v1838 = vpop.f32.mrb[0].mxu0
    %v1839 = vadd.f32 %v1550, %v1838
    %v1840 = vpop.f32.mrb[0].mxu0
    %1841 = vmatprep.mubr.f32.mxu0 0.0
    %v1842 = vand.u32 %v1324, 4294901760
    %1843 = vmatmul.mubr.f32.gmra.mrb[0].mxu0 %v1842
    %v1844 = vpop.f32.mrb[0].mxu0
    %v1845 = vadd.f32 %v1560, %v1844
    %v1846 = vpop.f32.mrb[0].mxu0
    %1847 = vmatprep.mubr.f32.mxu0 0.0
    %v1848 = vand.u32 %v1325, 4294901760
    %1849 = vmatmul.mubr.f32.gmra.mrb[0].mxu0 %v1848
    %v1850 = vpop.f32.mrb[0].mxu0
    %v1851 = vadd.f32 %v1570, %v1850
    %v1852 = vpop.f32.mrb[0].mxu0
    %1853 = vmatprep.mubr.f32.mxu0 0.0
    %v1854 = vand.u32 %v1326, 4294901760
    %1855 = vmatmul.mubr.f32.gmra.mrb[0].mxu0 %v1854
    %v1856 = vpop.f32.mrb[0].mxu0
    %v1857 = vadd.f32 %v1580, %v1856
    %v1858 = vpop.f32.mrb[0].mxu0
    %1859 = vmatprep.mubr.f32.mxu0 0.0
    %v1860 = vand.u32 %v1327, 4294901760
    %1861 = vmatmul.mubr.f32.gmra.mrb[0].mxu0 %v1860
    %v1862 = vpop.f32.mrb[0].mxu0
    %v1863 = vadd.f32 %v1590, %v1862
    %v1864 = vpop.f32.mrb[0].mxu0
    %1865 = vmatprep.mubr.f32.mxu0 0.0
    %v1866 = vand.u32 %v1328, 4294901760
    %1867 = vmatmul.mubr.f32.gmra.mrb[0].mxu0 %v1866
    %v1868 = vpop.f32.mrb[0].mxu0
    %v1869 = vadd.f32 %v1600, %v1868
    %v1870 = vpop.f32.mrb[0].mxu0
    %1871 = vmatprep.mubr.f32.mxu0 0.0
    %v1872 = vand.u32 %v1329, 4294901760
    %1873 = vmatmul.mubr.f32.gmra.mrb[0].mxu0 %v1872
    %v1874 = vpop.f32.mrb[0].mxu0
    %v1875 = vadd.f32 %v1610, %v1874
    %v1876 = vpop.f32.mrb[0].mxu0
    %1877 = vmatprep.mubr.f32.mxu0 0.0
    %v1878 = vand.u32 %v1330, 4294901760
    %1879 = vmatmul.mubr.f32.gmra.mrb[0].mxu0 %v1878
    %v1880 = vpop.f32.mrb[0].mxu0
    %v1881 = vadd.f32 %v1620, %v1880
    %v1882 = vpop.f32.mrb[0].mxu0
    %1883 = vmatprep.mubr.f32.mxu0 0.0
    %v1884 = vand.u32 %v1331, 4294901760
    %1885 = vmatmul.mubr.f32.gmra.mrb[0].mxu0 %v1884
    %v1886 = vpop.f32.mrb[0].mxu0
    %v1887 = vadd.f32 %v1630, %v1886
    %v1888 = vpop.f32.mrb[0].mxu0
    %1889 = vmatprep.mubr.f32.mxu0 0.0
    %v1890 = vand.u32 %v1332, 4294901760
    %1891 = vmatmul.mubr.f32.gmra.mrb[0].mxu0 %v1890
    %v1892 = vpop.f32.mrb[0].mxu0
    %v1893 = vadd.f32 %v1640, %v1892
    %v1894 = vpop.f32.mrb[0].mxu0
    %1895 = vmatprep.mubr.f32.mxu0 0.0
    %v1896 = vand.u32 %v1333, 4294901760
    %1897 = vmatmul.mubr.f32.gmra.mrb[0].mxu0 %v1896
    %v1898 = vpop.f32.mrb[0].mxu0
    %v1899 = vadd.f32 %v1650, %v1898
    %v1900 = vpop.f32.mrb[0].mxu0
    %1901 = vmatprep.mubr.f32.mxu0 0.0
    %v1902 = vand.u32 %v1334, 4294901760
    %1903 = vmatmul.mubr.f32.gmra.mrb[0].mxu0 %v1902
    %v1904 = vpop.f32.mrb[0].mxu0
    %v1905 = vadd.f32 %v1660, %v1904
    %v1906 = vpop.f32.mrb[0].mxu0
    %1907 = vmatprep.mubr.f32.mxu0 0.0
    %v1908 = vand.u32 %v1335, 4294901760
    %1909 = vmatmul.mubr.f32.gmra.mrb[0].mxu0 %v1908
    %v1910 = vpop.f32.mrb[0].mxu0
    %v1911 = vadd.f32 %v1670, %v1910
    %v1912 = vpop.f32.mrb[0].mxu0
    %1913 = vdwg.mxu0
    %1914 = vmatprep.subr.mxu0 0.0
    %v1915 = vand.u32 %v1304, 4294901760
    %v1916 = vsub.f32 %v1304, %v1915
    %1917 = vmatpush1.msra.mxu0 %v1916
    %1918 = vmatprep.subr.mxu0 0.0
    %v1919 = vand.u32 %v1305, 4294901760
    %v1920 = vsub.f32 %v1305, %v1919
    %1921 = vmatpush1.msra.mxu0 %v1920
    %1922 = vmatprep.subr.mxu0 0.0
    %v1923 = vand.u32 %v1306, 4294901760
    %v1924 = vsub.f32 %v1306, %v1923
    %1925 = vmatpush1.msra.mxu0 %v1924
    %1926 = vmatprep.subr.mxu0 0.0
    %v1927 = vand.u32 %v1307, 4294901760
    %v1928 = vsub.f32 %v1307, %v1927
    %1929 = vmatpush1.msra.mxu0 %v1928
    %1930 = vmatprep.subr.mxu0 0.0
    %v1931 = vand.u32 %v1308, 4294901760
    %v1932 = vsub.f32 %v1308, %v1931
    %1933 = vmatpush1.msra.mxu0 %v1932
    %1934 = vmatprep.subr.mxu0 0.0
    %v1935 = vand.u32 %v1309, 4294901760
    %v1936 = vsub.f32 %v1309, %v1935
    %1937 = vmatpush1.msra.mxu0 %v1936
    %1938 = vmatprep.subr.mxu0 0.0
    %v1939 = vand.u32 %v1310, 4294901760
    %v1940 = vsub.f32 %v1310, %v1939
    %1941 = vmatpush1.msra.mxu0 %v1940
    %1942 = vmatprep.subr.mxu0 0.0
    %v1943 = vand.u32 %v1311, 4294901760
    %v1944 = vsub.f32 %v1311, %v1943
    %1945 = vmatpush1.msra.mxu0 %v1944
    %1946 = vmatprep.subr.mxu0 0.0
    %v1947 = vand.u32 %v1312, 4294901760
    %v1948 = vsub.f32 %v1312, %v1947
    %1949 = vmatpush1.msra.mxu0 %v1948
    %1950 = vmatprep.subr.mxu0 0.0
    %v1951 = vand.u32 %v1313, 4294901760
    %v1952 = vsub.f32 %v1313, %v1951
    %1953 = vmatpush1.msra.mxu0 %v1952
    %1954 = vmatprep.subr.mxu0 0.0
    %v1955 = vand.u32 %v1314, 4294901760
    %v1956 = vsub.f32 %v1314, %v1955
    %1957 = vmatpush1.msra.mxu0 %v1956
    %1958 = vmatprep.subr.mxu0 0.0
    %v1959 = vand.u32 %v1315, 4294901760
    %v1960 = vsub.f32 %v1315, %v1959
    %1961 = vmatpush1.msra.mxu0 %v1960
    %1962 = vmatprep.subr.mxu0 0.0
    %v1963 = vand.u32 %v1316, 4294901760
    %v1964 = vsub.f32 %v1316, %v1963
    %1965 = vmatpush1.msra.mxu0 %v1964
    %1966 = vmatprep.subr.mxu0 0.0
    %v1967 = vand.u32 %v1317, 4294901760
    %v1968 = vsub.f32 %v1317, %v1967
    %1969 = vmatpush1.msra.mxu0 %v1968
    %1970 = vmatprep.subr.mxu0 0.0
    %v1971 = vand.u32 %v1318, 4294901760
    %v1972 = vsub.f32 %v1318, %v1971
    %1973 = vmatpush1.msra.mxu0 %v1972
    %1974 = vmatprep.subr.mxu0 0.0
    %v1975 = vand.u32 %v1319, 4294901760
    %v1976 = vsub.f32 %v1319, %v1975
    %1977 = vmatpush1.msra.mxu0 %v1976
    %1978 = vmatprep.subr.mxu0 0.0
    %1979 = vmatpush1.msra.mxu0 0.0
    %1980 = vmatprep.subr.mxu0 0.0
    %1981 = vmatpush1.msra.mxu0 0.0
    %1982 = vmatprep.subr.mxu0 0.0
    %1983 = vmatpush1.msra.mxu0 0.0
    %1984 = vmatprep.subr.mxu0 0.0
    %1985 = vmatpush1.msra.mxu0 0.0
    %1986 = vmatprep.subr.mxu0 0.0
    %1987 = vmatpush1.msra.mxu0 0.0
    %1988 = vmatprep.subr.mxu0 0.0
    %1989 = vmatpush1.msra.mxu0 0.0
    %1990 = vmatprep.subr.mxu0 0.0
    %1991 = vmatpush1.msra.mxu0 0.0
    %1992 = vmatprep.subr.mxu0 0.0
    %1993 = vmatpush1.msra.mxu0 0.0
    %1994 = vmatprep.subr.mxu0 0.0
    %1995 = vmatpush1.msra.mxu0 0.0
    %1996 = vmatprep.subr.mxu0 0.0
    %1997 = vmatpush1.msra.mxu0 0.0
    %1998 = vmatprep.subr.mxu0 0.0
    %1999 = vmatpush1.msra.mxu0 0.0
    %2000 = vmatprep.subr.mxu0 0.0
    %2001 = vmatpush1.msra.mxu0 0.0
    %2002 = vmatprep.subr.mxu0 0.0
    %2003 = vmatpush1.msra.mxu0 0.0
    %2004 = vmatprep.subr.mxu0 0.0
    %2005 = vmatpush1.msra.mxu0 0.0
    %2006 = vmatprep.subr.mxu0 0.0
    %2007 = vmatpush1.msra.mxu0 0.0
    %2008 = vmatprep.subr.mxu0 0.0
    %2009 = vmatpush1.msra.mxu0 0.0
    %2010 = vmatprep.mubr.f32.mxu0 0.0
    %v2011 = vand.u32 %v1320, 4294901760
    %v2012 = vsub.f32 %v1320, %v2011
    %2013 = vmatmul.mubr.f32.gmra.mrb[0].mxu0 %v2012
    %v2014 = vpop.f32.mrb[0].mxu0
    %v2015 = vadd.f32 %v1821, %v2014
    %v2016 = vpop.f32.mrb[0].mxu0
    %2017 = vmatprep.mubr.f32.mxu0 0.0
    %v2018 = vand.u32 %v1321, 4294901760
    %v2019 = vsub.f32 %v1321, %v2018
    %2020 = vmatmul.mubr.f32.gmra.mrb[0].mxu0 %v2019
    %v2021 = vpop.f32.mrb[0].mxu0
    %v2022 = vadd.f32 %v1827, %v2021
    %v2023 = vpop.f32.mrb[0].mxu0
    %2024 = vmatprep.mubr.f32.mxu0 0.0
    %v2025 = vand.u32 %v1322, 4294901760
    %v2026 = vsub.f32 %v1322, %v2025
    %2027 = vmatmul.mubr.f32.gmra.mrb[0].mxu0 %v2026
    %v2028 = vpop.f32.mrb[0].mxu0
    %v2029 = vadd.f32 %v1833, %v2028
    %v2030 = vpop.f32.mrb[0].mxu0
    %2031 = vmatprep.mubr.f32.mxu0 0.0
    %v2032 = vand.u32 %v1323, 4294901760
    %v2033 = vsub.f32 %v1323, %v2032
    %2034 = vmatmul.mubr.f32.gmra.mrb[0].mxu0 %v2033
    %v2035 = vpop.f32.mrb[0].mxu0
    %v2036 = vadd.f32 %v1839, %v2035
    %v2037 = vpop.f32.mrb[0].mxu0
    %2038 = vmatprep.mubr.f32.mxu0 0.0
    %v2039 = vand.u32 %v1324, 4294901760
    %v2040 = vsub.f32 %v1324, %v2039
    %2041 = vmatmul.mubr.f32.gmra.mrb[0].mxu0 %v2040
    %v2042 = vpop.f32.mrb[0].mxu0
    %v2043 = vadd.f32 %v1845, %v2042
    %v2044 = vpop.f32.mrb[0].mxu0
    %2045 = vmatprep.mubr.f32.mxu0 0.0
    %v2046 = vand.u32 %v1325, 4294901760
    %v2047 = vsub.f32 %v1325, %v2046
    %2048 = vmatmul.mubr.f32.gmra.mrb[0].mxu0 %v2047
    %v2049 = vpop.f32.mrb[0].mxu0
    %v2050 = vadd.f32 %v1851, %v2049
    %v2051 = vpop.f32.mrb[0].mxu0
    %2052 = vmatprep.mubr.f32.mxu0 0.0
    %v2053 = vand.u32 %v1326, 4294901760
    %v2054 = vsub.f32 %v1326, %v2053
    %2055 = vmatmul.mubr.f32.gmra.mrb[0].mxu0 %v2054
    %v2056 = vpop.f32.mrb[0].mxu0
    %v2057 = vadd.f32 %v1857, %v2056
    %v2058 = vpop.f32.mrb[0].mxu0
    %2059 = vmatprep.mubr.f32.mxu0 0.0
    %v2060 = vand.u32 %v1327, 4294901760
    %v2061 = vsub.f32 %v1327, %v2060
    %2062 = vmatmul.mubr.f32.gmra.mrb[0].mxu0 %v2061
    %v2063 = vpop.f32.mrb[0].mxu0
    %v2064 = vadd.f32 %v1863, %v2063
    %v2065 = vpop.f32.mrb[0].mxu0
    %2066 = vmatprep.mubr.f32.mxu0 0.0
    %v2067 = vand.u32 %v1328, 4294901760
    %v2068 = vsub.f32 %v1328, %v2067
    %2069 = vmatmul.mubr.f32.gmra.mrb[0].mxu0 %v2068
    %v2070 = vpop.f32.mrb[0].mxu0
    %v2071 = vadd.f32 %v1869, %v2070
    %v2072 = vpop.f32.mrb[0].mxu0
    %2073 = vmatprep.mubr.f32.mxu0 0.0
    %v2074 = vand.u32 %v1329, 4294901760
    %v2075 = vsub.f32 %v1329, %v2074
    %2076 = vmatmul.mubr.f32.gmra.mrb[0].mxu0 %v2075
    %v2077 = vpop.f32.mrb[0].mxu0
    %v2078 = vadd.f32 %v1875, %v2077
    %v2079 = vpop.f32.mrb[0].mxu0
    %2080 = vmatprep.mubr.f32.mxu0 0.0
    %v2081 = vand.u32 %v1330, 4294901760
    %v2082 = vsub.f32 %v1330, %v2081
    %2083 = vmatmul.mubr.f32.gmra.mrb[0].mxu0 %v2082
    %v2084 = vpop.f32.mrb[0].mxu0
    %v2085 = vadd.f32 %v1881, %v2084
    %v2086 = vpop.f32.mrb[0].mxu0
    %2087 = vmatprep.mubr.f32.mxu0 0.0
    %v2088 = vand.u32 %v1331, 4294901760
    %v2089 = vsub.f32 %v1331, %v2088
    %2090 = vmatmul.mubr.f32.gmra.mrb[0].mxu0 %v2089
    %v2091 = vpop.f32.mrb[0].mxu0
    %v2092 = vadd.f32 %v1887, %v2091
    %v2093 = vpop.f32.mrb[0].mxu0
    %2094 = vmatprep.mubr.f32.mxu0 0.0
    %v2095 = vand.u32 %v1332, 4294901760
    %v2096 = vsub.f32 %v1332, %v2095
    %2097 = vmatmul.mubr.f32.gmra.mrb[0].mxu0 %v2096
    %v2098 = vpop.f32.mrb[0].mxu0
    %v2099 = vadd.f32 %v1893, %v2098
    %v2100 = vpop.f32.mrb[0].mxu0
    %2101 = vmatprep.mubr.f32.mxu0 0.0
    %v2102 = vand.u32 %v1333, 4294901760
    %v2103 = vsub.f32 %v1333, %v2102
    %2104 = vmatmul.mubr.f32.gmra.mrb[0].mxu0 %v2103
    %v2105 = vpop.f32.mrb[0].mxu0
    %v2106 = vadd.f32 %v1899, %v2105
    %v2107 = vpop.f32.mrb[0].mxu0
    %2108 = vmatprep.mubr.f32.mxu0 0.0
    %v2109 = vand.u32 %v1334, 4294901760
    %v2110 = vsub.f32 %v1334, %v2109
    %2111 = vmatmul.mubr.f32.gmra.mrb[0].mxu0 %v2110
    %v2112 = vpop.f32.mrb[0].mxu0
    %v2113 = vadd.f32 %v1905, %v2112
    %v2114 = vpop.f32.mrb[0].mxu0
    %2115 = vmatprep.mubr.f32.mxu0 0.0
    %v2116 = vand.u32 %v1335, 4294901760
    %v2117 = vsub.f32 %v1335, %v2116
    %2118 = vmatmul.mubr.f32.gmra.mrb[0].mxu0 %v2117
    %v2119 = vpop.f32.mrb[0].mxu0
    %v2120 = vadd.f32 %v1911, %v2119
    %v2121 = vpop.f32.mrb[0].mxu0
    %2122 = vdwg.mxu0
    %2123 = vmatprep.subr.mxu0 0.0
    %v2124 = vand.u32 %v1304, 4294901760
    %2125 = vmatpush1.msra.mxu0 %v2124
    %2126 = vmatprep.subr.mxu0 0.0
    %v2127 = vand.u32 %v1305, 4294901760
    %2128 = vmatpush1.msra.mxu0 %v2127
    %2129 = vmatprep.subr.mxu0 0.0
    %v2130 = vand.u32 %v1306, 4294901760
    %2131 = vmatpush1.msra.mxu0 %v2130
    %2132 = vmatprep.subr.mxu0 0.0
    %v2133 = vand.u32 %v1307, 4294901760
    %2134 = vmatpush1.msra.mxu0 %v2133
    %2135 = vmatprep.subr.mxu0 0.0
    %v2136 = vand.u32 %v1308, 4294901760
    %2137 = vmatpush1.msra.mxu0 %v2136
    %2138 = vmatprep.subr.mxu0 0.0
    %v2139 = vand.u32 %v1309, 4294901760
    %2140 = vmatpush1.msra.mxu0 %v2139
    %2141 = vmatprep.subr.mxu0 0.0
    %v2142 = vand.u32 %v1310, 4294901760
    %2143 = vmatpush1.msra.mxu0 %v2142
    %2144 = vmatprep.subr.mxu0 0.0
    %v2145 = vand.u32 %v1311, 4294901760
    %2146 = vmatpush1.msra.mxu0 %v2145
    %2147 = vmatprep.subr.mxu0 0.0
    %v2148 = vand.u32 %v1312, 4294901760
    %2149 = vmatpush1.msra.mxu0 %v2148
    %2150 = vmatprep.subr.mxu0 0.0
    %v2151 = vand.u32 %v1313, 4294901760
    %2152 = vmatpush1.msra.mxu0 %v2151
    %2153 = vmatprep.subr.mxu0 0.0
    %v2154 = vand.u32 %v1314, 4294901760
    %2155 = vmatpush1.msra.mxu0 %v2154
    %2156 = vmatprep.subr.mxu0 0.0
    %v2157 = vand.u32 %v1315, 4294901760
    %2158 = vmatpush1.msra.mxu0 %v2157
    %2159 = vmatprep.subr.mxu0 0.0
    %v2160 = vand.u32 %v1316, 4294901760
    %2161 = vmatpush1.msra.mxu0 %v2160
    %2162 = vmatprep.subr.mxu0 0.0
    %v2163 = vand.u32 %v1317, 4294901760
    %2164 = vmatpush1.msra.mxu0 %v2163
    %2165 = vmatprep.subr.mxu0 0.0
    %v2166 = vand.u32 %v1318, 4294901760
    %2167 = vmatpush1.msra.mxu0 %v2166
    %2168 = vmatprep.subr.mxu0 0.0
    %v2169 = vand.u32 %v1319, 4294901760
    %2170 = vmatpush1.msra.mxu0 %v2169
    %2171 = vmatprep.subr.mxu0 0.0
    %2172 = vmatpush1.msra.mxu0 0.0
    %2173 = vmatprep.subr.mxu0 0.0
    %2174 = vmatpush1.msra.mxu0 0.0
    %2175 = vmatprep.subr.mxu0 0.0
    %2176 = vmatpush1.msra.mxu0 0.0
    %2177 = vmatprep.subr.mxu0 0.0
    %2178 = vmatpush1.msra.mxu0 0.0
    %2179 = vmatprep.subr.mxu0 0.0
    %2180 = vmatpush1.msra.mxu0 0.0
    %2181 = vmatprep.subr.mxu0 0.0
    %2182 = vmatpush1.msra.mxu0 0.0
    %2183 = vmatprep.subr.mxu0 0.0
    %2184 = vmatpush1.msra.mxu0 0.0
    %2185 = vmatprep.subr.mxu0 0.0
    %2186 = vmatpush1.msra.mxu0 0.0
    %2187 = vmatprep.subr.mxu0 0.0
    %2188 = vmatpush1.msra.mxu0 0.0
    %2189 = vmatprep.subr.mxu0 0.0
    %2190 = vmatpush1.msra.mxu0 0.0
    %2191 = vmatprep.subr.mxu0 0.0
    %2192 = vmatpush1.msra.mxu0 0.0
    %2193 = vmatprep.subr.mxu0 0.0
    %2194 = vmatpush1.msra.mxu0 0.0
    %2195 = vmatprep.subr.mxu0 0.0
    %2196 = vmatpush1.msra.mxu0 0.0
    %2197 = vmatprep.subr.mxu0 0.0
    %2198 = vmatpush1.msra.mxu0 0.0
    %2199 = vmatprep.subr.mxu0 0.0
    %2200 = vmatpush1.msra.mxu0 0.0
    %2201 = vmatprep.subr.mxu0 0.0
    %2202 = vmatpush1.msra.mxu0 0.0
    %2203 = vmatprep.mubr.f32.mxu0 0.0
    %v2204 = vand.u32 %v1320, 4294901760
    %v2205 = vsub.f32 %v1320, %v2204
    %v2206 = vand.u32 %v2205, 4294901760
    %2207 = vmatmul.mubr.f32.gmra.mrb[0].mxu0 %v2206
    %v2208 = vpop.f32.mrb[0].mxu0
    %v2209 = vadd.f32 %v2015, %v2208
    %v2210 = vpop.f32.mrb[0].mxu0
    %2211 = vmatprep.mubr.f32.mxu0 0.0
    %v2212 = vand.u32 %v1321, 4294901760
    %v2213 = vsub.f32 %v1321, %v2212
    %v2214 = vand.u32 %v2213, 4294901760
    %2215 = vmatmul.mubr.f32.gmra.mrb[0].mxu0 %v2214
    %v2216 = vpop.f32.mrb[0].mxu0
    %v2217 = vadd.f32 %v2022, %v2216
    %v2218 = vpop.f32.mrb[0].mxu0
    %2219 = vmatprep.mubr.f32.mxu0 0.0
    %v2220 = vand.u32 %v1322, 4294901760
    %v2221 = vsub.f32 %v1322, %v2220
    %v2222 = vand.u32 %v2221, 4294901760
    %2223 = vmatmul.mubr.f32.gmra.mrb[0].mxu0 %v2222
    %v2224 = vpop.f32.mrb[0].mxu0
    %v2225 = vadd.f32 %v2029, %v2224
    %v2226 = vpop.f32.mrb[0].mxu0
    %2227 = vmatprep.mubr.f32.mxu0 0.0
    %v2228 = vand.u32 %v1323, 4294901760
    %v2229 = vsub.f32 %v1323, %v2228
    %v2230 = vand.u32 %v2229, 4294901760
    %2231 = vmatmul.mubr.f32.gmra.mrb[0].mxu0 %v2230
    %v2232 = vpop.f32.mrb[0].mxu0
    %v2233 = vadd.f32 %v2036, %v2232
    %v2234 = vpop.f32.mrb[0].mxu0
    %2235 = vmatprep.mubr.f32.mxu0 0.0
    %v2236 = vand.u32 %v1324, 4294901760
    %v2237 = vsub.f32 %v1324, %v2236
    %v2238 = vand.u32 %v2237, 4294901760
    %2239 = vmatmul.mubr.f32.gmra.mrb[0].mxu0 %v2238
    %v2240 = vpop.f32.mrb[0].mxu0
    %v2241 = vadd.f32 %v2043, %v2240
    %v2242 = vpop.f32.mrb[0].mxu0
    %2243 = vmatprep.mubr.f32.mxu0 0.0
    %v2244 = vand.u32 %v1325, 4294901760
    %v2245 = vsub.f32 %v1325, %v2244
    %v2246 = vand.u32 %v2245, 4294901760
    %2247 = vmatmul.mubr.f32.gmra.mrb[0].mxu0 %v2246
    %v2248 = vpop.f32.mrb[0].mxu0
    %v2249 = vadd.f32 %v2050, %v2248
    %v2250 = vpop.f32.mrb[0].mxu0
    %2251 = vmatprep.mubr.f32.mxu0 0.0
    %v2252 = vand.u32 %v1326, 4294901760
    %v2253 = vsub.f32 %v1326, %v2252
    %v2254 = vand.u32 %v2253, 4294901760
    %2255 = vmatmul.mubr.f32.gmra.mrb[0].mxu0 %v2254
    %v2256 = vpop.f32.mrb[0].mxu0
    %v2257 = vadd.f32 %v2057, %v2256
    %v2258 = vpop.f32.mrb[0].mxu0
    %2259 = vmatprep.mubr.f32.mxu0 0.0
    %v2260 = vand.u32 %v1327, 4294901760
    %v2261 = vsub.f32 %v1327, %v2260
    %v2262 = vand.u32 %v2261, 4294901760
    %2263 = vmatmul.mubr.f32.gmra.mrb[0].mxu0 %v2262
    %v2264 = vpop.f32.mrb[0].mxu0
    %v2265 = vadd.f32 %v2064, %v2264
    %v2266 = vpop.f32.mrb[0].mxu0
    %2267 = vmatprep.mubr.f32.mxu0 0.0
    %v2268 = vand.u32 %v1328, 4294901760
    %v2269 = vsub.f32 %v1328, %v2268
    %v2270 = vand.u32 %v2269, 4294901760
    %2271 = vmatmul.mubr.f32.gmra.mrb[0].mxu0 %v2270
    %v2272 = vpop.f32.mrb[0].mxu0
    %v2273 = vadd.f32 %v2071, %v2272
    %v2274 = vpop.f32.mrb[0].mxu0
    %2275 = vmatprep.mubr.f32.mxu0 0.0
    %v2276 = vand.u32 %v1329, 4294901760
    %v2277 = vsub.f32 %v1329, %v2276
    %v2278 = vand.u32 %v2277, 4294901760
    %2279 = vmatmul.mubr.f32.gmra.mrb[0].mxu0 %v2278
    %v2280 = vpop.f32.mrb[0].mxu0
    %v2281 = vadd.f32 %v2078, %v2280
    %v2282 = vpop.f32.mrb[0].mxu0
    %2283 = vmatprep.mubr.f32.mxu0 0.0
    %v2284 = vand.u32 %v1330, 4294901760
    %v2285 = vsub.f32 %v1330, %v2284
    %v2286 = vand.u32 %v2285, 4294901760
    %2287 = vmatmul.mubr.f32.gmra.mrb[0].mxu0 %v2286
    %v2288 = vpop.f32.mrb[0].mxu0
    %v2289 = vadd.f32 %v2085, %v2288
    %v2290 = vpop.f32.mrb[0].mxu0
    %2291 = vmatprep.mubr.f32.mxu0 0.0
    %v2292 = vand.u32 %v1331, 4294901760
    %v2293 = vsub.f32 %v1331, %v2292
    %v2294 = vand.u32 %v2293, 4294901760
    %2295 = vmatmul.mubr.f32.gmra.mrb[0].mxu0 %v2294
    %v2296 = vpop.f32.mrb[0].mxu0
    %v2297 = vadd.f32 %v2092, %v2296
    %v2298 = vpop.f32.mrb[0].mxu0
    %2299 = vmatprep.mubr.f32.mxu0 0.0
    %v2300 = vand.u32 %v1332, 4294901760
    %v2301 = vsub.f32 %v1332, %v2300
    %v2302 = vand.u32 %v2301, 4294901760
    %2303 = vmatmul.mubr.f32.gmra.mrb[0].mxu0 %v2302
    %v2304 = vpop.f32.mrb[0].mxu0
    %v2305 = vadd.f32 %v2099, %v2304
    %v2306 = vpop.f32.mrb[0].mxu0
    %2307 = vmatprep.mubr.f32.mxu0 0.0
    %v2308 = vand.u32 %v1333, 4294901760
    %v2309 = vsub.f32 %v1333, %v2308
    %v2310 = vand.u32 %v2309, 4294901760
    %2311 = vmatmul.mubr.f32.gmra.mrb[0].mxu0 %v2310
    %v2312 = vpop.f32.mrb[0].mxu0
    %v2313 = vadd.f32 %v2106, %v2312
    %v2314 = vpop.f32.mrb[0].mxu0
    %2315 = vmatprep.mubr.f32.mxu0 0.0
    %v2316 = vand.u32 %v1334, 4294901760
    %v2317 = vsub.f32 %v1334, %v2316
    %v2318 = vand.u32 %v2317, 4294901760
    %2319 = vmatmul.mubr.f32.gmra.mrb[0].mxu0 %v2318
    %v2320 = vpop.f32.mrb[0].mxu0
    %v2321 = vadd.f32 %v2113, %v2320
    %v2322 = vpop.f32.mrb[0].mxu0
    %2323 = vmatprep.mubr.f32.mxu0 0.0
    %v2324 = vand.u32 %v1335, 4294901760
    %v2325 = vsub.f32 %v1335, %v2324
    %v2326 = vand.u32 %v2325, 4294901760
    %2327 = vmatmul.mubr.f32.gmra.mrb[0].mxu0 %v2326
    %v2328 = vpop.f32.mrb[0].mxu0
    %v2329 = vadd.f32 %v2120, %v2328
    %v2330 = vpop.f32.mrb[0].mxu0
    %2331 = vdwg.mxu0
    %2332 = vmatprep.subr.mxu0 0.0
    %v2333 = vand.u32 %v1304, 4294901760
    %v2334 = vsub.f32 %v1304, %v2333
    %v2335 = vand.u32 %v2334, 4294901760
    %2336 = vmatpush1.msra.mxu0 %v2335
    %2337 = vmatprep.subr.mxu0 0.0
    %v2338 = vand.u32 %v1305, 4294901760
    %v2339 = vsub.f32 %v1305, %v2338
    %v2340 = vand.u32 %v2339, 4294901760
    %2341 = vmatpush1.msra.mxu0 %v2340
    %2342 = vmatprep.subr.mxu0 0.0
    %v2343 = vand.u32 %v1306, 4294901760
    %v2344 = vsub.f32 %v1306, %v2343
    %v2345 = vand.u32 %v2344, 4294901760
    %2346 = vmatpush1.msra.mxu0 %v2345
    %2347 = vmatprep.subr.mxu0 0.0
    %v2348 = vand.u32 %v1307, 4294901760
    %v2349 = vsub.f32 %v1307, %v2348
    %v2350 = vand.u32 %v2349, 4294901760
    %2351 = vmatpush1.msra.mxu0 %v2350
    %2352 = vmatprep.subr.mxu0 0.0
    %v2353 = vand.u32 %v1308, 4294901760
    %v2354 = vsub.f32 %v1308, %v2353
    %v2355 = vand.u32 %v2354, 4294901760
    %2356 = vmatpush1.msra.mxu0 %v2355
    %2357 = vmatprep.subr.mxu0 0.0
    %v2358 = vand.u32 %v1309, 4294901760
    %v2359 = vsub.f32 %v1309, %v2358
    %v2360 = vand.u32 %v2359, 4294901760
    %2361 = vmatpush1.msra.mxu0 %v2360
    %2362 = vmatprep.subr.mxu0 0.0
    %v2363 = vand.u32 %v1310, 4294901760
    %v2364 = vsub.f32 %v1310, %v2363
    %v2365 = vand.u32 %v2364, 4294901760
    %2366 = vmatpush1.msra.mxu0 %v2365
    %2367 = vmatprep.subr.mxu0 0.0
    %v2368 = vand.u32 %v1311, 4294901760
    %v2369 = vsub.f32 %v1311, %v2368
    %v2370 = vand.u32 %v2369, 4294901760
    %2371 = vmatpush1.msra.mxu0 %v2370
    %2372 = vmatprep.subr.mxu0 0.0
    %v2373 = vand.u32 %v1312, 4294901760
    %v2374 = vsub.f32 %v1312, %v2373
    %v2375 = vand.u32 %v2374, 4294901760
    %2376 = vmatpush1.msra.mxu0 %v2375
    %2377 = vmatprep.subr.mxu0 0.0
    %v2378 = vand.u32 %v1313, 4294901760
    %v2379 = vsub.f32 %v1313, %v2378
    %v2380 = vand.u32 %v2379, 4294901760
    %2381 = vmatpush1.msra.mxu0 %v2380
    %2382 = vmatprep.subr.mxu0 0.0
    %v2383 = vand.u32 %v1314, 4294901760
    %v2384 = vsub.f32 %v1314, %v2383
    %v2385 = vand.u32 %v2384, 4294901760
    %2386 = vmatpush1.msra.mxu0 %v2385
    %2387 = vmatprep.subr.mxu0 0.0
    %v2388 = vand.u32 %v1315, 4294901760
    %v2389 = vsub.f32 %v1315, %v2388
    %v2390 = vand.u32 %v2389, 4294901760
    %2391 = vmatpush1.msra.mxu0 %v2390
    %2392 = vmatprep.subr.mxu0 0.0
    %v2393 = vand.u32 %v1316, 4294901760
    %v2394 = vsub.f32 %v1316, %v2393
    %v2395 = vand.u32 %v2394, 4294901760
    %2396 = vmatpush1.msra.mxu0 %v2395
    %2397 = vmatprep.subr.mxu0 0.0
    %v2398 = vand.u32 %v1317, 4294901760
    %v2399 = vsub.f32 %v1317, %v2398
    %v2400 = vand.u32 %v2399, 4294901760
    %2401 = vmatpush1.msra.mxu0 %v2400
    %2402 = vmatprep.subr.mxu0 0.0
    %v2403 = vand.u32 %v1318, 4294901760
    %v2404 = vsub.f32 %v1318, %v2403
    %v2405 = vand.u32 %v2404, 4294901760
    %2406 = vmatpush1.msra.mxu0 %v2405
    %2407 = vmatprep.subr.mxu0 0.0
    %v2408 = vand.u32 %v1319, 4294901760
    %v2409 = vsub.f32 %v1319, %v2408
    %v2410 = vand.u32 %v2409, 4294901760
    %2411 = vmatpush1.msra.mxu0 %v2410
    %2412 = vmatprep.subr.mxu0 0.0
    %2413 = vmatpush1.msra.mxu0 0.0
    %2414 = vmatprep.subr.mxu0 0.0
    %2415 = vmatpush1.msra.mxu0 0.0
    %2416 = vmatprep.subr.mxu0 0.0
    %2417 = vmatpush1.msra.mxu0 0.0
    %2418 = vmatprep.subr.mxu0 0.0
    %2419 = vmatpush1.msra.mxu0 0.0
    %2420 = vmatprep.subr.mxu0 0.0
    %2421 = vmatpush1.msra.mxu0 0.0
    %2422 = vmatprep.subr.mxu0 0.0
    %2423 = vmatpush1.msra.mxu0 0.0
    %2424 = vmatprep.subr.mxu0 0.0
    %2425 = vmatpush1.msra.mxu0 0.0
    %2426 = vmatprep.subr.mxu0 0.0
    %2427 = vmatpush1.msra.mxu0 0.0
    %2428 = vmatprep.subr.mxu0 0.0
    %2429 = vmatpush1.msra.mxu0 0.0
    %2430 = vmatprep.subr.mxu0 0.0
    %2431 = vmatpush1.msra.mxu0 0.0
    %2432 = vmatprep.subr.mxu0 0.0
    %2433 = vmatpush1.msra.mxu0 0.0
    %2434 = vmatprep.subr.mxu0 0.0
    %2435 = vmatpush1.msra.mxu0 0.0
    %2436 = vmatprep.subr.mxu0 0.0
    %2437 = vmatpush1.msra.mxu0 0.0
    %2438 = vmatprep.subr.mxu0 0.0
    %2439 = vmatpush1.msra.mxu0 0.0
    %2440 = vmatprep.subr.mxu0 0.0
    %2441 = vmatpush1.msra.mxu0 0.0
    %2442 = vmatprep.subr.mxu0 0.0
    %2443 = vmatpush1.msra.mxu0 0.0
    %2444 = vmatprep.mubr.f32.mxu0 0.0
    %v2445 = vand.u32 %v1320, 4294901760
    %2446 = vmatmul.mubr.f32.gmra.mrb[0].mxu0 %v2445
    %v2447 = vpop.f32.mrb[0].mxu0
    %v2448 = vadd.f32 %v2209, %v2447
    %v2449 = vpop.f32.mrb[0].mxu0
    %2450 = vmatprep.mubr.f32.mxu0 0.0
    %v2451 = vand.u32 %v1321, 4294901760
    %2452 = vmatmul.mubr.f32.gmra.mrb[0].mxu0 %v2451
    %v2453 = vpop.f32.mrb[0].mxu0
    %v2454 = vadd.f32 %v2217, %v2453
    %v2455 = vpop.f32.mrb[0].mxu0
    %2456 = vmatprep.mubr.f32.mxu0 0.0
    %v2457 = vand.u32 %v1322, 4294901760
    %2458 = vmatmul.mubr.f32.gmra.mrb[0].mxu0 %v2457
    %v2459 = vpop.f32.mrb[0].mxu0
    %v2460 = vadd.f32 %v2225, %v2459
    %v2461 = vpop.f32.mrb[0].mxu0
    %2462 = vmatprep.mubr.f32.mxu0 0.0
    %v2463 = vand.u32 %v1323, 4294901760
    %2464 = vmatmul.mubr.f32.gmra.mrb[0].mxu0 %v2463
    %v2465 = vpop.f32.mrb[0].mxu0
    %v2466 = vadd.f32 %v2233, %v2465
    %v2467 = vpop.f32.mrb[0].mxu0
    %2468 = vmatprep.mubr.f32.mxu0 0.0
    %v2469 = vand.u32 %v1324, 4294901760
    %2470 = vmatmul.mubr.f32.gmra.mrb[0].mxu0 %v2469
    %v2471 = vpop.f32.mrb[0].mxu0
    %v2472 = vadd.f32 %v2241, %v2471
    %v2473 = vpop.f32.mrb[0].mxu0
    %2474 = vmatprep.mubr.f32.mxu0 0.0
    %v2475 = vand.u32 %v1325, 4294901760
    %2476 = vmatmul.mubr.f32.gmra.mrb[0].mxu0 %v2475
    %v2477 = vpop.f32.mrb[0].mxu0
    %v2478 = vadd.f32 %v2249, %v2477
    %v2479 = vpop.f32.mrb[0].mxu0
    %2480 = vmatprep.mubr.f32.mxu0 0.0
    %v2481 = vand.u32 %v1326, 4294901760
    %2482 = vmatmul.mubr.f32.gmra.mrb[0].mxu0 %v2481
    %v2483 = vpop.f32.mrb[0].mxu0
    %v2484 = vadd.f32 %v2257, %v2483
    %v2485 = vpop.f32.mrb[0].mxu0
    %2486 = vmatprep.mubr.f32.mxu0 0.0
    %v2487 = vand.u32 %v1327, 4294901760
    %2488 = vmatmul.mubr.f32.gmra.mrb[0].mxu0 %v2487
    %v2489 = vpop.f32.mrb[0].mxu0
    %v2490 = vadd.f32 %v2265, %v2489
    %v2491 = vpop.f32.mrb[0].mxu0
    %2492 = vmatprep.mubr.f32.mxu0 0.0
    %v2493 = vand.u32 %v1328, 4294901760
    %2494 = vmatmul.mubr.f32.gmra.mrb[0].mxu0 %v2493
    %v2495 = vpop.f32.mrb[0].mxu0
    %v2496 = vadd.f32 %v2273, %v2495
    %v2497 = vpop.f32.mrb[0].mxu0
    %2498 = vmatprep.mubr.f32.mxu0 0.0
    %v2499 = vand.u32 %v1329, 4294901760
    %2500 = vmatmul.mubr.f32.gmra.mrb[0].mxu0 %v2499
    %v2501 = vpop.f32.mrb[0].mxu0
    %v2502 = vadd.f32 %v2281, %v2501
    %v2503 = vpop.f32.mrb[0].mxu0
    %2504 = vmatprep.mubr.f32.mxu0 0.0
    %v2505 = vand.u32 %v1330, 4294901760
    %2506 = vmatmul.mubr.f32.gmra.mrb[0].mxu0 %v2505
    %v2507 = vpop.f32.mrb[0].mxu0
    %v2508 = vadd.f32 %v2289, %v2507
    %v2509 = vpop.f32.mrb[0].mxu0
    %2510 = vmatprep.mubr.f32.mxu0 0.0
    %v2511 = vand.u32 %v1331, 4294901760
    %2512 = vmatmul.mubr.f32.gmra.mrb[0].mxu0 %v2511
    %v2513 = vpop.f32.mrb[0].mxu0
    %v2514 = vadd.f32 %v2297, %v2513
    %v2515 = vpop.f32.mrb[0].mxu0
    %2516 = vmatprep.mubr.f32.mxu0 0.0
    %v2517 = vand.u32 %v1332, 4294901760
    %2518 = vmatmul.mubr.f32.gmra.mrb[0].mxu0 %v2517
    %v2519 = vpop.f32.mrb[0].mxu0
    %v2520 = vadd.f32 %v2305, %v2519
    %v2521 = vpop.f32.mrb[0].mxu0
    %2522 = vmatprep.mubr.f32.mxu0 0.0
    %v2523 = vand.u32 %v1333, 4294901760
    %2524 = vmatmul.mubr.f32.gmra.mrb[0].mxu0 %v2523
    %v2525 = vpop.f32.mrb[0].mxu0
    %v2526 = vadd.f32 %v2313, %v2525
    %v2527 = vpop.f32.mrb[0].mxu0
    %2528 = vmatprep.mubr.f32.mxu0 0.0
    %v2529 = vand.u32 %v1334, 4294901760
    %2530 = vmatmul.mubr.f32.gmra.mrb[0].mxu0 %v2529
    %v2531 = vpop.f32.mrb[0].mxu0
    %v2532 = vadd.f32 %v2321, %v2531
    %v2533 = vpop.f32.mrb[0].mxu0
    %2534 = vmatprep.mubr.f32.mxu0 0.0
    %v2535 = vand.u32 %v1335, 4294901760
    %2536 = vmatmul.mubr.f32.gmra.mrb[0].mxu0 %v2535
    %v2537 = vpop.f32.mrb[0].mxu0
    %v2538 = vadd.f32 %v2329, %v2537
    %v2539 = vpop.f32.mrb[0].mxu0
    %2540 = vdwg.mxu0
    %2541 = vmatprep.subr.mxu0 0.0
    %v2542 = vand.u32 %v1304, 4294901760
    %2543 = vmatpush1.msra.mxu0 %v2542
    %2544 = vmatprep.subr.mxu0 0.0
    %v2545 = vand.u32 %v1305, 4294901760
    %2546 = vmatpush1.msra.mxu0 %v2545
    %2547 = vmatprep.subr.mxu0 0.0
    %v2548 = vand.u32 %v1306, 4294901760
    %2549 = vmatpush1.msra.mxu0 %v2548
    %2550 = vmatprep.subr.mxu0 0.0
    %v2551 = vand.u32 %v1307, 4294901760
    %2552 = vmatpush1.msra.mxu0 %v2551
    %2553 = vmatprep.subr.mxu0 0.0
    %v2554 = vand.u32 %v1308, 4294901760
    %2555 = vmatpush1.msra.mxu0 %v2554
    %2556 = vmatprep.subr.mxu0 0.0
    %v2557 = vand.u32 %v1309, 4294901760
    %2558 = vmatpush1.msra.mxu0 %v2557
    %2559 = vmatprep.subr.mxu0 0.0
    %v2560 = vand.u32 %v1310, 4294901760
    %2561 = vmatpush1.msra.mxu0 %v2560
    %2562 = vmatprep.subr.mxu0 0.0
    %v2563 = vand.u32 %v1311, 4294901760
    %2564 = vmatpush1.msra.mxu0 %v2563
    %2565 = vmatprep.subr.mxu0 0.0
    %v2566 = vand.u32 %v1312, 4294901760
    %2567 = vmatpush1.msra.mxu0 %v2566
    %2568 = vmatprep.subr.mxu0 0.0
    %v2569 = vand.u32 %v1313, 4294901760
    %2570 = vmatpush1.msra.mxu0 %v2569
    %2571 = vmatprep.subr.mxu0 0.0
    %v2572 = vand.u32 %v1314, 4294901760
    %2573 = vmatpush1.msra.mxu0 %v2572
    %2574 = vmatprep.subr.mxu0 0.0
    %v2575 = vand.u32 %v1315, 4294901760
    %2576 = vmatpush1.msra.mxu0 %v2575
    %2577 = vmatprep.subr.mxu0 0.0
    %v2578 = vand.u32 %v1316, 4294901760
    %2579 = vmatpush1.msra.mxu0 %v2578
    %2580 = vmatprep.subr.mxu0 0.0
    %v2581 = vand.u32 %v1317, 4294901760
    %2582 = vmatpush1.msra.mxu0 %v2581
    %2583 = vmatprep.subr.mxu0 0.0
    %v2584 = vand.u32 %v1318, 4294901760
    %2585 = vmatpush1.msra.mxu0 %v2584
    %2586 = vmatprep.subr.mxu0 0.0
    %v2587 = vand.u32 %v1319, 4294901760
    %2588 = vmatpush1.msra.mxu0 %v2587
    %2589 = vmatprep.subr.mxu0 0.0
    %2590 = vmatpush1.msra.mxu0 0.0
    %2591 = vmatprep.subr.mxu0 0.0
    %2592 = vmatpush1.msra.mxu0 0.0
    %2593 = vmatprep.subr.mxu0 0.0
    %2594 = vmatpush1.msra.mxu0 0.0
    %2595 = vmatprep.subr.mxu0 0.0
    %2596 = vmatpush1.msra.mxu0 0.0
    %2597 = vmatprep.subr.mxu0 0.0
    %2598 = vmatpush1.msra.mxu0 0.0
    %2599 = vmatprep.subr.mxu0 0.0
    %2600 = vmatpush1.msra.mxu0 0.0
    %2601 = vmatprep.subr.mxu0 0.0
    %2602 = vmatpush1.msra.mxu0 0.0
    %2603 = vmatprep.subr.mxu0 0.0
    %2604 = vmatpush1.msra.mxu0 0.0
    %2605 = vmatprep.subr.mxu0 0.0
    %2606 = vmatpush1.msra.mxu0 0.0
    %2607 = vmatprep.subr.mxu0 0.0
    %2608 = vmatpush1.msra.mxu0 0.0
    %2609 = vmatprep.subr.mxu0 0.0
    %2610 = vmatpush1.msra.mxu0 0.0
    %2611 = vmatprep.subr.mxu0 0.0
    %2612 = vmatpush1.msra.mxu0 0.0
    %2613 = vmatprep.subr.mxu0 0.0
    %2614 = vmatpush1.msra.mxu0 0.0
    %2615 = vmatprep.subr.mxu0 0.0
    %2616 = vmatpush1.msra.mxu0 0.0
    %2617 = vmatprep.subr.mxu0 0.0
    %2618 = vmatpush1.msra.mxu0 0.0
    %2619 = vmatprep.subr.mxu0 0.0
    %2620 = vmatpush1.msra.mxu0 0.0
    %2621 = vmatprep.mubr.f32.mxu0 0.0
    %v2622 = vand.u32 %v1320, 4294901760
    %2623 = vmatmul.mubr.f32.gmra.mrb[0].mxu0 %v2622
    %v2624 = vpop.f32.mrb[0].mxu0
    %v2625 = vadd.f32 %v2448, %v2624
    %v2626 = vpop.f32.mrb[0].mxu0
    %2627 = vmatprep.mubr.f32.mxu0 0.0
    %v2628 = vand.u32 %v1321, 4294901760
    %2629 = vmatmul.mubr.f32.gmra.mrb[0].mxu0 %v2628
    %v2630 = vpop.f32.mrb[0].mxu0
    %v2631 = vadd.f32 %v2454, %v2630
    %v2632 = vpop.f32.mrb[0].mxu0
    %2633 = vmatprep.mubr.f32.mxu0 0.0
    %v2634 = vand.u32 %v1322, 4294901760
    %2635 = vmatmul.mubr.f32.gmra.mrb[0].mxu0 %v2634
    %v2636 = vpop.f32.mrb[0].mxu0
    %v2637 = vadd.f32 %v2460, %v2636
    %v2638 = vpop.f32.mrb[0].mxu0
    %2639 = vmatprep.mubr.f32.mxu0 0.0
    %v2640 = vand.u32 %v1323, 4294901760
    %2641 = vmatmul.mubr.f32.gmra.mrb[0].mxu0 %v2640
    %v2642 = vpop.f32.mrb[0].mxu0
    %v2643 = vadd.f32 %v2466, %v2642
    %v2644 = vpop.f32.mrb[0].mxu0
    %2645 = vmatprep.mubr.f32.mxu0 0.0
    %v2646 = vand.u32 %v1324, 4294901760
    %2647 = vmatmul.mubr.f32.gmra.mrb[0].mxu0 %v2646
    %v2648 = vpop.f32.mrb[0].mxu0
    %v2649 = vadd.f32 %v2472, %v2648
    %v2650 = vpop.f32.mrb[0].mxu0
    %2651 = vmatprep.mubr.f32.mxu0 0.0
    %v2652 = vand.u32 %v1325, 4294901760
    %2653 = vmatmul.mubr.f32.gmra.mrb[0].mxu0 %v2652
    %v2654 = vpop.f32.mrb[0].mxu0
    %v2655 = vadd.f32 %v2478, %v2654
    %v2656 = vpop.f32.mrb[0].mxu0
    %2657 = vmatprep.mubr.f32.mxu0 0.0
    %v2658 = vand.u32 %v1326, 4294901760
    %2659 = vmatmul.mubr.f32.gmra.mrb[0].mxu0 %v2658
    %v2660 = vpop.f32.mrb[0].mxu0
    %v2661 = vadd.f32 %v2484, %v2660
    %v2662 = vpop.f32.mrb[0].mxu0
    %2663 = vmatprep.mubr.f32.mxu0 0.0
    %v2664 = vand.u32 %v1327, 4294901760
    %2665 = vmatmul.mubr.f32.gmra.mrb[0].mxu0 %v2664
    %v2666 = vpop.f32.mrb[0].mxu0
    %v2667 = vadd.f32 %v2490, %v2666
    %v2668 = vpop.f32.mrb[0].mxu0
    %2669 = vmatprep.mubr.f32.mxu0 0.0
    %v2670 = vand.u32 %v1328, 4294901760
    %2671 = vmatmul.mubr.f32.gmra.mrb[0].mxu0 %v2670
    %v2672 = vpop.f32.mrb[0].mxu0
    %v2673 = vadd.f32 %v2496, %v2672
    %v2674 = vpop.f32.mrb[0].mxu0
    %2675 = vmatprep.mubr.f32.mxu0 0.0
    %v2676 = vand.u32 %v1329, 4294901760
    %2677 = vmatmul.mubr.f32.gmra.mrb[0].mxu0 %v2676
    %v2678 = vpop.f32.mrb[0].mxu0
    %v2679 = vadd.f32 %v2502, %v2678
    %v2680 = vpop.f32.mrb[0].mxu0
    %2681 = vmatprep.mubr.f32.mxu0 0.0
    %v2682 = vand.u32 %v1330, 4294901760
    %2683 = vmatmul.mubr.f32.gmra.mrb[0].mxu0 %v2682
    %v2684 = vpop.f32.mrb[0].mxu0
    %v2685 = vadd.f32 %v2508, %v2684
    %v2686 = vpop.f32.mrb[0].mxu0
    %2687 = vmatprep.mubr.f32.mxu0 0.0
    %v2688 = vand.u32 %v1331, 4294901760
    %2689 = vmatmul.mubr.f32.gmra.mrb[0].mxu0 %v2688
    %v2690 = vpop.f32.mrb[0].mxu0
    %v2691 = vadd.f32 %v2514, %v2690
    %v2692 = vpop.f32.mrb[0].mxu0
    %2693 = vmatprep.mubr.f32.mxu0 0.0
    %v2694 = vand.u32 %v1332, 4294901760
    %2695 = vmatmul.mubr.f32.gmra.mrb[0].mxu0 %v2694
    %v2696 = vpop.f32.mrb[0].mxu0
    %v2697 = vadd.f32 %v2520, %v2696
    %v2698 = vpop.f32.mrb[0].mxu0
    %2699 = vmatprep.mubr.f32.mxu0 0.0
    %v2700 = vand.u32 %v1333, 4294901760
    %2701 = vmatmul.mubr.f32.gmra.mrb[0].mxu0 %v2700
    %v2702 = vpop.f32.mrb[0].mxu0
    %v2703 = vadd.f32 %v2526, %v2702
    %v2704 = vpop.f32.mrb[0].mxu0
    %2705 = vmatprep.mubr.f32.mxu0 0.0
    %v2706 = vand.u32 %v1334, 4294901760
    %2707 = vmatmul.mubr.f32.gmra.mrb[0].mxu0 %v2706
    %v2708 = vpop.f32.mrb[0].mxu0
    %v2709 = vadd.f32 %v2532, %v2708
    %v2710 = vpop.f32.mrb[0].mxu0
    %2711 = vmatprep.mubr.f32.mxu0 0.0
    %v2712 = vand.u32 %v1335, 4294901760
    %2713 = vmatmul.mubr.f32.gmra.mrb[0].mxu0 %v2712
    %v2714 = vpop.f32.mrb[0].mxu0
    %v2715 = vadd.f32 %v2538, %v2714
    %v2716 = vpop.f32.mrb[0].mxu0
    %2717 = vdwg.mxu0
    %v2718 = vtanh.pop %v2625
    %v2719 = vtanh.pop %v2631
    %v2720 = vtanh.pop %v2637
    %v2721 = vtanh.pop %v2643
    %v2722 = vtanh.pop %v2649
    %v2723 = vtanh.pop %v2655
    %v2724 = vtanh.pop %v2661
    %v2725 = vtanh.pop %v2667
    %v2726 = vtanh.pop %v2673
    %v2727 = vtanh.pop %v2679
    %v2728 = vtanh.pop %v2685
    %v2729 = vtanh.pop %v2691
    %v2730 = vtanh.pop %v2697
    %v2731 = vtanh.pop %v2703
    %v2732 = vtanh.pop %v2709
    %v2733 = vtanh.pop %v2715
    %v2734 = vld [vmem:[%s5] sm:$0xff]
    %v2735 = vld [vmem:[%s5 + $0x8] sm:$0xff]
    %v2736 = vld [vmem:[%s5 + $0x10] sm:$0xff]
    %v2737 = vld [vmem:[%s5 + $0x18] sm:$0xff]
    %v2738 = vld [vmem:[%s5 + $0x20] sm:$0xff]
    %v2739 = vld [vmem:[%s5 + $0x28] sm:$0xff]
    %v2740 = vld [vmem:[%s5 + $0x30] sm:$0xff]
    %v2741 = vld [vmem:[%s5 + $0x38] sm:$0xff]
    %v2742 = vld [vmem:[%s5 + $0x40] sm:$0xff]
    %v2743 = vld [vmem:[%s5 + $0x48] sm:$0xff]
    %v2744 = vld [vmem:[%s5 + $0x50] sm:$0xff]
    %v2745 = vld [vmem:[%s5 + $0x58] sm:$0xff]
    %v2746 = vld [vmem:[%s5 + $0x60] sm:$0xff]
    %v2747 = vld [vmem:[%s5 + $0x68] sm:$0xff]
    %v2748 = vld [vmem:[%s5 + $0x70] sm:$0xff]
    %v2749 = vld [vmem:[%s5 + $0x78] sm:$0xff]
    %v2750 = vld [vmem:[%s6] sm:$0xff]
    %v2751 = vld [vmem:[%s6 + $0x8] sm:$0xff]
    %v2752 = vld [vmem:[%s6 + $0x10] sm:$0xff]
    %v2753 = vld [vmem:[%s6 + $0x18] sm:$0xff]
    %v2754 = vld [vmem:[%s6 + $0x20] sm:$0xff]
    %v2755 = vld [vmem:[%s6 + $0x28] sm:$0xff]
    %v2756 = vld [vmem:[%s6 + $0x30] sm:$0xff]
    %v2757 = vld [vmem:[%s6 + $0x38] sm:$0xff]
    %v2758 = vld [vmem:[%s6 + $0x40] sm:$0xff]
    %v2759 = vld [vmem:[%s6 + $0x48] sm:$0xff]
    %v2760 = vld [vmem:[%s6 + $0x50] sm:$0xff]
    %v2761 = vld [vmem:[%s6 + $0x58] sm:$0xff]
    %v2762 = vld [vmem:[%s6 + $0x60] sm:$0xff]
    %v2763 = vld [vmem:[%s6 + $0x68] sm:$0xff]
    %v2764 = vld [vmem:[%s6 + $0x70] sm:$0xff]
    %v2765 = vld [vmem:[%s6 + $0x78] sm:$0xff]
    %2767 = vset.pattern.permute.xlu0 0
    %2768 = vperm.xlu0 %2767, %v2750
    %v2769 = vpop.permute.xlu0 %2768
    %2772 = vset.pattern.permute.xlu0 0
    %2773 = vperm.xlu0 %2772, %v2751
    %v2774 = vpop.permute.xlu0 %2773
    %2777 = vset.pattern.permute.xlu0 0
    %2778 = vperm.xlu0 %2777, %v2752
    %v2779 = vpop.permute.xlu0 %2778
    %2782 = vset.pattern.permute.xlu0 0
    %2783 = vperm.xlu0 %2782, %v2753
    %v2784 = vpop.permute.xlu0 %2783
    %2787 = vset.pattern.permute.xlu0 0
    %2788 = vperm.xlu0 %2787, %v2754
    %v2789 = vpop.permute.xlu0 %2788
    %2792 = vset.pattern.permute.xlu0 0
    %2793 = vperm.xlu0 %2792, %v2755
    %v2794 = vpop.permute.xlu0 %2793
    %2797 = vset.pattern.permute.xlu0 0
    %2798 = vperm.xlu0 %2797, %v2756
    %v2799 = vpop.permute.xlu0 %2798
    %2802 = vset.pattern.permute.xlu0 0
    %2803 = vperm.xlu0 %2802, %v2757
    %v2804 = vpop.permute.xlu0 %2803
    %2807 = vset.pattern.permute.xlu0 0
    %2808 = vperm.xlu0 %2807, %v2758
    %v2809 = vpop.permute.xlu0 %2808
    %2812 = vset.pattern.permute.xlu0 0
    %2813 = vperm.xlu0 %2812, %v2759
    %v2814 = vpop.permute.xlu0 %2813
    %2817 = vset.pattern.permute.xlu0 0
    %2818 = vperm.xlu0 %2817, %v2760
    %v2819 = vpop.permute.xlu0 %2818
    %2822 = vset.pattern.permute.xlu0 0
    %2823 = vperm.xlu0 %2822, %v2761
    %v2824 = vpop.permute.xlu0 %2823
    %2827 = vset.pattern.permute.xlu0 0
    %2828 = vperm.xlu0 %2827, %v2762
    %v2829 = vpop.permute.xlu0 %2828
    %2832 = vset.pattern.permute.xlu0 0
    %2833 = vperm.xlu0 %2832, %v2763
    %v2834 = vpop.permute.xlu0 %2833
    %2837 = vset.pattern.permute.xlu0 0
    %2838 = vperm.xlu0 %2837, %v2764
    %v2839 = vpop.permute.xlu0 %2838
    %2842 = vset.pattern.permute.xlu0 0
    %2843 = vperm.xlu0 %2842, %v2765
    %v2844 = vpop.permute.xlu0 %2843
    %2846 = vmatprep.subr.mxu0 0.0
    %v2847 = vand.u32 %v2718, 4294901760
    %2848 = vmatpush1.msra.mxu0 %v2847
    %2849 = vmatprep.subr.mxu0 0.0
    %v2850 = vand.u32 %v2719, 4294901760
    %2851 = vmatpush1.msra.mxu0 %v2850
    %2852 = vmatprep.subr.mxu0 0.0
    %v2853 = vand.u32 %v2720, 4294901760
    %2854 = vmatpush1.msra.mxu0 %v2853
    %2855 = vmatprep.subr.mxu0 0.0
    %v2856 = vand.u32 %v2721, 4294901760
    %2857 = vmatpush1.msra.mxu0 %v2856
    %2858 = vmatprep.subr.mxu0 0.0
    %v2859 = vand.u32 %v2722, 4294901760
    %2860 = vmatpush1.msra.mxu0 %v2859
    %2861 = vmatprep.subr.mxu0 0.0
    %v2862 = vand.u32 %v2723, 4294901760
    %2863 = vmatpush1.msra.mxu0 %v2862
    %2864 = vmatprep.subr.mxu0 0.0
    %v2865 = vand.u32 %v2724, 4294901760
    %2866 = vmatpush1.msra.mxu0 %v2865
    %2867 = vmatprep.subr.mxu0 0.0
    %v2868 = vand.u32 %v2725, 4294901760
    %2869 = vmatpush1.msra.mxu0 %v2868
    %2870 = vmatprep.subr.mxu0 0.0
    %v2871 = vand.u32 %v2726, 4294901760
    %2872 = vmatpush1.msra.mxu0 %v2871
    %2873 = vmatprep.subr.mxu0 0.0
    %v2874 = vand.u32 %v2727, 4294901760
    %2875 = vmatpush1.msra.mxu0 %v2874
    %2876 = vmatprep.subr.mxu0 0.0
    %v2877 = vand.u32 %v2728, 4294901760
    %2878 = vmatpush1.msra.mxu0 %v2877
    %2879 = vmatprep.subr.mxu0 0.0
    %v2880 = vand.u32 %v2729, 4294901760
    %2881 = vmatpush1.msra.mxu0 %v2880
    %2882 = vmatprep.subr.mxu0 0.0
    %v2883 = vand.u32 %v2730, 4294901760
    %2884 = vmatpush1.msra.mxu0 %v2883
    %2885 = vmatprep.subr.mxu0 0.0
    %v2886 = vand.u32 %v2731, 4294901760
    %2887 = vmatpush1.msra.mxu0 %v2886
    %2888 = vmatprep.subr.mxu0 0.0
    %v2889 = vand.u32 %v2732, 4294901760
    %2890 = vmatpush1.msra.mxu0 %v2889
    %2891 = vmatprep.subr.mxu0 0.0
    %v2892 = vand.u32 %v2733, 4294901760
    %2893 = vmatpush1.msra.mxu0 %v2892
    %2894 = vmatprep.subr.mxu0 0.0
    %2895 = vmatpush1.msra.mxu0 0.0
    %2896 = vmatprep.subr.mxu0 0.0
    %2897 = vmatpush1.msra.mxu0 0.0
    %2898 = vmatprep.subr.mxu0 0.0
    %2899 = vmatpush1.msra.mxu0 0.0
    %2900 = vmatprep.subr.mxu0 0.0
    %2901 = vmatpush1.msra.mxu0 0.0
    %2902 = vmatprep.subr.mxu0 0.0
    %2903 = vmatpush1.msra.mxu0 0.0
    %2904 = vmatprep.subr.mxu0 0.0
    %2905 = vmatpush1.msra.mxu0 0.0
    %2906 = vmatprep.subr.mxu0 0.0
    %2907 = vmatpush1.msra.mxu0 0.0
    %2908 = vmatprep.subr.mxu0 0.0
    %2909 = vmatpush1.msra.mxu0 0.0
    %2910 = vmatprep.subr.mxu0 0.0
    %2911 = vmatpush1.msra.mxu0 0.0
    %2912 = vmatprep.subr.mxu0 0.0
    %2913 = vmatpush1.msra.mxu0 0.0
    %2914 = vmatprep.subr.mxu0 0.0
    %2915 = vmatpush1.msra.mxu0 0.0
    %2916 = vmatprep.subr.mxu0 0.0
    %2917 = vmatpush1.msra.mxu0 0.0
    %2918 = vmatprep.subr.mxu0 0.0
    %2919 = vmatpush1.msra.mxu0 0.0
    %2920 = vmatprep.subr.mxu0 0.0
    %2921 = vmatpush1.msra.mxu0 0.0
    %2922 = vmatprep.subr.mxu0 0.0
    %2923 = vmatpush1.msra.mxu0 0.0
    %2924 = vmatprep.subr.mxu0 0.0
    %2925 = vmatpush1.msra.mxu0 0.0
    %2926 = vmatprep.mubr.f32.mxu0 0.0
    %v2927 = vand.u32 %v2734, 4294901760
    %v2928 = vsub.f32 %v2734, %v2927
    %v2929 = vand.u32 %v2928, 4294901760
    %v2930 = vsub.f32 %v2928, %v2929
    %v2931 = vand.u32 %v2930, 4294901760
    %2932 = vmatmul.mubr.f32.gmra.mrb[0].mxu0 %v2931
    %v2933 = vpop.f32.mrb[0].mxu0
    %v2934 = vadd.f32 %v2769, %v2933
    %v2935 = vpop.f32.mrb[0].mxu0
    %2936 = vmatprep.mubr.f32.mxu0 0.0
    %v2937 = vand.u32 %v2735, 4294901760
    %v2938 = vsub.f32 %v2735, %v2937
    %v2939 = vand.u32 %v2938, 4294901760
    %v2940 = vsub.f32 %v2938, %v2939
    %v2941 = vand.u32 %v2940, 4294901760
    %2942 = vmatmul.mubr.f32.gmra.mrb[0].mxu0 %v2941
    %v2943 = vpop.f32.mrb[0].mxu0
    %v2944 = vadd.f32 %v2774, %v2943
    %v2945 = vpop.f32.mrb[0].mxu0
    %2946 = vmatprep.mubr.f32.mxu0 0.0
    %v2947 = vand.u32 %v2736, 4294901760
    %v2948 = vsub.f32 %v2736, %v2947
    %v2949 = vand.u32 %v2948, 4294901760
    %v2950 = vsub.f32 %v2948, %v2949
    %v2951 = vand.u32 %v2950, 4294901760
    %2952 = vmatmul.mubr.f32.gmra.mrb[0].mxu0 %v2951
    %v2953 = vpop.f32.mrb[0].mxu0
    %v2954 = vadd.f32 %v2779, %v2953
    %v2955 = vpop.f32.mrb[0].mxu0
    %2956 = vmatprep.mubr.f32.mxu0 0.0
    %v2957 = vand.u32 %v2737, 4294901760
    %v2958 = vsub.f32 %v2737, %v2957
    %v2959 = vand.u32 %v2958, 4294901760
    %v2960 = vsub.f32 %v2958, %v2959
    %v2961 = vand.u32 %v2960, 4294901760
    %2962 = vmatmul.mubr.f32.gmra.mrb[0].mxu0 %v2961
    %v2963 = vpop.f32.mrb[0].mxu0
    %v2964 = vadd.f32 %v2784, %v2963
    %v2965 = vpop.f32.mrb[0].mxu0
    %2966 = vmatprep.mubr.f32.mxu0 0.0
    %v2967 = vand.u32 %v2738, 4294901760
    %v2968 = vsub.f32 %v2738, %v2967
    %v2969 = vand.u32 %v2968, 4294901760
    %v2970 = vsub.f32 %v2968, %v2969
    %v2971 = vand.u32 %v2970, 4294901760
    %2972 = vmatmul.mubr.f32.gmra.mrb[0].mxu0 %v2971
    %v2973 = vpop.f32.mrb[0].mxu0
    %v2974 = vadd.f32 %v2789, %v2973
    %v2975 = vpop.f32.mrb[0].mxu0
    %2976 = vmatprep.mubr.f32.mxu0 0.0
    %v2977 = vand.u32 %v2739, 4294901760
    %v2978 = vsub.f32 %v2739, %v2977
    %v2979 = vand.u32 %v2978, 4294901760
    %v2980 = vsub.f32 %v2978, %v2979
    %v2981 = vand.u32 %v2980, 4294901760
    %2982 = vmatmul.mubr.f32.gmra.mrb[0].mxu0 %v2981
    %v2983 = vpop.f32.mrb[0].mxu0
    %v2984 = vadd.f32 %v2794, %v2983
    %v2985 = vpop.f32.mrb[0].mxu0
    %2986 = vmatprep.mubr.f32.mxu0 0.0
    %v2987 = vand.u32 %v2740, 4294901760
    %v2988 = vsub.f32 %v2740, %v2987
    %v2989 = vand.u32 %v2988, 4294901760
    %v2990 = vsub.f32 %v2988, %v2989
    %v2991 = vand.u32 %v2990, 4294901760
    %2992 = vmatmul.mubr.f32.gmra.mrb[0].mxu0 %v2991
    %v2993 = vpop.f32.mrb[0].mxu0
    %v2994 = vadd.f32 %v2799, %v2993
    %v2995 = vpop.f32.mrb[0].mxu0
    %2996 = vmatprep.mubr.f32.mxu0 0.0
    %v2997 = vand.u32 %v2741, 4294901760
    %v2998 = vsub.f32 %v2741, %v2997
    %v2999 = vand.u32 %v2998, 4294901760
    %v3000 = vsub.f32 %v2998, %v2999
    %v3001 = vand.u32 %v3000, 4294901760
    %3002 = vmatmul.mubr.f32.gmra.mrb[0].mxu0 %v3001
    %v3003 = vpop.f32.mrb[0].mxu0
    %v3004 = vadd.f32 %v2804, %v3003
    %v3005 = vpop.f32.mrb[0].mxu0
    %3006 = vmatprep.mubr.f32.mxu0 0.0
    %v3007 = vand.u32 %v2742, 4294901760
    %v3008 = vsub.f32 %v2742, %v3007
    %v3009 = vand.u32 %v3008, 4294901760
    %v3010 = vsub.f32 %v3008, %v3009
    %v3011 = vand.u32 %v3010, 4294901760
    %3012 = vmatmul.mubr.f32.gmra.mrb[0].mxu0 %v3011
    %v3013 = vpop.f32.mrb[0].mxu0
    %v3014 = vadd.f32 %v2809, %v3013
    %v3015 = vpop.f32.mrb[0].mxu0
    %3016 = vmatprep.mubr.f32.mxu0 0.0
    %v3017 = vand.u32 %v2743, 4294901760
    %v3018 = vsub.f32 %v2743, %v3017
    %v3019 = vand.u32 %v3018, 4294901760
    %v3020 = vsub.f32 %v3018, %v3019
    %v3021 = vand.u32 %v3020, 4294901760
    %3022 = vmatmul.mubr.f32.gmra.mrb[0].mxu0 %v3021
    %v3023 = vpop.f32.mrb[0].mxu0
    %v3024 = vadd.f32 %v2814, %v3023
    %v3025 = vpop.f32.mrb[0].mxu0
    %3026 = vmatprep.mubr.f32.mxu0 0.0
    %v3027 = vand.u32 %v2744, 4294901760
    %v3028 = vsub.f32 %v2744, %v3027
    %v3029 = vand.u32 %v3028, 4294901760
    %v3030 = vsub.f32 %v3028, %v3029
    %v3031 = vand.u32 %v3030, 4294901760
    %3032 = vmatmul.mubr.f32.gmra.mrb[0].mxu0 %v3031
    %v3033 = vpop.f32.mrb[0].mxu0
    %v3034 = vadd.f32 %v2819, %v3033
    %v3035 = vpop.f32.mrb[0].mxu0
    %3036 = vmatprep.mubr.f32.mxu0 0.0
    %v3037 = vand.u32 %v2745, 4294901760
    %v3038 = vsub.f32 %v2745, %v3037
    %v3039 = vand.u32 %v3038, 4294901760
    %v3040 = vsub.f32 %v3038, %v3039
    %v3041 = vand.u32 %v3040, 4294901760
    %3042 = vmatmul.mubr.f32.gmra.mrb[0].mxu0 %v3041
    %v3043 = vpop.f32.mrb[0].mxu0
    %v3044 = vadd.f32 %v2824, %v3043
    %v3045 = vpop.f32.mrb[0].mxu0
    %3046 = vmatprep.mubr.f32.mxu0 0.0
    %v3047 = vand.u32 %v2746, 4294901760
    %v3048 = vsub.f32 %v2746, %v3047
    %v3049 = vand.u32 %v3048, 4294901760
    %v3050 = vsub.f32 %v3048, %v3049
    %v3051 = vand.u32 %v3050, 4294901760
    %3052 = vmatmul.mubr.f32.gmra.mrb[0].mxu0 %v3051
    %v3053 = vpop.f32.mrb[0].mxu0
    %v3054 = vadd.f32 %v2829, %v3053
    %v3055 = vpop.f32.mrb[0].mxu0
    %3056 = vmatprep.mubr.f32.mxu0 0.0
    %v3057 = vand.u32 %v2747, 4294901760
    %v3058 = vsub.f32 %v2747, %v3057
    %v3059 = vand.u32 %v3058, 4294901760
    %v3060 = vsub.f32 %v3058, %v3059
    %v3061 = vand.u32 %v3060, 4294901760
    %3062 = vmatmul.mubr.f32.gmra.mrb[0].mxu0 %v3061
    %v3063 = vpop.f32.mrb[0].mxu0
    %v3064 = vadd.f32 %v2834, %v3063
    %v3065 = vpop.f32.mrb[0].mxu0
    %3066 = vmatprep.mubr.f32.mxu0 0.0
    %v3067 = vand.u32 %v2748, 4294901760
    %v3068 = vsub.f32 %v2748, %v3067
    %v3069 = vand.u32 %v3068, 4294901760
    %v3070 = vsub.f32 %v3068, %v3069
    %v3071 = vand.u32 %v3070, 4294901760
    %3072 = vmatmul.mubr.f32.gmra.mrb[0].mxu0 %v3071
    %v3073 = vpop.f32.mrb[0].mxu0
    %v3074 = vadd.f32 %v2839, %v3073
    %v3075 = vpop.f32.mrb[0].mxu0
    %3076 = vmatprep.mubr.f32.mxu0 0.0
    %v3077 = vand.u32 %v2749, 4294901760
    %v3078 = vsub.f32 %v2749, %v3077
    %v3079 = vand.u32 %v3078, 4294901760
    %v3080 = vsub.f32 %v3078, %v3079
    %v3081 = vand.u32 %v3080, 4294901760
    %3082 = vmatmul.mubr.f32.gmra.mrb[0].mxu0 %v3081
    %v3083 = vpop.f32.mrb[0].mxu0
    %v3084 = vadd.f32 %v2844, %v3083
    %v3085 = vpop.f32.mrb[0].mxu0
    %3086 = vdwg.mxu0
    %3087 = vmatprep.subr.mxu0 0.0
    %v3088 = vand.u32 %v2718, 4294901760
    %v3089 = vsub.f32 %v2718, %v3088
    %v3090 = vand.u32 %v3089, 4294901760
    %v3091 = vsub.f32 %v3089, %v3090
    %v3092 = vand.u32 %v3091, 4294901760
    %3093 = vmatpush1.msra.mxu0 %v3092
    %3094 = vmatprep.subr.mxu0 0.0
    %v3095 = vand.u32 %v2719, 4294901760
    %v3096 = vsub.f32 %v2719, %v3095
    %v3097 = vand.u32 %v3096, 4294901760
    %v3098 = vsub.f32 %v3096, %v3097
    %v3099 = vand.u32 %v3098, 4294901760
    %3100 = vmatpush1.msra.mxu0 %v3099
    %3101 = vmatprep.subr.mxu0 0.0
    %v3102 = vand.u32 %v2720, 4294901760
    %v3103 = vsub.f32 %v2720, %v3102
    %v3104 = vand.u32 %v3103, 4294901760
    %v3105 = vsub.f32 %v3103, %v3104
    %v3106 = vand.u32 %v3105, 4294901760
    %3107 = vmatpush1.msra.mxu0 %v3106
    %3108 = vmatprep.subr.mxu0 0.0
    %v3109 = vand.u32 %v2721, 4294901760
    %v3110 = vsub.f32 %v2721, %v3109
    %v3111 = vand.u32 %v3110, 4294901760
    %v3112 = vsub.f32 %v3110, %v3111
    %v3113 = vand.u32 %v3112, 4294901760
    %3114 = vmatpush1.msra.mxu0 %v3113
    %3115 = vmatprep.subr.mxu0 0.0
    %v3116 = vand.u32 %v2722, 4294901760
    %v3117 = vsub.f32 %v2722, %v3116
    %v3118 = vand.u32 %v3117, 4294901760
    %v3119 = vsub.f32 %v3117, %v3118
    %v3120 = vand.u32 %v3119, 4294901760
    %3121 = vmatpush1.msra.mxu0 %v3120
    %3122 = vmatprep.subr.mxu0 0.0
    %v3123 = vand.u32 %v2723, 4294901760
    %v3124 = vsub.f32 %v2723, %v3123
    %v3125 = vand.u32 %v3124, 4294901760
    %v3126 = vsub.f32 %v3124, %v3125
    %v3127 = vand.u32 %v3126, 4294901760
    %3128 = vmatpush1.msra.mxu0 %v3127
    %3129 = vmatprep.subr.mxu0 0.0
    %v3130 = vand.u32 %v2724, 4294901760
    %v3131 = vsub.f32 %v2724, %v3130
    %v3132 = vand.u32 %v3131, 4294901760
    %v3133 = vsub.f32 %v3131, %v3132
    %v3134 = vand.u32 %v3133, 4294901760
    %3135 = vmatpush1.msra.mxu0 %v3134
    %3136 = vmatprep.subr.mxu0 0.0
    %v3137 = vand.u32 %v2725, 4294901760
    %v3138 = vsub.f32 %v2725, %v3137
    %v3139 = vand.u32 %v3138, 4294901760
    %v3140 = vsub.f32 %v3138, %v3139
    %v3141 = vand.u32 %v3140, 4294901760
    %3142 = vmatpush1.msra.mxu0 %v3141
    %3143 = vmatprep.subr.mxu0 0.0
    %v3144 = vand.u32 %v2726, 4294901760
    %v3145 = vsub.f32 %v2726, %v3144
    %v3146 = vand.u32 %v3145, 4294901760
    %v3147 = vsub.f32 %v3145, %v3146
    %v3148 = vand.u32 %v3147, 4294901760
    %3149 = vmatpush1.msra.mxu0 %v3148
    %3150 = vmatprep.subr.mxu0 0.0
    %v3151 = vand.u32 %v2727, 4294901760
    %v3152 = vsub.f32 %v2727, %v3151
    %v3153 = vand.u32 %v3152, 4294901760
    %v3154 = vsub.f32 %v3152, %v3153
    %v3155 = vand.u32 %v3154, 4294901760
    %3156 = vmatpush1.msra.mxu0 %v3155
    %3157 = vmatprep.subr.mxu0 0.0
    %v3158 = vand.u32 %v2728, 4294901760
    %v3159 = vsub.f32 %v2728, %v3158
    %v3160 = vand.u32 %v3159, 4294901760
    %v3161 = vsub.f32 %v3159, %v3160
    %v3162 = vand.u32 %v3161, 4294901760
    %3163 = vmatpush1.msra.mxu0 %v3162
    %3164 = vmatprep.subr.mxu0 0.0
    %v3165 = vand.u32 %v2729, 4294901760
    %v3166 = vsub.f32 %v2729, %v3165
    %v3167 = vand.u32 %v3166, 4294901760
    %v3168 = vsub.f32 %v3166, %v3167
    %v3169 = vand.u32 %v3168, 4294901760
    %3170 = vmatpush1.msra.mxu0 %v3169
    %3171 = vmatprep.subr.mxu0 0.0
    %v3172 = vand.u32 %v2730, 4294901760
    %v3173 = vsub.f32 %v2730, %v3172
    %v3174 = vand.u32 %v3173, 4294901760
    %v3175 = vsub.f32 %v3173, %v3174
    %v3176 = vand.u32 %v3175, 4294901760
    %3177 = vmatpush1.msra.mxu0 %v3176
    %3178 = vmatprep.subr.mxu0 0.0
    %v3179 = vand.u32 %v2731, 4294901760
    %v3180 = vsub.f32 %v2731, %v3179
    %v3181 = vand.u32 %v3180, 4294901760
    %v3182 = vsub.f32 %v3180, %v3181
    %v3183 = vand.u32 %v3182, 4294901760
    %3184 = vmatpush1.msra.mxu0 %v3183
    %3185 = vmatprep.subr.mxu0 0.0
    %v3186 = vand.u32 %v2732, 4294901760
    %v3187 = vsub.f32 %v2732, %v3186
    %v3188 = vand.u32 %v3187, 4294901760
    %v3189 = vsub.f32 %v3187, %v3188
    %v3190 = vand.u32 %v3189, 4294901760
    %3191 = vmatpush1.msra.mxu0 %v3190
    %3192 = vmatprep.subr.mxu0 0.0
    %v3193 = vand.u32 %v2733, 4294901760
    %v3194 = vsub.f32 %v2733, %v3193
    %v3195 = vand.u32 %v3194, 4294901760
    %v3196 = vsub.f32 %v3194, %v3195
    %v3197 = vand.u32 %v3196, 4294901760
    %3198 = vmatpush1.msra.mxu0 %v3197
    %3199 = vmatprep.subr.mxu0 0.0
    %3200 = vmatpush1.msra.mxu0 0.0
    %3201 = vmatprep.subr.mxu0 0.0
    %3202 = vmatpush1.msra.mxu0 0.0
    %3203 = vmatprep.subr.mxu0 0.0
    %3204 = vmatpush1.msra.mxu0 0.0
    %3205 = vmatprep.subr.mxu0 0.0
    %3206 = vmatpush1.msra.mxu0 0.0
    %3207 = vmatprep.subr.mxu0 0.0
    %3208 = vmatpush1.msra.mxu0 0.0
    %3209 = vmatprep.subr.mxu0 0.0
    %3210 = vmatpush1.msra.mxu0 0.0
    %3211 = vmatprep.subr.mxu0 0.0
    %3212 = vmatpush1.msra.mxu0 0.0
    %3213 = vmatprep.subr.mxu0 0.0
    %3214 = vmatpush1.msra.mxu0 0.0
    %3215 = vmatprep.subr.mxu0 0.0
    %3216 = vmatpush1.msra.mxu0 0.0
    %3217 = vmatprep.subr.mxu0 0.0
    %3218 = vmatpush1.msra.mxu0 0.0
    %3219 = vmatprep.subr.mxu0 0.0
    %3220 = vmatpush1.msra.mxu0 0.0
    %3221 = vmatprep.subr.mxu0 0.0
    %3222 = vmatpush1.msra.mxu0 0.0
    %3223 = vmatprep.subr.mxu0 0.0
    %3224 = vmatpush1.msra.mxu0 0.0
    %3225 = vmatprep.subr.mxu0 0.0
    %3226 = vmatpush1.msra.mxu0 0.0
    %3227 = vmatprep.subr.mxu0 0.0
    %3228 = vmatpush1.msra.mxu0 0.0
    %3229 = vmatprep.subr.mxu0 0.0
    %3230 = vmatpush1.msra.mxu0 0.0
    %3231 = vmatprep.mubr.f32.mxu0 0.0
    %v3232 = vand.u32 %v2734, 4294901760
    %3233 = vmatmul.mubr.f32.gmra.mrb[0].mxu0 %v3232
    %v3234 = vpop.f32.mrb[0].mxu0
    %v3235 = vadd.f32 %v2934, %v3234
    %v3236 = vpop.f32.mrb[0].mxu0
    %3237 = vmatprep.mubr.f32.mxu0 0.0
    %v3238 = vand.u32 %v2735, 4294901760
    %3239 = vmatmul.mubr.f32.gmra.mrb[0].mxu0 %v3238
    %v3240 = vpop.f32.mrb[0].mxu0
    %v3241 = vadd.f32 %v2944, %v3240
    %v3242 = vpop.f32.mrb[0].mxu0
    %3243 = vmatprep.mubr.f32.mxu0 0.0
    %v3244 = vand.u32 %v2736, 4294901760
    %3245 = vmatmul.mubr.f32.gmra.mrb[0].mxu0 %v3244
    %v3246 = vpop.f32.mrb[0].mxu0
    %v3247 = vadd.f32 %v2954, %v3246
    %v3248 = vpop.f32.mrb[0].mxu0
    %3249 = vmatprep.mubr.f32.mxu0 0.0
    %v3250 = vand.u32 %v2737, 4294901760
    %3251 = vmatmul.mubr.f32.gmra.mrb[0].mxu0 %v3250
    %v3252 = vpop.f32.mrb[0].mxu0
    %v3253 = vadd.f32 %v2964, %v3252
    %v3254 = vpop.f32.mrb[0].mxu0
    %3255 = vmatprep.mubr.f32.mxu0 0.0
    %v3256 = vand.u32 %v2738, 4294901760
    %3257 = vmatmul.mubr.f32.gmra.mrb[0].mxu0 %v3256
    %v3258 = vpop.f32.mrb[0].mxu0
    %v3259 = vadd.f32 %v2974, %v3258
    %v3260 = vpop.f32.mrb[0].mxu0
    %3261 = vmatprep.mubr.f32.mxu0 0.0
    %v3262 = vand.u32 %v2739, 4294901760
    %3263 = vmatmul.mubr.f32.gmra.mrb[0].mxu0 %v3262
    %v3264 = vpop.f32.mrb[0].mxu0
    %v3265 = vadd.f32 %v2984, %v3264
    %v3266 = vpop.f32.mrb[0].mxu0
    %3267 = vmatprep.mubr.f32.mxu0 0.0
    %v3268 = vand.u32 %v2740, 4294901760
    %3269 = vmatmul.mubr.f32.gmra.mrb[0].mxu0 %v3268
    %v3270 = vpop.f32.mrb[0].mxu0
    %v3271 = vadd.f32 %v2994, %v3270
    %v3272 = vpop.f32.mrb[0].mxu0
    %3273 = vmatprep.mubr.f32.mxu0 0.0
    %v3274 = vand.u32 %v2741, 4294901760
    %3275 = vmatmul.mubr.f32.gmra.mrb[0].mxu0 %v3274
    %v3276 = vpop.f32.mrb[0].mxu0
    %v3277 = vadd.f32 %v3004, %v3276
    %v3278 = vpop.f32.mrb[0].mxu0
    %3279 = vmatprep.mubr.f32.mxu0 0.0
    %v3280 = vand.u32 %v2742, 4294901760
    %3281 = vmatmul.mubr.f32.gmra.mrb[0].mxu0 %v3280
    %v3282 = vpop.f32.mrb[0].mxu0
    %v3283 = vadd.f32 %v3014, %v3282
    %v3284 = vpop.f32.mrb[0].mxu0
    %3285 = vmatprep.mubr.f32.mxu0 0.0
    %v3286 = vand.u32 %v2743, 4294901760
    %3287 = vmatmul.mubr.f32.gmra.mrb[0].mxu0 %v3286
    %v3288 = vpop.f32.mrb[0].mxu0
    %v3289 = vadd.f32 %v3024, %v3288
    %v3290 = vpop.f32.mrb[0].mxu0
    %3291 = vmatprep.mubr.f32.mxu0 0.0
    %v3292 = vand.u32 %v2744, 4294901760
    %3293 = vmatmul.mubr.f32.gmra.mrb[0].mxu0 %v3292
    %v3294 = vpop.f32.mrb[0].mxu0
    %v3295 = vadd.f32 %v3034, %v3294
    %v3296 = vpop.f32.mrb[0].mxu0
    %3297 = vmatprep.mubr.f32.mxu0 0.0
    %v3298 = vand.u32 %v2745, 4294901760
    %3299 = vmatmul.mubr.f32.gmra.mrb[0].mxu0 %v3298
    %v3300 = vpop.f32.mrb[0].mxu0
    %v3301 = vadd.f32 %v3044, %v3300
    %v3302 = vpop.f32.mrb[0].mxu0
    %3303 = vmatprep.mubr.f32.mxu0 0.0
    %v3304 = vand.u32 %v2746, 4294901760
    %3305 = vmatmul.mubr.f32.gmra.mrb[0].mxu0 %v3304
    %v3306 = vpop.f32.mrb[0].mxu0
    %v3307 = vadd.f32 %v3054, %v3306
    %v3308 = vpop.f32.mrb[0].mxu0
    %3309 = vmatprep.mubr.f32.mxu0 0.0
    %v3310 = vand.u32 %v2747, 4294901760
    %3311 = vmatmul.mubr.f32.gmra.mrb[0].mxu0 %v3310
    %v3312 = vpop.f32.mrb[0].mxu0
    %v3313 = vadd.f32 %v3064, %v3312
    %v3314 = vpop.f32.mrb[0].mxu0
    %3315 = vmatprep.mubr.f32.mxu0 0.0
    %v3316 = vand.u32 %v2748, 4294901760
    %3317 = vmatmul.mubr.f32.gmra.mrb[0].mxu0 %v3316
    %v3318 = vpop.f32.mrb[0].mxu0
    %v3319 = vadd.f32 %v3074, %v3318
    %v3320 = vpop.f32.mrb[0].mxu0
    %3321 = vmatprep.mubr.f32.mxu0 0.0
    %v3322 = vand.u32 %v2749, 4294901760
    %3323 = vmatmul.mubr.f32.gmra.mrb[0].mxu0 %v3322
    %v3324 = vpop.f32.mrb[0].mxu0
    %v3325 = vadd.f32 %v3084, %v3324
    %v3326 = vpop.f32.mrb[0].mxu0
    %3327 = vdwg.mxu0
    %3328 = vmatprep.subr.mxu0 0.0
    %v3329 = vand.u32 %v2718, 4294901760
    %v3330 = vsub.f32 %v2718, %v3329
    %3331 = vmatpush1.msra.mxu0 %v3330
    %3332 = vmatprep.subr.mxu0 0.0
    %v3333 = vand.u32 %v2719, 4294901760
    %v3334 = vsub.f32 %v2719, %v3333
    %3335 = vmatpush1.msra.mxu0 %v3334
    %3336 = vmatprep.subr.mxu0 0.0
    %v3337 = vand.u32 %v2720, 4294901760
    %v3338 = vsub.f32 %v2720, %v3337
    %3339 = vmatpush1.msra.mxu0 %v3338
    %3340 = vmatprep.subr.mxu0 0.0
    %v3341 = vand.u32 %v2721, 4294901760
    %v3342 = vsub.f32 %v2721, %v3341
    %3343 = vmatpush1.msra.mxu0 %v3342
    %3344 = vmatprep.subr.mxu0 0.0
    %v3345 = vand.u32 %v2722, 4294901760
    %v3346 = vsub.f32 %v2722, %v3345
    %3347 = vmatpush1.msra.mxu0 %v3346
    %3348 = vmatprep.subr.mxu0 0.0
    %v3349 = vand.u32 %v2723, 4294901760
    %v3350 = vsub.f32 %v2723, %v3349
    %3351 = vmatpush1.msra.mxu0 %v3350
    %3352 = vmatprep.subr.mxu0 0.0
    %v3353 = vand.u32 %v2724, 4294901760
    %v3354 = vsub.f32 %v2724, %v3353
    %3355 = vmatpush1.msra.mxu0 %v3354
    %3356 = vmatprep.subr.mxu0 0.0
    %v3357 = vand.u32 %v2725, 4294901760
    %v3358 = vsub.f32 %v2725, %v3357
    %3359 = vmatpush1.msra.mxu0 %v3358
    %3360 = vmatprep.subr.mxu0 0.0
    %v3361 = vand.u32 %v2726, 4294901760
    %v3362 = vsub.f32 %v2726, %v3361
    %3363 = vmatpush1.msra.mxu0 %v3362
    %3364 = vmatprep.subr.mxu0 0.0
    %v3365 = vand.u32 %v2727, 4294901760
    %v3366 = vsub.f32 %v2727, %v3365
    %3367 = vmatpush1.msra.mxu0 %v3366
    %3368 = vmatprep.subr.mxu0 0.0
    %v3369 = vand.u32 %v2728, 4294901760
    %v3370 = vsub.f32 %v2728, %v3369
    %3371 = vmatpush1.msra.mxu0 %v3370
    %3372 = vmatprep.subr.mxu0 0.0
    %v3373 = vand.u32 %v2729, 4294901760
    %v3374 = vsub.f32 %v2729, %v3373
    %3375 = vmatpush1.msra.mxu0 %v3374
    %3376 = vmatprep.subr.mxu0 0.0
    %v3377 = vand.u32 %v2730, 4294901760
    %v3378 = vsub.f32 %v2730, %v3377
    %3379 = vmatpush1.msra.mxu0 %v3378
    %3380 = vmatprep.subr.mxu0 0.0
    %v3381 = vand.u32 %v2731, 4294901760
    %v3382 = vsub.f32 %v2731, %v3381
    %3383 = vmatpush1.msra.mxu0 %v3382
    %3384 = vmatprep.subr.mxu0 0.0
    %v3385 = vand.u32 %v2732, 4294901760
    %v3386 = vsub.f32 %v2732, %v3385
    %3387 = vmatpush1.msra.mxu0 %v3386
    %3388 = vmatprep.subr.mxu0 0.0
    %v3389 = vand.u32 %v2733, 4294901760
    %v3390 = vsub.f32 %v2733, %v3389
    %3391 = vmatpush1.msra.mxu0 %v3390
    %3392 = vmatprep.subr.mxu0 0.0
    %3393 = vmatpush1.msra.mxu0 0.0
    %3394 = vmatprep.subr.mxu0 0.0
    %3395 = vmatpush1.msra.mxu0 0.0
    %3396 = vmatprep.subr.mxu0 0.0
    %3397 = vmatpush1.msra.mxu0 0.0
    %3398 = vmatprep.subr.mxu0 0.0
    %3399 = vmatpush1.msra.mxu0 0.0
    %3400 = vmatprep.subr.mxu0 0.0
    %3401 = vmatpush1.msra.mxu0 0.0
    %3402 = vmatprep.subr.mxu0 0.0
    %3403 = vmatpush1.msra.mxu0 0.0
    %3404 = vmatprep.subr.mxu0 0.0
    %3405 = vmatpush1.msra.mxu0 0.0
    %3406 = vmatprep.subr.mxu0 0.0
    %3407 = vmatpush1.msra.mxu0 0.0
    %3408 = vmatprep.subr.mxu0 0.0
    %3409 = vmatpush1.msra.mxu0 0.0
    %3410 = vmatprep.subr.mxu0 0.0
    %3411 = vmatpush1.msra.mxu0 0.0
    %3412 = vmatprep.subr.mxu0 0.0
    %3413 = vmatpush1.msra.mxu0 0.0
    %3414 = vmatprep.subr.mxu0 0.0
    %3415 = vmatpush1.msra.mxu0 0.0
    %3416 = vmatprep.subr.mxu0 0.0
    %3417 = vmatpush1.msra.mxu0 0.0
    %3418 = vmatprep.subr.mxu0 0.0
    %3419 = vmatpush1.msra.mxu0 0.0
    %3420 = vmatprep.subr.mxu0 0.0
    %3421 = vmatpush1.msra.mxu0 0.0
    %3422 = vmatprep.subr.mxu0 0.0
    %3423 = vmatpush1.msra.mxu0 0.0
    %3424 = vmatprep.mubr.f32.mxu0 0.0
    %v3425 = vand.u32 %v2734, 4294901760
    %v3426 = vsub.f32 %v2734, %v3425
    %3427 = vmatmul.mubr.f32.gmra.mrb[0].mxu0 %v3426
    %v3428 = vpop.f32.mrb[0].mxu0
    %v3429 = vadd.f32 %v3235, %v3428
    %v3430 = vpop.f32.mrb[0].mxu0
    %3431 = vmatprep.mubr.f32.mxu0 0.0
    %v3432 = vand.u32 %v2735, 4294901760
    %v3433 = vsub.f32 %v2735, %v3432
    %3434 = vmatmul.mubr.f32.gmra.mrb[0].mxu0 %v3433
    %v3435 = vpop.f32.mrb[0].mxu0
    %v3436 = vadd.f32 %v3241, %v3435
    %v3437 = vpop.f32.mrb[0].mxu0
    %3438 = vmatprep.mubr.f32.mxu0 0.0
    %v3439 = vand.u32 %v2736, 4294901760
    %v3440 = vsub.f32 %v2736, %v3439
    %3441 = vmatmul.mubr.f32.gmra.mrb[0].mxu0 %v3440
    %v3442 = vpop.f32.mrb[0].mxu0
    %v3443 = vadd.f32 %v3247, %v3442
    %v3444 = vpop.f32.mrb[0].mxu0
    %3445 = vmatprep.mubr.f32.mxu0 0.0
    %v3446 = vand.u32 %v2737, 4294901760
    %v3447 = vsub.f32 %v2737, %v3446
    %3448 = vmatmul.mubr.f32.gmra.mrb[0].mxu0 %v3447
    %v3449 = vpop.f32.mrb[0].mxu0
    %v3450 = vadd.f32 %v3253, %v3449
    %v3451 = vpop.f32.mrb[0].mxu0
    %3452 = vmatprep.mubr.f32.mxu0 0.0
    %v3453 = vand.u32 %v2738, 4294901760
    %v3454 = vsub.f32 %v2738, %v3453
    %3455 = vmatmul.mubr.f32.gmra.mrb[0].mxu0 %v3454
    %v3456 = vpop.f32.mrb[0].mxu0
    %v3457 = vadd.f32 %v3259, %v3456
    %v3458 = vpop.f32.mrb[0].mxu0
    %3459 = vmatprep.mubr.f32.mxu0 0.0
    %v3460 = vand.u32 %v2739, 4294901760
    %v3461 = vsub.f32 %v2739, %v3460
    %3462 = vmatmul.mubr.f32.gmra.mrb[0].mxu0 %v3461
    %v3463 = vpop.f32.mrb[0].mxu0
    %v3464 = vadd.f32 %v3265, %v3463
    %v3465 = vpop.f32.mrb[0].mxu0
    %3466 = vmatprep.mubr.f32.mxu0 0.0
    %v3467 = vand.u32 %v2740, 4294901760
    %v3468 = vsub.f32 %v2740, %v3467
    %3469 = vmatmul.mubr.f32.gmra.mrb[0].mxu0 %v3468
    %v3470 = vpop.f32.mrb[0].mxu0
    %v3471 = vadd.f32 %v3271, %v3470
    %v3472 = vpop.f32.mrb[0].mxu0
    %3473 = vmatprep.mubr.f32.mxu0 0.0
    %v3474 = vand.u32 %v2741, 4294901760
    %v3475 = vsub.f32 %v2741, %v3474
    %3476 = vmatmul.mubr.f32.gmra.mrb[0].mxu0 %v3475
    %v3477 = vpop.f32.mrb[0].mxu0
    %v3478 = vadd.f32 %v3277, %v3477
    %v3479 = vpop.f32.mrb[0].mxu0
    %3480 = vmatprep.mubr.f32.mxu0 0.0
    %v3481 = vand.u32 %v2742, 4294901760
    %v3482 = vsub.f32 %v2742, %v3481
    %3483 = vmatmul.mubr.f32.gmra.mrb[0].mxu0 %v3482
    %v3484 = vpop.f32.mrb[0].mxu0
    %v3485 = vadd.f32 %v3283, %v3484
    %v3486 = vpop.f32.mrb[0].mxu0
    %3487 = vmatprep.mubr.f32.mxu0 0.0
    %v3488 = vand.u32 %v2743, 4294901760
    %v3489 = vsub.f32 %v2743, %v3488
    %3490 = vmatmul.mubr.f32.gmra.mrb[0].mxu0 %v3489
    %v3491 = vpop.f32.mrb[0].mxu0
    %v3492 = vadd.f32 %v3289, %v3491
    %v3493 = vpop.f32.mrb[0].mxu0
    %3494 = vmatprep.mubr.f32.mxu0 0.0
    %v3495 = vand.u32 %v2744, 4294901760
    %v3496 = vsub.f32 %v2744, %v3495
    %3497 = vmatmul.mubr.f32.gmra.mrb[0].mxu0 %v3496
    %v3498 = vpop.f32.mrb[0].mxu0
    %v3499 = vadd.f32 %v3295, %v3498
    %v3500 = vpop.f32.mrb[0].mxu0
    %3501 = vmatprep.mubr.f32.mxu0 0.0
    %v3502 = vand.u32 %v2745, 4294901760
    %v3503 = vsub.f32 %v2745, %v3502
    %3504 = vmatmul.mubr.f32.gmra.mrb[0].mxu0 %v3503
    %v3505 = vpop.f32.mrb[0].mxu0
    %v3506 = vadd.f32 %v3301, %v3505
    %v3507 = vpop.f32.mrb[0].mxu0
    %3508 = vmatprep.mubr.f32.mxu0 0.0
    %v3509 = vand.u32 %v2746, 4294901760
    %v3510 = vsub.f32 %v2746, %v3509
    %3511 = vmatmul.mubr.f32.gmra.mrb[0].mxu0 %v3510
    %v3512 = vpop.f32.mrb[0].mxu0
    %v3513 = vadd.f32 %v3307, %v3512
    %v3514 = vpop.f32.mrb[0].mxu0
    %3515 = vmatprep.mubr.f32.mxu0 0.0
    %v3516 = vand.u32 %v2747, 4294901760
    %v3517 = vsub.f32 %v2747, %v3516
    %3518 = vmatmul.mubr.f32.gmra.mrb[0].mxu0 %v3517
    %v3519 = vpop.f32.mrb[0].mxu0
    %v3520 = vadd.f32 %v3313, %v3519
    %v3521 = vpop.f32.mrb[0].mxu0
    %3522 = vmatprep.mubr.f32.mxu0 0.0
    %v3523 = vand.u32 %v2748, 4294901760
    %v3524 = vsub.f32 %v2748, %v3523
    %3525 = vmatmul.mubr.f32.gmra.mrb[0].mxu0 %v3524
    %v3526 = vpop.f32.mrb[0].mxu0
    %v3527 = vadd.f32 %v3319, %v3526
    %v3528 = vpop.f32.mrb[0].mxu0
    %3529 = vmatprep.mubr.f32.mxu0 0.0
    %v3530 = vand.u32 %v2749, 4294901760
    %v3531 = vsub.f32 %v2749, %v3530
    %3532 = vmatmul.mubr.f32.gmra.mrb[0].mxu0 %v3531
    %v3533 = vpop.f32.mrb[0].mxu0
    %v3534 = vadd.f32 %v3325, %v3533
    %v3535 = vpop.f32.mrb[0].mxu0
    %3536 = vdwg.mxu0
    %3537 = vmatprep.subr.mxu0 0.0
    %v3538 = vand.u32 %v2718, 4294901760
    %3539 = vmatpush1.msra.mxu0 %v3538
    %3540 = vmatprep.subr.mxu0 0.0
    %v3541 = vand.u32 %v2719, 4294901760
    %3542 = vmatpush1.msra.mxu0 %v3541
    %3543 = vmatprep.subr.mxu0 0.0
    %v3544 = vand.u32 %v2720, 4294901760
    %3545 = vmatpush1.msra.mxu0 %v3544
    %3546 = vmatprep.subr.mxu0 0.0
    %v3547 = vand.u32 %v2721, 4294901760
    %3548 = vmatpush1.msra.mxu0 %v3547
    %3549 = vmatprep.subr.mxu0 0.0
    %v3550 = vand.u32 %v2722, 4294901760
    %3551 = vmatpush1.msra.mxu0 %v3550
    %3552 = vmatprep.subr.mxu0 0.0
    %v3553 = vand.u32 %v2723, 4294901760
    %3554 = vmatpush1.msra.mxu0 %v3553
    %3555 = vmatprep.subr.mxu0 0.0
    %v3556 = vand.u32 %v2724, 4294901760
    %3557 = vmatpush1.msra.mxu0 %v3556
    %3558 = vmatprep.subr.mxu0 0.0
    %v3559 = vand.u32 %v2725, 4294901760
    %3560 = vmatpush1.msra.mxu0 %v3559
    %3561 = vmatprep.subr.mxu0 0.0
    %v3562 = vand.u32 %v2726, 4294901760
    %3563 = vmatpush1.msra.mxu0 %v3562
    %3564 = vmatprep.subr.mxu0 0.0
    %v3565 = vand.u32 %v2727, 4294901760
    %3566 = vmatpush1.msra.mxu0 %v3565
    %3567 = vmatprep.subr.mxu0 0.0
    %v3568 = vand.u32 %v2728, 4294901760
    %3569 = vmatpush1.msra.mxu0 %v3568
    %3570 = vmatprep.subr.mxu0 0.0
    %v3571 = vand.u32 %v2729, 4294901760
    %3572 = vmatpush1.msra.mxu0 %v3571
    %3573 = vmatprep.subr.mxu0 0.0
    %v3574 = vand.u32 %v2730, 4294901760
    %3575 = vmatpush1.msra.mxu0 %v3574
    %3576 = vmatprep.subr.mxu0 0.0
    %v3577 = vand.u32 %v2731, 4294901760
    %3578 = vmatpush1.msra.mxu0 %v3577
    %3579 = vmatprep.subr.mxu0 0.0
    %v3580 = vand.u32 %v2732, 4294901760
    %3581 = vmatpush1.msra.mxu0 %v3580
    %3582 = vmatprep.subr.mxu0 0.0
    %v3583 = vand.u32 %v2733, 4294901760
    %3584 = vmatpush1.msra.mxu0 %v3583
    %3585 = vmatprep.subr.mxu0 0.0
    %3586 = vmatpush1.msra.mxu0 0.0
    %3587 = vmatprep.subr.mxu0 0.0
    %3588 = vmatpush1.msra.mxu0 0.0
    %3589 = vmatprep.subr.mxu0 0.0
    %3590 = vmatpush1.msra.mxu0 0.0
    %3591 = vmatprep.subr.mxu0 0.0
    %3592 = vmatpush1.msra.mxu0 0.0
    %3593 = vmatprep.subr.mxu0 0.0
    %3594 = vmatpush1.msra.mxu0 0.0
    %3595 = vmatprep.subr.mxu0 0.0
    %3596 = vmatpush1.msra.mxu0 0.0
    %3597 = vmatprep.subr.mxu0 0.0
    %3598 = vmatpush1.msra.mxu0 0.0
    %3599 = vmatprep.subr.mxu0 0.0
    %3600 = vmatpush1.msra.mxu0 0.0
    %3601 = vmatprep.subr.mxu0 0.0
    %3602 = vmatpush1.msra.mxu0 0.0
    %3603 = vmatprep.subr.mxu0 0.0
    %3604 = vmatpush1.msra.mxu0 0.0
    %3605 = vmatprep.subr.mxu0 0.0
    %3606 = vmatpush1.msra.mxu0 0.0
    %3607 = vmatprep.subr.mxu0 0.0
    %3608 = vmatpush1.msra.mxu0 0.0
    %3609 = vmatprep.subr.mxu0 0.0
    %3610 = vmatpush1.msra.mxu0 0.0
    %3611 = vmatprep.subr.mxu0 0.0
    %3612 = vmatpush1.msra.mxu0 0.0
    %3613 = vmatprep.subr.mxu0 0.0
    %3614 = vmatpush1.msra.mxu0 0.0
    %3615 = vmatprep.subr.mxu0 0.0
    %3616 = vmatpush1.msra.mxu0 0.0
    %3617 = vmatprep.mubr.f32.mxu0 0.0
    %v3618 = vand.u32 %v2734, 4294901760
    %v3619 = vsub.f32 %v2734, %v3618
    %v3620 = vand.u32 %v3619, 4294901760
    %3621 = vmatmul.mubr.f32.gmra.mrb[0].mxu0 %v3620
    %v3622 = vpop.f32.mrb[0].mxu0
    %v3623 = vadd.f32 %v3429, %v3622
    %v3624 = vpop.f32.mrb[0].mxu0
    %3625 = vmatprep.mubr.f32.mxu0 0.0
    %v3626 = vand.u32 %v2735, 4294901760
    %v3627 = vsub.f32 %v2735, %v3626
    %v3628 = vand.u32 %v3627, 4294901760
    %3629 = vmatmul.mubr.f32.gmra.mrb[0].mxu0 %v3628
    %v3630 = vpop.f32.mrb[0].mxu0
    %v3631 = vadd.f32 %v3436, %v3630
    %v3632 = vpop.f32.mrb[0].mxu0
    %3633 = vmatprep.mubr.f32.mxu0 0.0
    %v3634 = vand.u32 %v2736, 4294901760
    %v3635 = vsub.f32 %v2736, %v3634
    %v3636 = vand.u32 %v3635, 4294901760
    %3637 = vmatmul.mubr.f32.gmra.mrb[0].mxu0 %v3636
    %v3638 = vpop.f32.mrb[0].mxu0
    %v3639 = vadd.f32 %v3443, %v3638
    %v3640 = vpop.f32.mrb[0].mxu0
    %3641 = vmatprep.mubr.f32.mxu0 0.0
    %v3642 = vand.u32 %v2737, 4294901760
    %v3643 = vsub.f32 %v2737, %v3642
    %v3644 = vand.u32 %v3643, 4294901760
    %3645 = vmatmul.mubr.f32.gmra.mrb[0].mxu0 %v3644
    %v3646 = vpop.f32.mrb[0].mxu0
    %v3647 = vadd.f32 %v3450, %v3646
    %v3648 = vpop.f32.mrb[0].mxu0
    %3649 = vmatprep.mubr.f32.mxu0 0.0
    %v3650 = vand.u32 %v2738, 4294901760
    %v3651 = vsub.f32 %v2738, %v3650
    %v3652 = vand.u32 %v3651, 4294901760
    %3653 = vmatmul.mubr.f32.gmra.mrb[0].mxu0 %v3652
    %v3654 = vpop.f32.mrb[0].mxu0
    %v3655 = vadd.f32 %v3457, %v3654
    %v3656 = vpop.f32.mrb[0].mxu0
    %3657 = vmatprep.mubr.f32.mxu0 0.0
    %v3658 = vand.u32 %v2739, 4294901760
    %v3659 = vsub.f32 %v2739, %v3658
    %v3660 = vand.u32 %v3659, 4294901760
    %3661 = vmatmul.mubr.f32.gmra.mrb[0].mxu0 %v3660
    %v3662 = vpop.f32.mrb[0].mxu0
    %v3663 = vadd.f32 %v3464, %v3662
    %v3664 = vpop.f32.mrb[0].mxu0
    %3665 = vmatprep.mubr.f32.mxu0 0.0
    %v3666 = vand.u32 %v2740, 4294901760
    %v3667 = vsub.f32 %v2740, %v3666
    %v3668 = vand.u32 %v3667, 4294901760
    %3669 = vmatmul.mubr.f32.gmra.mrb[0].mxu0 %v3668
    %v3670 = vpop.f32.mrb[0].mxu0
    %v3671 = vadd.f32 %v3471, %v3670
    %v3672 = vpop.f32.mrb[0].mxu0
    %3673 = vmatprep.mubr.f32.mxu0 0.0
    %v3674 = vand.u32 %v2741, 4294901760
    %v3675 = vsub.f32 %v2741, %v3674
    %v3676 = vand.u32 %v3675, 4294901760
    %3677 = vmatmul.mubr.f32.gmra.mrb[0].mxu0 %v3676
    %v3678 = vpop.f32.mrb[0].mxu0
    %v3679 = vadd.f32 %v3478, %v3678
    %v3680 = vpop.f32.mrb[0].mxu0
    %3681 = vmatprep.mubr.f32.mxu0 0.0
    %v3682 = vand.u32 %v2742, 4294901760
    %v3683 = vsub.f32 %v2742, %v3682
    %v3684 = vand.u32 %v3683, 4294901760
    %3685 = vmatmul.mubr.f32.gmra.mrb[0].mxu0 %v3684
    %v3686 = vpop.f32.mrb[0].mxu0
    %v3687 = vadd.f32 %v3485, %v3686
    %v3688 = vpop.f32.mrb[0].mxu0
    %3689 = vmatprep.mubr.f32.mxu0 0.0
    %v3690 = vand.u32 %v2743, 4294901760
    %v3691 = vsub.f32 %v2743, %v3690
    %v3692 = vand.u32 %v3691, 4294901760
    %3693 = vmatmul.mubr.f32.gmra.mrb[0].mxu0 %v3692
    %v3694 = vpop.f32.mrb[0].mxu0
    %v3695 = vadd.f32 %v3492, %v3694
    %v3696 = vpop.f32.mrb[0].mxu0
    %3697 = vmatprep.mubr.f32.mxu0 0.0
    %v3698 = vand.u32 %v2744, 4294901760
    %v3699 = vsub.f32 %v2744, %v3698
    %v3700 = vand.u32 %v3699, 4294901760
    %3701 = vmatmul.mubr.f32.gmra.mrb[0].mxu0 %v3700
    %v3702 = vpop.f32.mrb[0].mxu0
    %v3703 = vadd.f32 %v3499, %v3702
    %v3704 = vpop.f32.mrb[0].mxu0
    %3705 = vmatprep.mubr.f32.mxu0 0.0
    %v3706 = vand.u32 %v2745, 4294901760
    %v3707 = vsub.f32 %v2745, %v3706
    %v3708 = vand.u32 %v3707, 4294901760
    %3709 = vmatmul.mubr.f32.gmra.mrb[0].mxu0 %v3708
    %v3710 = vpop.f32.mrb[0].mxu0
    %v3711 = vadd.f32 %v3506, %v3710
    %v3712 = vpop.f32.mrb[0].mxu0
    %3713 = vmatprep.mubr.f32.mxu0 0.0
    %v3714 = vand.u32 %v2746, 4294901760
    %v3715 = vsub.f32 %v2746, %v3714
    %v3716 = vand.u32 %v3715, 4294901760
    %3717 = vmatmul.mubr.f32.gmra.mrb[0].mxu0 %v3716
    %v3718 = vpop.f32.mrb[0].mxu0
    %v3719 = vadd.f32 %v3513, %v3718
    %v3720 = vpop.f32.mrb[0].mxu0
    %3721 = vmatprep.mubr.f32.mxu0 0.0
    %v3722 = vand.u32 %v2747, 4294901760
    %v3723 = vsub.f32 %v2747, %v3722
    %v3724 = vand.u32 %v3723, 4294901760
    %3725 = vmatmul.mubr.f32.gmra.mrb[0].mxu0 %v3724
    %v3726 = vpop.f32.mrb[0].mxu0
    %v3727 = vadd.f32 %v3520, %v3726
    %v3728 = vpop.f32.mrb[0].mxu0
    %3729 = vmatprep.mubr.f32.mxu0 0.0
    %v3730 = vand.u32 %v2748, 4294901760
    %v3731 = vsub.f32 %v2748, %v3730
    %v3732 = vand.u32 %v3731, 4294901760
    %3733 = vmatmul.mubr.f32.gmra.mrb[0].mxu0 %v3732
    %v3734 = vpop.f32.mrb[0].mxu0
    %v3735 = vadd.f32 %v3527, %v3734
    %v3736 = vpop.f32.mrb[0].mxu0
    %3737 = vmatprep.mubr.f32.mxu0 0.0
    %v3738 = vand.u32 %v2749, 4294901760
    %v3739 = vsub.f32 %v2749, %v3738
    %v3740 = vand.u32 %v3739, 4294901760
    %3741 = vmatmul.mubr.f32.gmra.mrb[0].mxu0 %v3740
    %v3742 = vpop.f32.mrb[0].mxu0
    %v3743 = vadd.f32 %v3534, %v3742
    %v3744 = vpop.f32.mrb[0].mxu0
    %3745 = vdwg.mxu0
    %3746 = vmatprep.subr.mxu0 0.0
    %v3747 = vand.u32 %v2718, 4294901760
    %v3748 = vsub.f32 %v2718, %v3747
    %v3749 = vand.u32 %v3748, 4294901760
    %3750 = vmatpush1.msra.mxu0 %v3749
    %3751 = vmatprep.subr.mxu0 0.0
    %v3752 = vand.u32 %v2719, 4294901760
    %v3753 = vsub.f32 %v2719, %v3752
    %v3754 = vand.u32 %v3753, 4294901760
    %3755 = vmatpush1.msra.mxu0 %v3754
    %3756 = vmatprep.subr.mxu0 0.0
    %v3757 = vand.u32 %v2720, 4294901760
    %v3758 = vsub.f32 %v2720, %v3757
    %v3759 = vand.u32 %v3758, 4294901760
    %3760 = vmatpush1.msra.mxu0 %v3759
    %3761 = vmatprep.subr.mxu0 0.0
    %v3762 = vand.u32 %v2721, 4294901760
    %v3763 = vsub.f32 %v2721, %v3762
    %v3764 = vand.u32 %v3763, 4294901760
    %3765 = vmatpush1.msra.mxu0 %v3764
    %3766 = vmatprep.subr.mxu0 0.0
    %v3767 = vand.u32 %v2722, 4294901760
    %v3768 = vsub.f32 %v2722, %v3767
    %v3769 = vand.u32 %v3768, 4294901760
    %3770 = vmatpush1.msra.mxu0 %v3769
    %3771 = vmatprep.subr.mxu0 0.0
    %v3772 = vand.u32 %v2723, 4294901760
    %v3773 = vsub.f32 %v2723, %v3772
    %v3774 = vand.u32 %v3773, 4294901760
    %3775 = vmatpush1.msra.mxu0 %v3774
    %3776 = vmatprep.subr.mxu0 0.0
    %v3777 = vand.u32 %v2724, 4294901760
    %v3778 = vsub.f32 %v2724, %v3777
    %v3779 = vand.u32 %v3778, 4294901760
    %3780 = vmatpush1.msra.mxu0 %v3779
    %3781 = vmatprep.subr.mxu0 0.0
    %v3782 = vand.u32 %v2725, 4294901760
    %v3783 = vsub.f32 %v2725, %v3782
    %v3784 = vand.u32 %v3783, 4294901760
    %3785 = vmatpush1.msra.mxu0 %v3784
    %3786 = vmatprep.subr.mxu0 0.0
    %v3787 = vand.u32 %v2726, 4294901760
    %v3788 = vsub.f32 %v2726, %v3787
    %v3789 = vand.u32 %v3788, 4294901760
    %3790 = vmatpush1.msra.mxu0 %v3789
    %3791 = vmatprep.subr.mxu0 0.0
    %v3792 = vand.u32 %v2727, 4294901760
    %v3793 = vsub.f32 %v2727, %v3792
    %v3794 = vand.u32 %v3793, 4294901760
    %3795 = vmatpush1.msra.mxu0 %v3794
    %3796 = vmatprep.subr.mxu0 0.0
    %v3797 = vand.u32 %v2728, 4294901760
    %v3798 = vsub.f32 %v2728, %v3797
    %v3799 = vand.u32 %v3798, 4294901760
    %3800 = vmatpush1.msra.mxu0 %v3799
    %3801 = vmatprep.subr.mxu0 0.0
    %v3802 = vand.u32 %v2729, 4294901760
    %v3803 = vsub.f32 %v2729, %v3802
    %v3804 = vand.u32 %v3803, 4294901760
    %3805 = vmatpush1.msra.mxu0 %v3804
    %3806 = vmatprep.subr.mxu0 0.0
    %v3807 = vand.u32 %v2730, 4294901760
    %v3808 = vsub.f32 %v2730, %v3807
    %v3809 = vand.u32 %v3808, 4294901760
    %3810 = vmatpush1.msra.mxu0 %v3809
    %3811 = vmatprep.subr.mxu0 0.0
    %v3812 = vand.u32 %v2731, 4294901760
    %v3813 = vsub.f32 %v2731, %v3812
    %v3814 = vand.u32 %v3813, 4294901760
    %3815 = vmatpush1.msra.mxu0 %v3814
    %3816 = vmatprep.subr.mxu0 0.0
    %v3817 = vand.u32 %v2732, 4294901760
    %v3818 = vsub.f32 %v2732, %v3817
    %v3819 = vand.u32 %v3818, 4294901760
    %3820 = vmatpush1.msra.mxu0 %v3819
    %3821 = vmatprep.subr.mxu0 0.0
    %v3822 = vand.u32 %v2733, 4294901760
    %v3823 = vsub.f32 %v2733, %v3822
    %v3824 = vand.u32 %v3823, 4294901760
    %3825 = vmatpush1.msra.mxu0 %v3824
    %3826 = vmatprep.subr.mxu0 0.0
    %3827 = vmatpush1.msra.mxu0 0.0
    %3828 = vmatprep.subr.mxu0 0.0
    %3829 = vmatpush1.msra.mxu0 0.0
    %3830 = vmatprep.subr.mxu0 0.0
    %3831 = vmatpush1.msra.mxu0 0.0
    %3832 = vmatprep.subr.mxu0 0.0
    %3833 = vmatpush1.msra.mxu0 0.0
    %3834 = vmatprep.subr.mxu0 0.0
    %3835 = vmatpush1.msra.mxu0 0.0
    %3836 = vmatprep.subr.mxu0 0.0
    %3837 = vmatpush1.msra.mxu0 0.0
    %3838 = vmatprep.subr.mxu0 0.0
    %3839 = vmatpush1.msra.mxu0 0.0
    %3840 = vmatprep.subr.mxu0 0.0
    %3841 = vmatpush1.msra.mxu0 0.0
    %3842 = vmatprep.subr.mxu0 0.0
    %3843 = vmatpush1.msra.mxu0 0.0
    %3844 = vmatprep.subr.mxu0 0.0
    %3845 = vmatpush1.msra.mxu0 0.0
    %3846 = vmatprep.subr.mxu0 0.0
    %3847 = vmatpush1.msra.mxu0 0.0
    %3848 = vmatprep.subr.mxu0 0.0
    %3849 = vmatpush1.msra.mxu0 0.0
    %3850 = vmatprep.subr.mxu0 0.0
    %3851 = vmatpush1.msra.mxu0 0.0
    %3852 = vmatprep.subr.mxu0 0.0
    %3853 = vmatpush1.msra.mxu0 0.0
    %3854 = vmatprep.subr.mxu0 0.0
    %3855 = vmatpush1.msra.mxu0 0.0
    %3856 = vmatprep.subr.mxu0 0.0
    %3857 = vmatpush1.msra.mxu0 0.0
    %3858 = vmatprep.mubr.f32.mxu0 0.0
    %v3859 = vand.u32 %v2734, 4294901760
    %3860 = vmatmul.mubr.f32.gmra.mrb[0].mxu0 %v3859
    %v3861 = vpop.f32.mrb[0].mxu0
    %v3862 = vadd.f32 %v3623, %v3861
    %v3863 = vpop.f32.mrb[0].mxu0
    %3864 = vmatprep.mubr.f32.mxu0 0.0
    %v3865 = vand.u32 %v2735, 4294901760
    %3866 = vmatmul.mubr.f32.gmra.mrb[0].mxu0 %v3865
    %v3867 = vpop.f32.mrb[0].mxu0
    %v3868 = vadd.f32 %v3631, %v3867
    %v3869 = vpop.f32.mrb[0].mxu0
    %3870 = vmatprep.mubr.f32.mxu0 0.0
    %v3871 = vand.u32 %v2736, 4294901760
    %3872 = vmatmul.mubr.f32.gmra.mrb[0].mxu0 %v3871
    %v3873 = vpop.f32.mrb[0].mxu0
    %v3874 = vadd.f32 %v3639, %v3873
    %v3875 = vpop.f32.mrb[0].mxu0
    %3876 = vmatprep.mubr.f32.mxu0 0.0
    %v3877 = vand.u32 %v2737, 4294901760
    %3878 = vmatmul.mubr.f32.gmra.mrb[0].mxu0 %v3877
    %v3879 = vpop.f32.mrb[0].mxu0
    %v3880 = vadd.f32 %v3647, %v3879
    %v3881 = vpop.f32.mrb[0].mxu0
    %3882 = vmatprep.mubr.f32.mxu0 0.0
    %v3883 = vand.u32 %v2738, 4294901760
    %3884 = vmatmul.mubr.f32.gmra.mrb[0].mxu0 %v3883
    %v3885 = vpop.f32.mrb[0].mxu0
    %v3886 = vadd.f32 %v3655, %v3885
    %v3887 = vpop.f32.mrb[0].mxu0
    %3888 = vmatprep.mubr.f32.mxu0 0.0
    %v3889 = vand.u32 %v2739, 4294901760
    %3890 = vmatmul.mubr.f32.gmra.mrb[0].mxu0 %v3889
    %v3891 = vpop.f32.mrb[0].mxu0
    %v3892 = vadd.f32 %v3663, %v3891
    %v3893 = vpop.f32.mrb[0].mxu0
    %3894 = vmatprep.mubr.f32.mxu0 0.0
    %v3895 = vand.u32 %v2740, 4294901760
    %3896 = vmatmul.mubr.f32.gmra.mrb[0].mxu0 %v3895
    %v3897 = vpop.f32.mrb[0].mxu0
    %v3898 = vadd.f32 %v3671, %v3897
    %v3899 = vpop.f32.mrb[0].mxu0
    %3900 = vmatprep.mubr.f32.mxu0 0.0
    %v3901 = vand.u32 %v2741, 4294901760
    %3902 = vmatmul.mubr.f32.gmra.mrb[0].mxu0 %v3901
    %v3903 = vpop.f32.mrb[0].mxu0
    %v3904 = vadd.f32 %v3679, %v3903
    %v3905 = vpop.f32.mrb[0].mxu0
    %3906 = vmatprep.mubr.f32.mxu0 0.0
    %v3907 = vand.u32 %v2742, 4294901760
    %3908 = vmatmul.mubr.f32.gmra.mrb[0].mxu0 %v3907
    %v3909 = vpop.f32.mrb[0].mxu0
    %v3910 = vadd.f32 %v3687, %v3909
    %v3911 = vpop.f32.mrb[0].mxu0
    %3912 = vmatprep.mubr.f32.mxu0 0.0
    %v3913 = vand.u32 %v2743, 4294901760
    %3914 = vmatmul.mubr.f32.gmra.mrb[0].mxu0 %v3913
    %v3915 = vpop.f32.mrb[0].mxu0
    %v3916 = vadd.f32 %v3695, %v3915
    %v3917 = vpop.f32.mrb[0].mxu0
    %3918 = vmatprep.mubr.f32.mxu0 0.0
    %v3919 = vand.u32 %v2744, 4294901760
    %3920 = vmatmul.mubr.f32.gmra.mrb[0].mxu0 %v3919
    %v3921 = vpop.f32.mrb[0].mxu0
    %v3922 = vadd.f32 %v3703, %v3921
    %v3923 = vpop.f32.mrb[0].mxu0
    %3924 = vmatprep.mubr.f32.mxu0 0.0
    %v3925 = vand.u32 %v2745, 4294901760
    %3926 = vmatmul.mubr.f32.gmra.mrb[0].mxu0 %v3925
    %v3927 = vpop.f32.mrb[0].mxu0
    %v3928 = vadd.f32 %v3711, %v3927
    %v3929 = vpop.f32.mrb[0].mxu0
    %3930 = vmatprep.mubr.f32.mxu0 0.0
    %v3931 = vand.u32 %v2746, 4294901760
    %3932 = vmatmul.mubr.f32.gmra.mrb[0].mxu0 %v3931
    %v3933 = vpop.f32.mrb[0].mxu0
    %v3934 = vadd.f32 %v3719, %v3933
    %v3935 = vpop.f32.mrb[0].mxu0
    %3936 = vmatprep.mubr.f32.mxu0 0.0
    %v3937 = vand.u32 %v2747, 4294901760
    %3938 = vmatmul.mubr.f32.gmra.mrb[0].mxu0 %v3937
    %v3939 = vpop.f32.mrb[0].mxu0
    %v3940 = vadd.f32 %v3727, %v3939
    %v3941 = vpop.f32.mrb[0].mxu0
    %3942 = vmatprep.mubr.f32.mxu0 0.0
    %v3943 = vand.u32 %v2748, 4294901760
    %3944 = vmatmul.mubr.f32.gmra.mrb[0].mxu0 %v3943
    %v3945 = vpop.f32.mrb[0].mxu0
    %v3946 = vadd.f32 %v3735, %v3945
    %v3947 = vpop.f32.mrb[0].mxu0
    %3948 = vmatprep.mubr.f32.mxu0 0.0
    %v3949 = vand.u32 %v2749, 4294901760
    %3950 = vmatmul.mubr.f32.gmra.mrb[0].mxu0 %v3949
    %v3951 = vpop.f32.mrb[0].mxu0
    %v3952 = vadd.f32 %v3743, %v3951
    %v3953 = vpop.f32.mrb[0].mxu0
    %3954 = vdwg.mxu0
    %3955 = vmatprep.subr.mxu0 0.0
    %v3956 = vand.u32 %v2718, 4294901760
    %3957 = vmatpush1.msra.mxu0 %v3956
    %3958 = vmatprep.subr.mxu0 0.0
    %v3959 = vand.u32 %v2719, 4294901760
    %3960 = vmatpush1.msra.mxu0 %v3959
    %3961 = vmatprep.subr.mxu0 0.0
    %v3962 = vand.u32 %v2720, 4294901760
    %3963 = vmatpush1.msra.mxu0 %v3962
    %3964 = vmatprep.subr.mxu0 0.0
    %v3965 = vand.u32 %v2721, 4294901760
    %3966 = vmatpush1.msra.mxu0 %v3965
    %3967 = vmatprep.subr.mxu0 0.0
    %v3968 = vand.u32 %v2722, 4294901760
    %3969 = vmatpush1.msra.mxu0 %v3968
    %3970 = vmatprep.subr.mxu0 0.0
    %v3971 = vand.u32 %v2723, 4294901760
    %3972 = vmatpush1.msra.mxu0 %v3971
    %3973 = vmatprep.subr.mxu0 0.0
    %v3974 = vand.u32 %v2724, 4294901760
    %3975 = vmatpush1.msra.mxu0 %v3974
    %3976 = vmatprep.subr.mxu0 0.0
    %v3977 = vand.u32 %v2725, 4294901760
    %3978 = vmatpush1.msra.mxu0 %v3977
    %3979 = vmatprep.subr.mxu0 0.0
    %v3980 = vand.u32 %v2726, 4294901760
    %3981 = vmatpush1.msra.mxu0 %v3980
    %3982 = vmatprep.subr.mxu0 0.0
    %v3983 = vand.u32 %v2727, 4294901760
    %3984 = vmatpush1.msra.mxu0 %v3983
    %3985 = vmatprep.subr.mxu0 0.0
    %v3986 = vand.u32 %v2728, 4294901760
    %3987 = vmatpush1.msra.mxu0 %v3986
    %3988 = vmatprep.subr.mxu0 0.0
    %v3989 = vand.u32 %v2729, 4294901760
    %3990 = vmatpush1.msra.mxu0 %v3989
    %3991 = vmatprep.subr.mxu0 0.0
    %v3992 = vand.u32 %v2730, 4294901760
    %3993 = vmatpush1.msra.mxu0 %v3992
    %3994 = vmatprep.subr.mxu0 0.0
    %v3995 = vand.u32 %v2731, 4294901760
    %3996 = vmatpush1.msra.mxu0 %v3995
    %3997 = vmatprep.subr.mxu0 0.0
    %v3998 = vand.u32 %v2732, 4294901760
    %3999 = vmatpush1.msra.mxu0 %v3998
    %4000 = vmatprep.subr.mxu0 0.0
    %v4001 = vand.u32 %v2733, 4294901760
    %4002 = vmatpush1.msra.mxu0 %v4001
    %4003 = vmatprep.subr.mxu0 0.0
    %4004 = vmatpush1.msra.mxu0 0.0
    %4005 = vmatprep.subr.mxu0 0.0
    %4006 = vmatpush1.msra.mxu0 0.0
    %4007 = vmatprep.subr.mxu0 0.0
    %4008 = vmatpush1.msra.mxu0 0.0
    %4009 = vmatprep.subr.mxu0 0.0
    %4010 = vmatpush1.msra.mxu0 0.0
    %4011 = vmatprep.subr.mxu0 0.0
    %4012 = vmatpush1.msra.mxu0 0.0
    %4013 = vmatprep.subr.mxu0 0.0
    %4014 = vmatpush1.msra.mxu0 0.0
    %4015 = vmatprep.subr.mxu0 0.0
    %4016 = vmatpush1.msra.mxu0 0.0
    %4017 = vmatprep.subr.mxu0 0.0
    %4018 = vmatpush1.msra.mxu0 0.0
    %4019 = vmatprep.subr.mxu0 0.0
    %4020 = vmatpush1.msra.mxu0 0.0
    %4021 = vmatprep.subr.mxu0 0.0
    %4022 = vmatpush1.msra.mxu0 0.0
    %4023 = vmatprep.subr.mxu0 0.0
    %4024 = vmatpush1.msra.mxu0 0.0
    %4025 = vmatprep.subr.mxu0 0.0
    %4026 = vmatpush1.msra.mxu0 0.0
    %4027 = vmatprep.subr.mxu0 0.0
    %4028 = vmatpush1.msra.mxu0 0.0
    %4029 = vmatprep.subr.mxu0 0.0
    %4030 = vmatpush1.msra.mxu0 0.0
    %4031 = vmatprep.subr.mxu0 0.0
    %4032 = vmatpush1.msra.mxu0 0.0
    %4033 = vmatprep.subr.mxu0 0.0
    %4034 = vmatpush1.msra.mxu0 0.0
    %4035 = vmatprep.mubr.f32.mxu0 0.0
    %v4036 = vand.u32 %v2734, 4294901760
    %4037 = vmatmul.mubr.f32.gmra.mrb[0].mxu0 %v4036
    %v4038 = vpop.f32.mrb[0].mxu0
    %v4039 = vadd.f32 %v3862, %v4038
    %v4040 = vpop.f32.mrb[0].mxu0
    %4041 = vmatprep.mubr.f32.mxu0 0.0
    %v4042 = vand.u32 %v2735, 4294901760
    %4043 = vmatmul.mubr.f32.gmra.mrb[0].mxu0 %v4042
    %v4044 = vpop.f32.mrb[0].mxu0
    %v4045 = vadd.f32 %v3868, %v4044
    %v4046 = vpop.f32.mrb[0].mxu0
    %4047 = vmatprep.mubr.f32.mxu0 0.0
    %v4048 = vand.u32 %v2736, 4294901760
    %4049 = vmatmul.mubr.f32.gmra.mrb[0].mxu0 %v4048
    %v4050 = vpop.f32.mrb[0].mxu0
    %v4051 = vadd.f32 %v3874, %v4050
    %v4052 = vpop.f32.mrb[0].mxu0
    %4053 = vmatprep.mubr.f32.mxu0 0.0
    %v4054 = vand.u32 %v2737, 4294901760
    %4055 = vmatmul.mubr.f32.gmra.mrb[0].mxu0 %v4054
    %v4056 = vpop.f32.mrb[0].mxu0
    %v4057 = vadd.f32 %v3880, %v4056
    %v4058 = vpop.f32.mrb[0].mxu0
    %4059 = vmatprep.mubr.f32.mxu0 0.0
    %v4060 = vand.u32 %v2738, 4294901760
    %4061 = vmatmul.mubr.f32.gmra.mrb[0].mxu0 %v4060
    %v4062 = vpop.f32.mrb[0].mxu0
    %v4063 = vadd.f32 %v3886, %v4062
    %v4064 = vpop.f32.mrb[0].mxu0
    %4065 = vmatprep.mubr.f32.mxu0 0.0
    %v4066 = vand.u32 %v2739, 4294901760
    %4067 = vmatmul.mubr.f32.gmra.mrb[0].mxu0 %v4066
    %v4068 = vpop.f32.mrb[0].mxu0
    %v4069 = vadd.f32 %v3892, %v4068
    %v4070 = vpop.f32.mrb[0].mxu0
    %4071 = vmatprep.mubr.f32.mxu0 0.0
    %v4072 = vand.u32 %v2740, 4294901760
    %4073 = vmatmul.mubr.f32.gmra.mrb[0].mxu0 %v4072
    %v4074 = vpop.f32.mrb[0].mxu0
    %v4075 = vadd.f32 %v3898, %v4074
    %v4076 = vpop.f32.mrb[0].mxu0
    %4077 = vmatprep.mubr.f32.mxu0 0.0
    %v4078 = vand.u32 %v2741, 4294901760
    %4079 = vmatmul.mubr.f32.gmra.mrb[0].mxu0 %v4078
    %v4080 = vpop.f32.mrb[0].mxu0
    %v4081 = vadd.f32 %v3904, %v4080
    %v4082 = vpop.f32.mrb[0].mxu0
    %4083 = vmatprep.mubr.f32.mxu0 0.0
    %v4084 = vand.u32 %v2742, 4294901760
    %4085 = vmatmul.mubr.f32.gmra.mrb[0].mxu0 %v4084
    %v4086 = vpop.f32.mrb[0].mxu0
    %v4087 = vadd.f32 %v3910, %v4086
    %v4088 = vpop.f32.mrb[0].mxu0
    %4089 = vmatprep.mubr.f32.mxu0 0.0
    %v4090 = vand.u32 %v2743, 4294901760
    %4091 = vmatmul.mubr.f32.gmra.mrb[0].mxu0 %v4090
    %v4092 = vpop.f32.mrb[0].mxu0
    %v4093 = vadd.f32 %v3916, %v4092
    %v4094 = vpop.f32.mrb[0].mxu0
    %4095 = vmatprep.mubr.f32.mxu0 0.0
    %v4096 = vand.u32 %v2744, 4294901760
    %4097 = vmatmul.mubr.f32.gmra.mrb[0].mxu0 %v4096
    %v4098 = vpop.f32.mrb[0].mxu0
    %v4099 = vadd.f32 %v3922, %v4098
    %v4100 = vpop.f32.mrb[0].mxu0
    %4101 = vmatprep.mubr.f32.mxu0 0.0
    %v4102 = vand.u32 %v2745, 4294901760
    %4103 = vmatmul.mubr.f32.gmra.mrb[0].mxu0 %v4102
    %v4104 = vpop.f32.mrb[0].mxu0
    %v4105 = vadd.f32 %v3928, %v4104
    %v4106 = vpop.f32.mrb[0].mxu0
    %4107 = vmatprep.mubr.f32.mxu0 0.0
    %v4108 = vand.u32 %v2746, 4294901760
    %4109 = vmatmul.mubr.f32.gmra.mrb[0].mxu0 %v4108
    %v4110 = vpop.f32.mrb[0].mxu0
    %v4111 = vadd.f32 %v3934, %v4110
    %v4112 = vpop.f32.mrb[0].mxu0
    %4113 = vmatprep.mubr.f32.mxu0 0.0
    %v4114 = vand.u32 %v2747, 4294901760
    %4115 = vmatmul.mubr.f32.gmra.mrb[0].mxu0 %v4114
    %v4116 = vpop.f32.mrb[0].mxu0
    %v4117 = vadd.f32 %v3940, %v4116
    %v4118 = vpop.f32.mrb[0].mxu0
    %4119 = vmatprep.mubr.f32.mxu0 0.0
    %v4120 = vand.u32 %v2748, 4294901760
    %4121 = vmatmul.mubr.f32.gmra.mrb[0].mxu0 %v4120
    %v4122 = vpop.f32.mrb[0].mxu0
    %v4123 = vadd.f32 %v3946, %v4122
    %v4124 = vpop.f32.mrb[0].mxu0
    %4125 = vmatprep.mubr.f32.mxu0 0.0
    %v4126 = vand.u32 %v2749, 4294901760
    %4127 = vmatmul.mubr.f32.gmra.mrb[0].mxu0 %v4126
    %v4128 = vpop.f32.mrb[0].mxu0
    %v4129 = vadd.f32 %v3952, %v4128
    %v4130 = vpop.f32.mrb[0].mxu0
    %4131 = vdwg.mxu0
    %v4132 = vtanh.pop %v4039
    %v4133 = vtanh.pop %v4045
    %v4134 = vtanh.pop %v4051
    %v4135 = vtanh.pop %v4057
    %v4136 = vtanh.pop %v4063
    %v4137 = vtanh.pop %v4069
    %v4138 = vtanh.pop %v4075
    %v4139 = vtanh.pop %v4081
    %v4140 = vtanh.pop %v4087
    %v4141 = vtanh.pop %v4093
    %v4142 = vtanh.pop %v4099
    %v4143 = vtanh.pop %v4105
    %v4144 = vtanh.pop %v4111
    %v4145 = vtanh.pop %v4117
    %v4146 = vtanh.pop %v4123
    %v4147 = vtanh.pop %v4129
    %v4148 = vld [vmem:[%s7] sm:$0xff]
    %v4149 = vld [vmem:[%s7 + $0x8] sm:$0xff]
    %v4150 = vld [vmem:[%s8] sm:$0xff]
    %v4151 = vld [vmem:[%s8 + $0x8] sm:$0xff]
    %4153 = vset.pattern.permute.xlu0 0
    %4154 = vperm.xlu0 %4153, %v4150
    %v4155 = vpop.permute.xlu0 %4154
    %4158 = vset.pattern.permute.xlu0 0
    %4159 = vperm.xlu0 %4158, %v4151
    %v4160 = vpop.permute.xlu0 %4159
    %4162 = vmatprep.subr.mxu0 0.0
    %v4163 = vand.u32 %v4132, 4294901760
    %4164 = vmatpush1.msra.mxu0 %v4163
    %4165 = vmatprep.subr.mxu0 0.0
    %v4166 = vand.u32 %v4133, 4294901760
    %4167 = vmatpush1.msra.mxu0 %v4166
    %4168 = vmatprep.subr.mxu0 0.0
    %v4169 = vand.u32 %v4134, 4294901760
    %4170 = vmatpush1.msra.mxu0 %v4169
    %4171 = vmatprep.subr.mxu0 0.0
    %v4172 = vand.u32 %v4135, 4294901760
    %4173 = vmatpush1.msra.mxu0 %v4172
    %4174 = vmatprep.subr.mxu0 0.0
    %v4175 = vand.u32 %v4136, 4294901760
    %4176 = vmatpush1.msra.mxu0 %v4175
    %4177 = vmatprep.subr.mxu0 0.0
    %v4178 = vand.u32 %v4137, 4294901760
    %4179 = vmatpush1.msra.mxu0 %v4178
    %4180 = vmatprep.subr.mxu0 0.0
    %v4181 = vand.u32 %v4138, 4294901760
    %4182 = vmatpush1.msra.mxu0 %v4181
    %4183 = vmatprep.subr.mxu0 0.0
    %v4184 = vand.u32 %v4139, 4294901760
    %4185 = vmatpush1.msra.mxu0 %v4184
    %4186 = vmatprep.subr.mxu0 0.0
    %v4187 = vand.u32 %v4140, 4294901760
    %4188 = vmatpush1.msra.mxu0 %v4187
    %4189 = vmatprep.subr.mxu0 0.0
    %v4190 = vand.u32 %v4141, 4294901760
    %4191 = vmatpush1.msra.mxu0 %v4190
    %4192 = vmatprep.subr.mxu0 0.0
    %v4193 = vand.u32 %v4142, 4294901760
    %4194 = vmatpush1.msra.mxu0 %v4193
    %4195 = vmatprep.subr.mxu0 0.0
    %v4196 = vand.u32 %v4143, 4294901760
    %4197 = vmatpush1.msra.mxu0 %v4196
    %4198 = vmatprep.subr.mxu0 0.0
    %v4199 = vand.u32 %v4144, 4294901760
    %4200 = vmatpush1.msra.mxu0 %v4199
    %4201 = vmatprep.subr.mxu0 0.0
    %v4202 = vand.u32 %v4145, 4294901760
    %4203 = vmatpush1.msra.mxu0 %v4202
    %4204 = vmatprep.subr.mxu0 0.0
    %v4205 = vand.u32 %v4146, 4294901760
    %4206 = vmatpush1.msra.mxu0 %v4205
    %4207 = vmatprep.subr.mxu0 0.0
    %v4208 = vand.u32 %v4147, 4294901760
    %4209 = vmatpush1.msra.mxu0 %v4208
    %4210 = vmatprep.subr.mxu0 0.0
    %4211 = vmatpush1.msra.mxu0 0.0
    %4212 = vmatprep.subr.mxu0 0.0
    %4213 = vmatpush1.msra.mxu0 0.0
    %4214 = vmatprep.subr.mxu0 0.0
    %4215 = vmatpush1.msra.mxu0 0.0
    %4216 = vmatprep.subr.mxu0 0.0
    %4217 = vmatpush1.msra.mxu0 0.0
    %4218 = vmatprep.subr.mxu0 0.0
    %4219 = vmatpush1.msra.mxu0 0.0
    %4220 = vmatprep.subr.mxu0 0.0
    %4221 = vmatpush1.msra.mxu0 0.0
    %4222 = vmatprep.subr.mxu0 0.0
    %4223 = vmatpush1.msra.mxu0 0.0
    %4224 = vmatprep.subr.mxu0 0.0
    %4225 = vmatpush1.msra.mxu0 0.0
    %4226 = vmatprep.subr.mxu0 0.0
    %4227 = vmatpush1.msra.mxu0 0.0
    %4228 = vmatprep.subr.mxu0 0.0
    %4229 = vmatpush1.msra.mxu0 0.0
    %4230 = vmatprep.subr.mxu0 0.0
    %4231 = vmatpush1.msra.mxu0 0.0
    %4232 = vmatprep.subr.mxu0 0.0
    %4233 = vmatpush1.msra.mxu0 0.0
    %4234 = vmatprep.subr.mxu0 0.0
    %4235 = vmatpush1.msra.mxu0 0.0
    %4236 = vmatprep.subr.mxu0 0.0
    %4237 = vmatpush1.msra.mxu0 0.0
    %4238 = vmatprep.subr.mxu0 0.0
    %4239 = vmatpush1.msra.mxu0 0.0
    %4240 = vmatprep.subr.mxu0 0.0
    %4241 = vmatpush1.msra.mxu0 0.0
    %4242 = vmatprep.mubr.f32.mxu0 0.0
    %v4243 = vand.u32 %v4148, 4294901760
    %v4244 = vsub.f32 %v4148, %v4243
    %v4245 = vand.u32 %v4244, 4294901760
    %v4246 = vsub.f32 %v4244, %v4245
    %v4247 = vand.u32 %v4246, 4294901760
    %4248 = vmatmul.mubr.f32.gmra.mrb[0].mxu0 %v4247
    %v4249 = vpop.f32.mrb[0].mxu0
    %v4250 = vadd.f32 %v4155, %v4249
    %v4251 = vpop.f32.mrb[0].mxu0
    %4252 = vmatprep.mubr.f32.mxu0 0.0
    %v4253 = vand.u32 %v4149, 4294901760
    %v4254 = vsub.f32 %v4149, %v4253
    %v4255 = vand.u32 %v4254, 4294901760
    %v4256 = vsub.f32 %v4254, %v4255
    %v4257 = vand.u32 %v4256, 4294901760
    %4258 = vmatmul.mubr.f32.gmra.mrb[0].mxu0 %v4257
    %v4259 = vpop.f32.mrb[0].mxu0
    %v4260 = vadd.f32 %v4160, %v4259
    %v4261 = vpop.f32.mrb[0].mxu0
    %4262 = vdwg.mxu0
    %4263 = vmatprep.subr.mxu0 0.0
    %v4264 = vand.u32 %v4132, 4294901760
    %v4265 = vsub.f32 %v4132, %v4264
    %v4266 = vand.u32 %v4265, 4294901760
    %v4267 = vsub.f32 %v4265, %v4266
    %v4268 = vand.u32 %v4267, 4294901760
    %4269 = vmatpush1.msra.mxu0 %v4268
    %4270 = vmatprep.subr.mxu0 0.0
    %v4271 = vand.u32 %v4133, 4294901760
    %v4272 = vsub.f32 %v4133, %v4271
    %v4273 = vand.u32 %v4272, 4294901760
    %v4274 = vsub.f32 %v4272, %v4273
    %v4275 = vand.u32 %v4274, 4294901760
    %4276 = vmatpush1.msra.mxu0 %v4275
    %4277 = vmatprep.subr.mxu0 0.0
    %v4278 = vand.u32 %v4134, 4294901760
    %v4279 = vsub.f32 %v4134, %v4278
    %v4280 = vand.u32 %v4279, 4294901760
    %v4281 = vsub.f32 %v4279, %v4280
    %v4282 = vand.u32 %v4281, 4294901760
    %4283 = vmatpush1.msra.mxu0 %v4282
    %4284 = vmatprep.subr.mxu0 0.0
    %v4285 = vand.u32 %v4135, 4294901760
    %v4286 = vsub.f32 %v4135, %v4285
    %v4287 = vand.u32 %v4286, 4294901760
    %v4288 = vsub.f32 %v4286, %v4287
    %v4289 = vand.u32 %v4288, 4294901760
    %4290 = vmatpush1.msra.mxu0 %v4289
    %4291 = vmatprep.subr.mxu0 0.0
    %v4292 = vand.u32 %v4136, 4294901760
    %v4293 = vsub.f32 %v4136, %v4292
    %v4294 = vand.u32 %v4293, 4294901760
    %v4295 = vsub.f32 %v4293, %v4294
    %v4296 = vand.u32 %v4295, 4294901760
    %4297 = vmatpush1.msra.mxu0 %v4296
    %4298 = vmatprep.subr.mxu0 0.0
    %v4299 = vand.u32 %v4137, 4294901760
    %v4300 = vsub.f32 %v4137, %v4299
    %v4301 = vand.u32 %v4300, 4294901760
    %v4302 = vsub.f32 %v4300, %v4301
    %v4303 = vand.u32 %v4302, 4294901760
    %4304 = vmatpush1.msra.mxu0 %v4303
    %4305 = vmatprep.subr.mxu0 0.0
    %v4306 = vand.u32 %v4138, 4294901760
    %v4307 = vsub.f32 %v4138, %v4306
    %v4308 = vand.u32 %v4307, 4294901760
    %v4309 = vsub.f32 %v4307, %v4308
    %v4310 = vand.u32 %v4309, 4294901760
    %4311 = vmatpush1.msra.mxu0 %v4310
    %4312 = vmatprep.subr.mxu0 0.0
    %v4313 = vand.u32 %v4139, 4294901760
    %v4314 = vsub.f32 %v4139, %v4313
    %v4315 = vand.u32 %v4314, 4294901760
    %v4316 = vsub.f32 %v4314, %v4315
    %v4317 = vand.u32 %v4316, 4294901760
    %4318 = vmatpush1.msra.mxu0 %v4317
    %4319 = vmatprep.subr.mxu0 0.0
    %v4320 = vand.u32 %v4140, 4294901760
    %v4321 = vsub.f32 %v4140, %v4320
    %v4322 = vand.u32 %v4321, 4294901760
    %v4323 = vsub.f32 %v4321, %v4322
    %v4324 = vand.u32 %v4323, 4294901760
    %4325 = vmatpush1.msra.mxu0 %v4324
    %4326 = vmatprep.subr.mxu0 0.0
    %v4327 = vand.u32 %v4141, 4294901760
    %v4328 = vsub.f32 %v4141, %v4327
    %v4329 = vand.u32 %v4328, 4294901760
    %v4330 = vsub.f32 %v4328, %v4329
    %v4331 = vand.u32 %v4330, 4294901760
    %4332 = vmatpush1.msra.mxu0 %v4331
    %4333 = vmatprep.subr.mxu0 0.0
    %v4334 = vand.u32 %v4142, 4294901760
    %v4335 = vsub.f32 %v4142, %v4334
    %v4336 = vand.u32 %v4335, 4294901760
    %v4337 = vsub.f32 %v4335, %v4336
    %v4338 = vand.u32 %v4337, 4294901760
    %4339 = vmatpush1.msra.mxu0 %v4338
    %4340 = vmatprep.subr.mxu0 0.0
    %v4341 = vand.u32 %v4143, 4294901760
    %v4342 = vsub.f32 %v4143, %v4341
    %v4343 = vand.u32 %v4342, 4294901760
    %v4344 = vsub.f32 %v4342, %v4343
    %v4345 = vand.u32 %v4344, 4294901760
    %4346 = vmatpush1.msra.mxu0 %v4345
    %4347 = vmatprep.subr.mxu0 0.0
    %v4348 = vand.u32 %v4144, 4294901760
    %v4349 = vsub.f32 %v4144, %v4348
    %v4350 = vand.u32 %v4349, 4294901760
    %v4351 = vsub.f32 %v4349, %v4350
    %v4352 = vand.u32 %v4351, 4294901760
    %4353 = vmatpush1.msra.mxu0 %v4352
    %4354 = vmatprep.subr.mxu0 0.0
    %v4355 = vand.u32 %v4145, 4294901760
    %v4356 = vsub.f32 %v4145, %v4355
    %v4357 = vand.u32 %v4356, 4294901760
    %v4358 = vsub.f32 %v4356, %v4357
    %v4359 = vand.u32 %v4358, 4294901760
    %4360 = vmatpush1.msra.mxu0 %v4359
    %4361 = vmatprep.subr.mxu0 0.0
    %v4362 = vand.u32 %v4146, 4294901760
    %v4363 = vsub.f32 %v4146, %v4362
    %v4364 = vand.u32 %v4363, 4294901760
    %v4365 = vsub.f32 %v4363, %v4364
    %v4366 = vand.u32 %v4365, 4294901760
    %4367 = vmatpush1.msra.mxu0 %v4366
    %4368 = vmatprep.subr.mxu0 0.0
    %v4369 = vand.u32 %v4147, 4294901760
    %v4370 = vsub.f32 %v4147, %v4369
    %v4371 = vand.u32 %v4370, 4294901760
    %v4372 = vsub.f32 %v4370, %v4371
    %v4373 = vand.u32 %v4372, 4294901760
    %4374 = vmatpush1.msra.mxu0 %v4373
    %4375 = vmatprep.subr.mxu0 0.0
    %4376 = vmatpush1.msra.mxu0 0.0
    %4377 = vmatprep.subr.mxu0 0.0
    %4378 = vmatpush1.msra.mxu0 0.0
    %4379 = vmatprep.subr.mxu0 0.0
    %4380 = vmatpush1.msra.mxu0 0.0
    %4381 = vmatprep.subr.mxu0 0.0
    %4382 = vmatpush1.msra.mxu0 0.0
    %4383 = vmatprep.subr.mxu0 0.0
    %4384 = vmatpush1.msra.mxu0 0.0
    %4385 = vmatprep.subr.mxu0 0.0
    %4386 = vmatpush1.msra.mxu0 0.0
    %4387 = vmatprep.subr.mxu0 0.0
    %4388 = vmatpush1.msra.mxu0 0.0
    %4389 = vmatprep.subr.mxu0 0.0
    %4390 = vmatpush1.msra.mxu0 0.0
    %4391 = vmatprep.subr.mxu0 0.0
    %4392 = vmatpush1.msra.mxu0 0.0
    %4393 = vmatprep.subr.mxu0 0.0
    %4394 = vmatpush1.msra.mxu0 0.0
    %4395 = vmatprep.subr.mxu0 0.0
    %4396 = vmatpush1.msra.mxu0 0.0
    %4397 = vmatprep.subr.mxu0 0.0
    %4398 = vmatpush1.msra.mxu0 0.0
    %4399 = vmatprep.subr.mxu0 0.0
    %4400 = vmatpush1.msra.mxu0 0.0
    %4401 = vmatprep.subr.mxu0 0.0
    %4402 = vmatpush1.msra.mxu0 0.0
    %4403 = vmatprep.subr.mxu0 0.0
    %4404 = vmatpush1.msra.mxu0 0.0
    %4405 = vmatprep.subr.mxu0 0.0
    %4406 = vmatpush1.msra.mxu0 0.0
    %4407 = vmatprep.mubr.f32.mxu0 0.0
    %v4408 = vand.u32 %v4148, 4294901760
    %4409 = vmatmul.mubr.f32.gmra.mrb[0].mxu0 %v4408
    %v4410 = vpop.f32.mrb[0].mxu0
    %v4411 = vadd.f32 %v4250, %v4410
    %v4412 = vpop.f32.mrb[0].mxu0
    %4413 = vmatprep.mubr.f32.mxu0 0.0
    %v4414 = vand.u32 %v4149, 4294901760
    %4415 = vmatmul.mubr.f32.gmra.mrb[0].mxu0 %v4414
    %v4416 = vpop.f32.mrb[0].mxu0
    %v4417 = vadd.f32 %v4260, %v4416
    %v4418 = vpop.f32.mrb[0].mxu0
    %4419 = vdwg.mxu0
    %4420 = vmatprep.subr.mxu0 0.0
    %v4421 = vand.u32 %v4132, 4294901760
    %v4422 = vsub.f32 %v4132, %v4421
    %4423 = vmatpush1.msra.mxu0 %v4422
    %4424 = vmatprep.subr.mxu0 0.0
    %v4425 = vand.u32 %v4133, 4294901760
    %v4426 = vsub.f32 %v4133, %v4425
    %4427 = vmatpush1.msra.mxu0 %v4426
    %4428 = vmatprep.subr.mxu0 0.0
    %v4429 = vand.u32 %v4134, 4294901760
    %v4430 = vsub.f32 %v4134, %v4429
    %4431 = vmatpush1.msra.mxu0 %v4430
    %4432 = vmatprep.subr.mxu0 0.0
    %v4433 = vand.u32 %v4135, 4294901760
    %v4434 = vsub.f32 %v4135, %v4433
    %4435 = vmatpush1.msra.mxu0 %v4434
    %4436 = vmatprep.subr.mxu0 0.0
    %v4437 = vand.u32 %v4136, 4294901760
    %v4438 = vsub.f32 %v4136, %v4437
    %4439 = vmatpush1.msra.mxu0 %v4438
    %4440 = vmatprep.subr.mxu0 0.0
    %v4441 = vand.u32 %v4137, 4294901760
    %v4442 = vsub.f32 %v4137, %v4441
    %4443 = vmatpush1.msra.mxu0 %v4442
    %4444 = vmatprep.subr.mxu0 0.0
    %v4445 = vand.u32 %v4138, 4294901760
    %v4446 = vsub.f32 %v4138, %v4445
    %4447 = vmatpush1.msra.mxu0 %v4446
    %4448 = vmatprep.subr.mxu0 0.0
    %v4449 = vand.u32 %v4139, 4294901760
    %v4450 = vsub.f32 %v4139, %v4449
    %4451 = vmatpush1.msra.mxu0 %v4450
    %4452 = vmatprep.subr.mxu0 0.0
    %v4453 = vand.u32 %v4140, 4294901760
    %v4454 = vsub.f32 %v4140, %v4453
    %4455 = vmatpush1.msra.mxu0 %v4454
    %4456 = vmatprep.subr.mxu0 0.0
    %v4457 = vand.u32 %v4141, 4294901760
    %v4458 = vsub.f32 %v4141, %v4457
    %4459 = vmatpush1.msra.mxu0 %v4458
    %4460 = vmatprep.subr.mxu0 0.0
    %v4461 = vand.u32 %v4142, 4294901760
    %v4462 = vsub.f32 %v4142, %v4461
    %4463 = vmatpush1.msra.mxu0 %v4462
    %4464 = vmatprep.subr.mxu0 0.0
    %v4465 = vand.u32 %v4143, 4294901760
    %v4466 = vsub.f32 %v4143, %v4465
    %4467 = vmatpush1.msra.mxu0 %v4466
    %4468 = vmatprep.subr.mxu0 0.0
    %v4469 = vand.u32 %v4144, 4294901760
    %v4470 = vsub.f32 %v4144, %v4469
    %4471 = vmatpush1.msra.mxu0 %v4470
    %4472 = vmatprep.subr.mxu0 0.0
    %v4473 = vand.u32 %v4145, 4294901760
    %v4474 = vsub.f32 %v4145, %v4473
    %4475 = vmatpush1.msra.mxu0 %v4474
    %4476 = vmatprep.subr.mxu0 0.0
    %v4477 = vand.u32 %v4146, 4294901760
    %v4478 = vsub.f32 %v4146, %v4477
    %4479 = vmatpush1.msra.mxu0 %v4478
    %4480 = vmatprep.subr.mxu0 0.0
    %v4481 = vand.u32 %v4147, 4294901760
    %v4482 = vsub.f32 %v4147, %v4481
    %4483 = vmatpush1.msra.mxu0 %v4482
    %4484 = vmatprep.subr.mxu0 0.0
    %4485 = vmatpush1.msra.mxu0 0.0
    %4486 = vmatprep.subr.mxu0 0.0
    %4487 = vmatpush1.msra.mxu0 0.0
    %4488 = vmatprep.subr.mxu0 0.0
    %4489 = vmatpush1.msra.mxu0 0.0
    %4490 = vmatprep.subr.mxu0 0.0
    %4491 = vmatpush1.msra.mxu0 0.0
    %4492 = vmatprep.subr.mxu0 0.0
    %4493 = vmatpush1.msra.mxu0 0.0
    %4494 = vmatprep.subr.mxu0 0.0
    %4495 = vmatpush1.msra.mxu0 0.0
    %4496 = vmatprep.subr.mxu0 0.0
    %4497 = vmatpush1.msra.mxu0 0.0
    %4498 = vmatprep.subr.mxu0 0.0
    %4499 = vmatpush1.msra.mxu0 0.0
    %4500 = vmatprep.subr.mxu0 0.0
    %4501 = vmatpush1.msra.mxu0 0.0
    %4502 = vmatprep.subr.mxu0 0.0
    %4503 = vmatpush1.msra.mxu0 0.0
    %4504 = vmatprep.subr.mxu0 0.0
    %4505 = vmatpush1.msra.mxu0 0.0
    %4506 = vmatprep.subr.mxu0 0.0
    %4507 = vmatpush1.msra.mxu0 0.0
    %4508 = vmatprep.subr.mxu0 0.0
    %4509 = vmatpush1.msra.mxu0 0.0
    %4510 = vmatprep.subr.mxu0 0.0
    %4511 = vmatpush1.msra.mxu0 0.0
    %4512 = vmatprep.subr.mxu0 0.0
    %4513 = vmatpush1.msra.mxu0 0.0
    %4514 = vmatprep.subr.mxu0 0.0
    %4515 = vmatpush1.msra.mxu0 0.0
    %4516 = vmatprep.mubr.f32.mxu0 0.0
    %v4517 = vand.u32 %v4148, 4294901760
    %v4518 = vsub.f32 %v4148, %v4517
    %4519 = vmatmul.mubr.f32.gmra.mrb[0].mxu0 %v4518
    %v4520 = vpop.f32.mrb[0].mxu0
    %v4521 = vadd.f32 %v4411, %v4520
    %v4522 = vpop.f32.mrb[0].mxu0
    %4523 = vmatprep.mubr.f32.mxu0 0.0
    %v4524 = vand.u32 %v4149, 4294901760
    %v4525 = vsub.f32 %v4149, %v4524
    %4526 = vmatmul.mubr.f32.gmra.mrb[0].mxu0 %v4525
    %v4527 = vpop.f32.mrb[0].mxu0
    %v4528 = vadd.f32 %v4417, %v4527
    %v4529 = vpop.f32.mrb[0].mxu0
    %4530 = vdwg.mxu0
    %4531 = vmatprep.subr.mxu0 0.0
    %v4532 = vand.u32 %v4132, 4294901760
    %4533 = vmatpush1.msra.mxu0 %v4532
    %4534 = vmatprep.subr.mxu0 0.0
    %v4535 = vand.u32 %v4133, 4294901760
    %4536 = vmatpush1.msra.mxu0 %v4535
    %4537 = vmatprep.subr.mxu0 0.0
    %v4538 = vand.u32 %v4134, 4294901760
    %4539 = vmatpush1.msra.mxu0 %v4538
    %4540 = vmatprep.subr.mxu0 0.0
    %v4541 = vand.u32 %v4135, 4294901760
    %4542 = vmatpush1.msra.mxu0 %v4541
    %4543 = vmatprep.subr.mxu0 0.0
    %v4544 = vand.u32 %v4136, 4294901760
    %4545 = vmatpush1.msra.mxu0 %v4544
    %4546 = vmatprep.subr.mxu0 0.0
    %v4547 = vand.u32 %v4137, 4294901760
    %4548 = vmatpush1.msra.mxu0 %v4547
    %4549 = vmatprep.subr.mxu0 0.0
    %v4550 = vand.u32 %v4138, 4294901760
    %4551 = vmatpush1.msra.mxu0 %v4550
    %4552 = vmatprep.subr.mxu0 0.0
    %v4553 = vand.u32 %v4139, 4294901760
    %4554 = vmatpush1.msra.mxu0 %v4553
    %4555 = vmatprep.subr.mxu0 0.0
    %v4556 = vand.u32 %v4140, 4294901760
    %4557 = vmatpush1.msra.mxu0 %v4556
    %4558 = vmatprep.subr.mxu0 0.0
    %v4559 = vand.u32 %v4141, 4294901760
    %4560 = vmatpush1.msra.mxu0 %v4559
    %4561 = vmatprep.subr.mxu0 0.0
    %v4562 = vand.u32 %v4142, 4294901760
    %4563 = vmatpush1.msra.mxu0 %v4562
    %4564 = vmatprep.subr.mxu0 0.0
    %v4565 = vand.u32 %v4143, 4294901760
    %4566 = vmatpush1.msra.mxu0 %v4565
    %4567 = vmatprep.subr.mxu0 0.0
    %v4568 = vand.u32 %v4144, 4294901760
    %4569 = vmatpush1.msra.mxu0 %v4568
    %4570 = vmatprep.subr.mxu0 0.0
    %v4571 = vand.u32 %v4145, 4294901760
    %4572 = vmatpush1.msra.mxu0 %v4571
    %4573 = vmatprep.subr.mxu0 0.0
    %v4574 = vand.u32 %v4146, 4294901760
    %4575 = vmatpush1.msra.mxu0 %v4574
    %4576 = vmatprep.subr.mxu0 0.0
    %v4577 = vand.u32 %v4147, 4294901760
    %4578 = vmatpush1.msra.mxu0 %v4577
    %4579 = vmatprep.subr.mxu0 0.0
    %4580 = vmatpush1.msra.mxu0 0.0
    %4581 = vmatprep.subr.mxu0 0.0
    %4582 = vmatpush1.msra.mxu0 0.0
    %4583 = vmatprep.subr.mxu0 0.0
    %4584 = vmatpush1.msra.mxu0 0.0
    %4585 = vmatprep.subr.mxu0 0.0
    %4586 = vmatpush1.msra.mxu0 0.0
    %4587 = vmatprep.subr.mxu0 0.0
    %4588 = vmatpush1.msra.mxu0 0.0
    %4589 = vmatprep.subr.mxu0 0.0
    %4590 = vmatpush1.msra.mxu0 0.0
    %4591 = vmatprep.subr.mxu0 0.0
    %4592 = vmatpush1.msra.mxu0 0.0
    %4593 = vmatprep.subr.mxu0 0.0
    %4594 = vmatpush1.msra.mxu0 0.0
    %4595 = vmatprep.subr.mxu0 0.0
    %4596 = vmatpush1.msra.mxu0 0.0
    %4597 = vmatprep.subr.mxu0 0.0
    %4598 = vmatpush1.msra.mxu0 0.0
    %4599 = vmatprep.subr.mxu0 0.0
    %4600 = vmatpush1.msra.mxu0 0.0
    %4601 = vmatprep.subr.mxu0 0.0
    %4602 = vmatpush1.msra.mxu0 0.0
    %4603 = vmatprep.subr.mxu0 0.0
    %4604 = vmatpush1.msra.mxu0 0.0
    %4605 = vmatprep.subr.mxu0 0.0
    %4606 = vmatpush1.msra.mxu0 0.0
    %4607 = vmatprep.subr.mxu0 0.0
    %4608 = vmatpush1.msra.mxu0 0.0
    %4609 = vmatprep.subr.mxu0 0.0
    %4610 = vmatpush1.msra.mxu0 0.0
    %4611 = vmatprep.mubr.f32.mxu0 0.0
    %v4612 = vand.u32 %v4148, 4294901760
    %v4613 = vsub.f32 %v4148, %v4612
    %v4614 = vand.u32 %v4613, 4294901760
    %4615 = vmatmul.mubr.f32.gmra.mrb[0].mxu0 %v4614
    %v4616 = vpop.f32.mrb[0].mxu0
    %v4617 = vadd.f32 %v4521, %v4616
    %v4618 = vpop.f32.mrb[0].mxu0
    %4619 = vmatprep.mubr.f32.mxu0 0.0
    %v4620 = vand.u32 %v4149, 4294901760
    %v4621 = vsub.f32 %v4149, %v4620
    %v4622 = vand.u32 %v4621, 4294901760
    %4623 = vmatmul.mubr.f32.gmra.mrb[0].mxu0 %v4622
    %v4624 = vpop.f32.mrb[0].mxu0
    %v4625 = vadd.f32 %v4528, %v4624
    %v4626 = vpop.f32.mrb[0].mxu0
    %4627 = vdwg.mxu0
    %4628 = vmatprep.subr.mxu0 0.0
    %v4629 = vand.u32 %v4132, 4294901760
    %v4630 = vsub.f32 %v4132, %v4629
    %v4631 = vand.u32 %v4630, 4294901760
    %4632 = vmatpush1.msra.mxu0 %v4631
    %4633 = vmatprep.subr.mxu0 0.0
    %v4634 = vand.u32 %v4133, 4294901760
    %v4635 = vsub.f32 %v4133, %v4634
    %v4636 = vand.u32 %v4635, 4294901760
    %4637 = vmatpush1.msra.mxu0 %v4636
    %4638 = vmatprep.subr.mxu0 0.0
    %v4639 = vand.u32 %v4134, 4294901760
    %v4640 = vsub.f32 %v4134, %v4639
    %v4641 = vand.u32 %v4640, 4294901760
    %4642 = vmatpush1.msra.mxu0 %v4641
    %4643 = vmatprep.subr.mxu0 0.0
    %v4644 = vand.u32 %v4135, 4294901760
    %v4645 = vsub.f32 %v4135, %v4644
    %v4646 = vand.u32 %v4645, 4294901760
    %4647 = vmatpush1.msra.mxu0 %v4646
    %4648 = vmatprep.subr.mxu0 0.0
    %v4649 = vand.u32 %v4136, 4294901760
    %v4650 = vsub.f32 %v4136, %v4649
    %v4651 = vand.u32 %v4650, 4294901760
    %4652 = vmatpush1.msra.mxu0 %v4651
    %4653 = vmatprep.subr.mxu0 0.0
    %v4654 = vand.u32 %v4137, 4294901760
    %v4655 = vsub.f32 %v4137, %v4654
    %v4656 = vand.u32 %v4655, 4294901760
    %4657 = vmatpush1.msra.mxu0 %v4656
    %4658 = vmatprep.subr.mxu0 0.0
    %v4659 = vand.u32 %v4138, 4294901760
    %v4660 = vsub.f32 %v4138, %v4659
    %v4661 = vand.u32 %v4660, 4294901760
    %4662 = vmatpush1.msra.mxu0 %v4661
    %4663 = vmatprep.subr.mxu0 0.0
    %v4664 = vand.u32 %v4139, 4294901760
    %v4665 = vsub.f32 %v4139, %v4664
    %v4666 = vand.u32 %v4665, 4294901760
    %4667 = vmatpush1.msra.mxu0 %v4666
    %4668 = vmatprep.subr.mxu0 0.0
    %v4669 = vand.u32 %v4140, 4294901760
    %v4670 = vsub.f32 %v4140, %v4669
    %v4671 = vand.u32 %v4670, 4294901760
    %4672 = vmatpush1.msra.mxu0 %v4671
    %4673 = vmatprep.subr.mxu0 0.0
    %v4674 = vand.u32 %v4141, 4294901760
    %v4675 = vsub.f32 %v4141, %v4674
    %v4676 = vand.u32 %v4675, 4294901760
    %4677 = vmatpush1.msra.mxu0 %v4676
    %4678 = vmatprep.subr.mxu0 0.0
    %v4679 = vand.u32 %v4142, 4294901760
    %v4680 = vsub.f32 %v4142, %v4679
    %v4681 = vand.u32 %v4680, 4294901760
    %4682 = vmatpush1.msra.mxu0 %v4681
    %4683 = vmatprep.subr.mxu0 0.0
    %v4684 = vand.u32 %v4143, 4294901760
    %v4685 = vsub.f32 %v4143, %v4684
    %v4686 = vand.u32 %v4685, 4294901760
    %4687 = vmatpush1.msra.mxu0 %v4686
    %4688 = vmatprep.subr.mxu0 0.0
    %v4689 = vand.u32 %v4144, 4294901760
    %v4690 = vsub.f32 %v4144, %v4689
    %v4691 = vand.u32 %v4690, 4294901760
    %4692 = vmatpush1.msra.mxu0 %v4691
    %4693 = vmatprep.subr.mxu0 0.0
    %v4694 = vand.u32 %v4145, 4294901760
    %v4695 = vsub.f32 %v4145, %v4694
    %v4696 = vand.u32 %v4695, 4294901760
    %4697 = vmatpush1.msra.mxu0 %v4696
    %4698 = vmatprep.subr.mxu0 0.0
    %v4699 = vand.u32 %v4146, 4294901760
    %v4700 = vsub.f32 %v4146, %v4699
    %v4701 = vand.u32 %v4700, 4294901760
    %4702 = vmatpush1.msra.mxu0 %v4701
    %4703 = vmatprep.subr.mxu0 0.0
    %v4704 = vand.u32 %v4147, 4294901760
    %v4705 = vsub.f32 %v4147, %v4704
    %v4706 = vand.u32 %v4705, 4294901760
    %4707 = vmatpush1.msra.mxu0 %v4706
    %4708 = vmatprep.subr.mxu0 0.0
    %4709 = vmatpush1.msra.mxu0 0.0
    %4710 = vmatprep.subr.mxu0 0.0
    %4711 = vmatpush1.msra.mxu0 0.0
    %4712 = vmatprep.subr.mxu0 0.0
    %4713 = vmatpush1.msra.mxu0 0.0
    %4714 = vmatprep.subr.mxu0 0.0
    %4715 = vmatpush1.msra.mxu0 0.0
    %4716 = vmatprep.subr.mxu0 0.0
    %4717 = vmatpush1.msra.mxu0 0.0
    %4718 = vmatprep.subr.mxu0 0.0
    %4719 = vmatpush1.msra.mxu0 0.0
    %4720 = vmatprep.subr.mxu0 0.0
    %4721 = vmatpush1.msra.mxu0 0.0
    %4722 = vmatprep.subr.mxu0 0.0
    %4723 = vmatpush1.msra.mxu0 0.0
    %4724 = vmatprep.subr.mxu0 0.0
    %4725 = vmatpush1.msra.mxu0 0.0
    %4726 = vmatprep.subr.mxu0 0.0
    %4727 = vmatpush1.msra.mxu0 0.0
    %4728 = vmatprep.subr.mxu0 0.0
    %4729 = vmatpush1.msra.mxu0 0.0
    %4730 = vmatprep.subr.mxu0 0.0
    %4731 = vmatpush1.msra.mxu0 0.0
    %4732 = vmatprep.subr.mxu0 0.0
    %4733 = vmatpush1.msra.mxu0 0.0
    %4734 = vmatprep.subr.mxu0 0.0
    %4735 = vmatpush1.msra.mxu0 0.0
    %4736 = vmatprep.subr.mxu0 0.0
    %4737 = vmatpush1.msra.mxu0 0.0
    %4738 = vmatprep.subr.mxu0 0.0
    %4739 = vmatpush1.msra.mxu0 0.0
    %4740 = vmatprep.mubr.f32.mxu0 0.0
    %v4741 = vand.u32 %v4148, 4294901760
    %4742 = vmatmul.mubr.f32.gmra.mrb[0].mxu0 %v4741
    %v4743 = vpop.f32.mrb[0].mxu0
    %v4744 = vadd.f32 %v4617, %v4743
    %v4745 = vpop.f32.mrb[0].mxu0
    %4746 = vmatprep.mubr.f32.mxu0 0.0
    %v4747 = vand.u32 %v4149, 4294901760
    %4748 = vmatmul.mubr.f32.gmra.mrb[0].mxu0 %v4747
    %v4749 = vpop.f32.mrb[0].mxu0
    %v4750 = vadd.f32 %v4625, %v4749
    %v4751 = vpop.f32.mrb[0].mxu0
    %4752 = vdwg.mxu0
    %4753 = vmatprep.subr.mxu0 0.0
    %v4754 = vand.u32 %v4132, 4294901760
    %4755 = vmatpush1.msra.mxu0 %v4754
    %4756 = vmatprep.subr.mxu0 0.0
    %v4757 = vand.u32 %v4133, 4294901760
    %4758 = vmatpush1.msra.mxu0 %v4757
    %4759 = vmatprep.subr.mxu0 0.0
    %v4760 = vand.u32 %v4134, 4294901760
    %4761 = vmatpush1.msra.mxu0 %v4760
    %4762 = vmatprep.subr.mxu0 0.0
    %v4763 = vand.u32 %v4135, 4294901760
    %4764 = vmatpush1.msra.mxu0 %v4763
    %4765 = vmatprep.subr.mxu0 0.0
    %v4766 = vand.u32 %v4136, 4294901760
    %4767 = vmatpush1.msra.mxu0 %v4766
    %4768 = vmatprep.subr.mxu0 0.0
    %v4769 = vand.u32 %v4137, 4294901760
    %4770 = vmatpush1.msra.mxu0 %v4769
    %4771 = vmatprep.subr.mxu0 0.0
    %v4772 = vand.u32 %v4138, 4294901760
    %4773 = vmatpush1.msra.mxu0 %v4772
    %4774 = vmatprep.subr.mxu0 0.0
    %v4775 = vand.u32 %v4139, 4294901760
    %4776 = vmatpush1.msra.mxu0 %v4775
    %4777 = vmatprep.subr.mxu0 0.0
    %v4778 = vand.u32 %v4140, 4294901760
    %4779 = vmatpush1.msra.mxu0 %v4778
    %4780 = vmatprep.subr.mxu0 0.0
    %v4781 = vand.u32 %v4141, 4294901760
    %4782 = vmatpush1.msra.mxu0 %v4781
    %4783 = vmatprep.subr.mxu0 0.0
    %v4784 = vand.u32 %v4142, 4294901760
    %4785 = vmatpush1.msra.mxu0 %v4784
    %4786 = vmatprep.subr.mxu0 0.0
    %v4787 = vand.u32 %v4143, 4294901760
    %4788 = vmatpush1.msra.mxu0 %v4787
    %4789 = vmatprep.subr.mxu0 0.0
    %v4790 = vand.u32 %v4144, 4294901760
    %4791 = vmatpush1.msra.mxu0 %v4790
    %4792 = vmatprep.subr.mxu0 0.0
    %v4793 = vand.u32 %v4145, 4294901760
    %4794 = vmatpush1.msra.mxu0 %v4793
    %4795 = vmatprep.subr.mxu0 0.0
    %v4796 = vand.u32 %v4146, 4294901760
    %4797 = vmatpush1.msra.mxu0 %v4796
    %4798 = vmatprep.subr.mxu0 0.0
    %v4799 = vand.u32 %v4147, 4294901760
    %4800 = vmatpush1.msra.mxu0 %v4799
    %4801 = vmatprep.subr.mxu0 0.0
    %4802 = vmatpush1.msra.mxu0 0.0
    %4803 = vmatprep.subr.mxu0 0.0
    %4804 = vmatpush1.msra.mxu0 0.0
    %4805 = vmatprep.subr.mxu0 0.0
    %4806 = vmatpush1.msra.mxu0 0.0
    %4807 = vmatprep.subr.mxu0 0.0
    %4808 = vmatpush1.msra.mxu0 0.0
    %4809 = vmatprep.subr.mxu0 0.0
    %4810 = vmatpush1.msra.mxu0 0.0
    %4811 = vmatprep.subr.mxu0 0.0
    %4812 = vmatpush1.msra.mxu0 0.0
    %4813 = vmatprep.subr.mxu0 0.0
    %4814 = vmatpush1.msra.mxu0 0.0
    %4815 = vmatprep.subr.mxu0 0.0
    %4816 = vmatpush1.msra.mxu0 0.0
    %4817 = vmatprep.subr.mxu0 0.0
    %4818 = vmatpush1.msra.mxu0 0.0
    %4819 = vmatprep.subr.mxu0 0.0
    %4820 = vmatpush1.msra.mxu0 0.0
    %4821 = vmatprep.subr.mxu0 0.0
    %4822 = vmatpush1.msra.mxu0 0.0
    %4823 = vmatprep.subr.mxu0 0.0
    %4824 = vmatpush1.msra.mxu0 0.0
    %4825 = vmatprep.subr.mxu0 0.0
    %4826 = vmatpush1.msra.mxu0 0.0
    %4827 = vmatprep.subr.mxu0 0.0
    %4828 = vmatpush1.msra.mxu0 0.0
    %4829 = vmatprep.subr.mxu0 0.0
    %4830 = vmatpush1.msra.mxu0 0.0
    %4831 = vmatprep.subr.mxu0 0.0
    %4832 = vmatpush1.msra.mxu0 0.0
    %4833 = vmatprep.mubr.f32.mxu0 0.0
    %v4834 = vand.u32 %v4148, 4294901760
    %4835 = vmatmul.mubr.f32.gmra.mrb[0].mxu0 %v4834
    %v4836 = vpop.f32.mrb[0].mxu0
    %v4837 = vadd.f32 %v4744, %v4836
    %v4838 = vpop.f32.mrb[0].mxu0
    %4839 = vmatprep.mubr.f32.mxu0 0.0
    %v4840 = vand.u32 %v4149, 4294901760
    %4841 = vmatmul.mubr.f32.gmra.mrb[0].mxu0 %v4840
    %v4842 = vpop.f32.mrb[0].mxu0
    %v4843 = vadd.f32 %v4750, %v4842
    %v4844 = vpop.f32.mrb[0].mxu0
    %4845 = vdwg.mxu0
    %4846 = vst [vmem:[#allocation2] sm:$0xff] %v4837
    %4847 = vst [vmem:[#allocation2 + $0x8] sm:$0xff] %v4843
    // Predicated region
    $region38: #{tpu_custom_call.1} parent=1 // pred_check
      _
    $region39: #{tpu_custom_call.1} parent=1 // pred_check_branch
      %4849 = sbr.rel (0) target = $region41
    $region40: #{tpu_custom_call.1} parent=1 // pred_region
      %s4851 = ssub.s32 256, 256
      %4852 = vsyncadd [#allocation3], %s4851
      %s4853 = sshll.u32 [#allocation2], 4
      %s4854 = int_to_ptr.vmem [resolvable:$true] %s4853
      %4859 = dma.vmem_to_hbm [thread:$0]  %s4854, 256, %s9, [#allocation3], 128, 128, 8
    $region41: #{tpu_custom_call.1} parent=1 // pred_fallthru
      _
    // Predicated region
    $region42: #{tpu_custom_call.1} parent=1 // pred_check
      _
    $region43: #{tpu_custom_call.1} parent=1 // pred_check_branch
      %4861 = sbr.rel (0) target = $region45
    $region44: #{tpu_custom_call.1} parent=1 // pred_region
      %4862 = dma.done [#allocation3], 256
    $region45: #{tpu_custom_call.1} parent=1 // pred_fallthru
      _
    %4863 = vsyncpa [#allocation3], 1

</llo_original>
